<compile_context>
chip_gen: v5e
topology: v5e:2x2
jax: 0.10.0
libtpu: 0.0.40
codegen_flags: <defaults>
</compile_context>

<pallas_src>
import functools

import jax
import jax.numpy as jnp
from jax.experimental import pallas as pl
from jax.experimental.pallas import tpu as pltpu


# ---------------------------------------------------------------------------
# Fused network kernel: Conv1d("same") + tanh  ->  stacked bidirectional LSTM
# ---------------------------------------------------------------------------
def _make_net_kernel(num_layers, seq_len, batch, hidden):
    S, B, H = seq_len, batch, hidden
    G = 8 * H          # fused gate lanes: (i, f, g, o) x (fwd, bwd), each H wide
    TW = 2 * H         # per-timestep output width (fwd | bwd)

    def kernel(*refs):
        # refs layout:
        #   refs[0]: lhs_ref (S*B, K*D_in)  im2col conv LHS (wrapper-built), row = t*B+b
        #   refs[1]: cw_ref  (K*D_in, C)    conv weight
        #   refs[2]: cb_ref  (1, C)         conv bias
        #   per layer l: wih (D_l, 8H), whh (2H, 8H) block-diag, bias (1, 8H)
        #     columns grouped [i_f,i_b,f_f,f_b,g_f,g_b,o_f,o_b]; g columns pre-scaled x2
        #   refs[3+3L]: o_ref  (B, S*2H)    output, batch-major rows
        #   refs[4+3L]: act_ref (S*B, 2H)   VMEM scratch for inter-layer activations
        lhs_ref, cw_ref, cb_ref = refs[0], refs[1], refs[2]
        o_ref = refs[3 + 3 * num_layers]
        act_ref = refs[4 + 3 * num_layers]

        # ---- Conv1d("same") + tanh as ONE im2col matmul ----
        y = jnp.dot(lhs_ref[...], cw_ref[...], preferred_element_type=jnp.float32)
        xmat = jnp.tanh(y + cb_ref[...])                      # (S*B, C), time-major

        # ---- hoisted lane constants (shared by all layers / timesteps) ----
        lane = jax.lax.broadcasted_iota(jnp.int32, (B, G), 1)
        fwd_mask = jnp.zeros((B, G), jnp.bool_)
        for gi in range(4):                                    # fwd-direction columns
            lo = gi * 2 * H
            fwd_mask = fwd_mask | ((lane >= lo) & (lane < lo + H))
        g_mask = (lane >= 4 * H) & (lane < 6 * H)              # g-gate columns
        g_scale = jnp.where(g_mask, 2.0, 1.0)                  # tanh(x)=2*sigmoid(2x)-1
        g_shift = jnp.where(g_mask, -1.0, 0.0)
        zeros = jnp.zeros((B, TW), jnp.float32)

        for l in range(num_layers):
            wih = refs[3 + 3 * l + 0][...]                     # (D_l, 8H)
            whh = refs[3 + 3 * l + 1][...]                     # (2H, 8H) block-diagonal
            bias = refs[3 + 3 * l + 2][...]                    # (1, 8H)
            if l > 0:
                xmat = act_ref[...]                            # (S*B, 2H) from prev layer

            # Input contribution for ALL timesteps & BOTH directions: one matmul.
            precomp = jnp.dot(xmat, wih,
                              preferred_element_type=jnp.float32) + bias  # (S*B, 8H)

            h_cat = zeros                                      # [h_fwd | h_bwd] (B, 2H)
            c_cat = zeros                                      # [c_fwd | c_bwd]
            last = l == num_layers - 1
            for t in range(S):                                 # static, fully unrolled
                rt = S - 1 - t
                # fwd gate columns take x(t), bwd gate columns take x(S-1-t);
                # independent of the recurrence -> off the serial critical path.
                px = jnp.where(fwd_mask,
                               precomp[t * B:(t + 1) * B, :],
                               precomp[rt * B:(rt + 1) * B, :])
                gates = px + jnp.dot(h_cat, whh,
                                     preferred_element_type=jnp.float32)
                sg = jax.nn.sigmoid(gates)                     # single EUP pass (8H lanes)
                act = sg * g_scale + g_shift                   # g lanes become tanh
                i_g = act[:, 0:2 * H]                          # [i_f | i_b]
                f_g = act[:, 2 * H:4 * H]                      # [f_f | f_b]
                g_g = act[:, 4 * H:6 * H]                      # [g_f | g_b]
                o_g = act[:, 6 * H:8 * H]                      # [o_f | o_b]
                c_cat = f_g * c_cat + i_g * g_g
                h_cat = o_g * jnp.tanh(c_cat)
                if last:
                    # direct batch-major store: time t fwd half, time rt bwd half
                    o_ref[:, t * TW:t * TW + H] = h_cat[:, 0:H]
                    o_ref[:, rt * TW + H:rt * TW + TW] = h_cat[:, H:TW]
                else:
                    act_ref[t * B:(t + 1) * B, 0:H] = h_cat[:, 0:H]
                    act_ref[rt * B:(rt + 1) * B, H:TW] = h_cat[:, H:TW]

    return kernel


# ---------------------------------------------------------------------------
# Wrapper: im2col layout prep + single pallas_call (no grid, all VMEM resident)
# ---------------------------------------------------------------------------
def seq2seqvec_cnnrnn_forward(x, fused, num_layers, kernel_size):
    """x: (B, S, input_size) -> (B, S, 2*hidden_size)."""
    B, S, D_in = x.shape
    K = kernel_size
    pad = (K - 1) // 2
    H = fused["whh0"].shape[0] // 2

    # im2col built in the wrapper (keeps ~S*K misaligned slices out of the kernel).
    # Row = t*B + b (time-major), col = k*D_in + d  -> matches conv_w (K*D_in, C).
    x_tm = jnp.transpose(x, (1, 0, 2))                         # (S, B, D_in)
    x_pad = jnp.pad(x_tm, ((pad, pad), (0, 0), (0, 0)))        # (S+K-1, B, D_in)
    lhs = jnp.concatenate([x_pad[k:k + S] for k in range(K)],
                          axis=-1).reshape(S * B, K * D_in)

    args = [lhs, fused["conv_w"], fused["conv_b"]]
    for l in range(num_layers):
        args += [fused[f"wih{l}"], fused[f"whh{l}"], fused[f"bias{l}"]]

    out2 = pl.pallas_call(
        _make_net_kernel(num_layers, S, B, H),
        out_shape=jax.ShapeDtypeStruct((B, S * 2 * H), jnp.float32),
        scratch_shapes=[pltpu.VMEM((S * B, 2 * H), jnp.float32)],
    )(*args)
    return out2.reshape(B, S, 2 * H)        # row-major view; no output transpose


# ---------------------------------------------------------------------------
# Parameter init (PyTorch-equivalent shapes) + packing for the fused kernel
# ---------------------------------------------------------------------------
def init_params(key, input_size, cnn_out_size, hidden_size, num_layers,
                kernel_size):
    params = {}
    scale = 1.0 / jnp.sqrt(jnp.float32(hidden_size))

    def uni(k, shape):
        return jax.random.uniform(k, shape, jnp.float32, -scale, scale)

    keys = jax.random.split(key, 2 + 8 * num_layers)
    ki = iter(keys)
    # Conv1d weight (C_out, C_in, K) stored as (K, C_in, C_out); bias (1, C_out)
    params["conv_w"] = jnp.transpose(
        uni(next(ki), (cnn_out_size, input_size, kernel_size)), (2, 1, 0))
    params["conv_b"] = uni(next(ki), (1, cnn_out_size))
    for l in range(num_layers):
        in_l = cnn_out_size if l == 0 else 2 * hidden_size
        for tag in ("f", "b"):
            # PyTorch: weight_ih (4H, in), weight_hh (4H, H), bias = b_ih + b_hh
            params[f"wih_{tag}{l}"] = uni(next(ki), (4 * hidden_size, in_l)).T
            params[f"whh_{tag}{l}"] = uni(next(ki), (4 * hidden_size,
                                                     hidden_size)).T
            b_ih = uni(next(ki), (4 * hidden_size,))
            b_hh = uni(next(ki), (4 * hidden_size,))
            params[f"b_{tag}{l}"] = (b_ih + b_hh)[None, :]
    return params


def fuse_params(params, num_layers):
    """Pack weights into the layouts the fused kernel consumes.

    Gate columns are grouped [i_f, i_b, f_f, f_b, g_f, g_b, o_f, o_b] (each H
    wide); Whh is block-diagonal over directions; the g-gate columns of W and
    bias are pre-scaled by 2 so the kernel can use a single sigmoid pass
    (tanh(x) = 2*sigmoid(2x) - 1).
    """
    K, D, C = params["conv_w"].shape
    H = params["whh_f0"].shape[0]
    fused = {"conv_w": params["conv_w"].reshape(K * D, C),
             "conv_b": params["conv_b"]}

    col = jnp.arange(8 * H)
    g_scale = jnp.where((col >= 4 * H) & (col < 6 * H), 2.0, 1.0
                        ).astype(jnp.float32)[None, :]

    def pack_cols(mf, mb):
        # mf, mb: (rows, 4H) in PyTorch gate order i, f, g, o.
        blocks = []
        for gi in range(4):
            blocks.append(mf[:, gi * H:(gi + 1) * H])
            blocks.append(mb[:, gi * H:(gi + 1) * H])
        return jnp.concatenate(blocks, axis=1)          # (rows, 8H)

    for l in range(num_layers):
        wih = pack_cols(params[f"wih_f{l}"], params[f"wih_b{l}"])      # (D_l, 8H)
        zH = jnp.zeros((H, 4 * H), jnp.float32)
        whh_f_ext = jnp.concatenate([params[f"whh_f{l}"], zH], axis=0)  # (2H, 4H)
        whh_b_ext = jnp.concatenate([zH, params[f"whh_b{l}"]], axis=0)  # (2H, 4H)
        whh = pack_cols(whh_f_ext, whh_b_ext)                           # (2H, 8H)
        bias = pack_cols(params[f"b_f{l}"], params[f"b_b{l}"])          # (1, 8H)
        fused[f"wih{l}"] = wih * g_scale
        fused[f"whh{l}"] = whh * g_scale
        fused[f"bias{l}"] = bias * g_scale
    return fused


# ---------------------------------------------------------------------------
# Pure-JAX reference (for correctness check)
# ---------------------------------------------------------------------------
def _conv_tanh_ref(x, w_kdc, bias, pad):
    B, S, D = x.shape
    K, _, C = w_kdc.shape
    xp = jnp.pad(x, ((0, 0), (pad, pad), (0, 0)))
    out = jnp.zeros((B, S, C), jnp.float32)
    for k in range(K):
        out = out + jnp.einsum("bsd,dc->bsc", xp[:, k:k + S, :], w_kdc[k])
    return jnp.tanh(out + bias)


def _lstm_dir_ref(x_sbd, wih_t, whh_t, b, reverse):
    S, B, D = x_sbd.shape
    H = whh_t.shape[0]
    xs = x_sbd[::-1] if reverse else x_sbd

    def step(carry, x_t):
        h, c = carry
        gates = x_t @ wih_t + h @ whh_t + b
        i = jax.nn.sigmoid(gates[:, 0:H])
        f = jax.nn.sigmoid(gates[:, H:2 * H])
        g = jnp.tanh(gates[:, 2 * H:3 * H])
        o = jax.nn.sigmoid(gates[:, 3 * H:4 * H])
        c = f * c + i * g
        h = o * jnp.tanh(c)
        return (h, c), h

    init = (jnp.zeros((B, H), jnp.float32), jnp.zeros((B, H), jnp.float32))
    _, ys = jax.lax.scan(step, init, xs)
    return ys[::-1] if reverse else ys


def _forward_ref(x, params, num_layers, pad):
    cnn_out = _conv_tanh_ref(x, params["conv_w"], params["conv_b"], pad)
    h = jnp.transpose(cnn_out, (1, 0, 2))
    for l in range(num_layers):
        fwd = _lstm_dir_ref(h, params[f"wih_f{l}"], params[f"whh_f{l}"],
                            params[f"b_f{l}"], reverse=False)
        bwd = _lstm_dir_ref(h, params[f"wih_b{l}"], params[f"whh_b{l}"],
                            params[f"b_b{l}"], reverse=True)
        h = jnp.concatenate([fwd, bwd], axis=-1)
    return jnp.transpose(h, (1, 0, 2))


if __name__ == "__main__":
    # Module config: rnn_type='lstm', input_size=16, hidden_size=32, num_layers=2,
    # cnn_out_size=None (-> hidden_size), kernel_size=3, bidirectional, tanh act.
    batch, seq_len = 2, 8
    input_size, hidden_size, num_layers = 16, 32, 2
    cnn_out_size = hidden_size
    kernel_size = 3

    key = jax.random.PRNGKey(0)
    k_x, k_p = jax.random.split(key)
    x = jax.random.normal(k_x, (batch, seq_len, input_size), jnp.float32)
    params = init_params(k_p, input_size, cnn_out_size, hidden_size,
                         num_layers, kernel_size)
    fused = fuse_params(params, num_layers)

    fwd = jax.jit(functools.partial(seq2seqvec_cnnrnn_forward,
                                    num_layers=num_layers,
                                    kernel_size=kernel_size))
    out = fwd(x, fused)
    out = jax.block_until_ready(out)

    ref = _forward_ref(x, params, num_layers, (kernel_size - 1) // 2)
    assert out.shape == (batch, seq_len, 2 * hidden_size), out.shape
    max_err = float(jnp.max(jnp.abs(out - ref)))
    assert max_err < 1e-4, max_err
    print("KERNEL_OK")
</pallas_src>

<mosaic_0001>
module attributes {stable_mosaic.version = 11 : i64} {
  func.func @kernel(%arg0: memref<16x48xf32, #tpu.memory_space<vmem>>, %arg1: memref<48x32xf32, #tpu.memory_space<vmem>>, %arg2: memref<1x32xf32, #tpu.memory_space<vmem>>, %arg3: memref<32x256xf32, #tpu.memory_space<vmem>>, %arg4: memref<64x256xf32, #tpu.memory_space<vmem>>, %arg5: memref<1x256xf32, #tpu.memory_space<vmem>>, %arg6: memref<64x256xf32, #tpu.memory_space<vmem>>, %arg7: memref<64x256xf32, #tpu.memory_space<vmem>>, %arg8: memref<1x256xf32, #tpu.memory_space<vmem>>, %arg9: memref<2x512xf32, #tpu.memory_space<vmem>>, %arg10: memref<16x64xf32, #tpu.memory_space<vmem>>) attributes {dimension_semantics = [], scalar_prefetch = 0 : i64, scratch_operands = 1 : i64, tpu.core_type = #tpu.core_type<tc>} {
    %c0 = arith.constant 0 : index
    %c0_0 = arith.constant 0 : index
    %0 = vector.load %arg0[%c0, %c0_0] : memref<16x48xf32, #tpu.memory_space<vmem>>, vector<16x48xf32>
    %c0_1 = arith.constant 0 : index
    %c0_2 = arith.constant 0 : index
    %1 = vector.load %arg1[%c0_1, %c0_2] : memref<48x32xf32, #tpu.memory_space<vmem>>, vector<48x32xf32>
    %cst = arith.constant dense<0.000000e+00> : vector<16x32xf32>
    %2 = tpu.matmul %0, %1, %cst {dimension_numbers = #tpu.dot_dimension_numbers<[1], [0], [0], [1], [0, 0, 1, 1], [], []>} : vector<16x48xf32>, vector<48x32xf32>, vector<16x32xf32> -> vector<16x32xf32>
    %c0_3 = arith.constant 0 : index
    %c0_4 = arith.constant 0 : index
    %3 = vector.load %arg2[%c0_3, %c0_4] : memref<1x32xf32, #tpu.memory_space<vmem>>, vector<1x32xf32>
    %4 = vector.broadcast %3 : vector<1x32xf32> to vector<16x32xf32>
    %5 = arith.addf %2, %4 : vector<16x32xf32>
    %6 = math.tanh %5 : vector<16x32xf32>
    %7 = tpu.iota {dimensions = array<i32: 1>} : vector<2x256xi32>
    %false = arith.constant false
    %8 = vector.broadcast %false : i1 to vector<2x256xi1>
    %c0_i32 = arith.constant 0 : i32
    %9 = vector.broadcast %c0_i32 : i32 to vector<2x256xi32>
    %10 = arith.cmpi sge, %7, %9 : vector<2x256xi32>
    %c32_i32 = arith.constant 32 : i32
    %11 = vector.broadcast %c32_i32 : i32 to vector<2x256xi32>
    %12 = arith.cmpi slt, %7, %11 : vector<2x256xi32>
    %13 = arith.andi %10, %12 : vector<2x256xi1>
    %14 = arith.ori %8, %13 : vector<2x256xi1>
    %c64_i32 = arith.constant 64 : i32
    %15 = vector.broadcast %c64_i32 : i32 to vector<2x256xi32>
    %16 = arith.cmpi sge, %7, %15 : vector<2x256xi32>
    %c96_i32 = arith.constant 96 : i32
    %17 = vector.broadcast %c96_i32 : i32 to vector<2x256xi32>
    %18 = arith.cmpi slt, %7, %17 : vector<2x256xi32>
    %19 = arith.andi %16, %18 : vector<2x256xi1>
    %20 = arith.ori %14, %19 : vector<2x256xi1>
    %c128_i32 = arith.constant 128 : i32
    %21 = vector.broadcast %c128_i32 : i32 to vector<2x256xi32>
    %22 = arith.cmpi sge, %7, %21 : vector<2x256xi32>
    %c160_i32 = arith.constant 160 : i32
    %23 = vector.broadcast %c160_i32 : i32 to vector<2x256xi32>
    %24 = arith.cmpi slt, %7, %23 : vector<2x256xi32>
    %25 = arith.andi %22, %24 : vector<2x256xi1>
    %26 = arith.ori %20, %25 : vector<2x256xi1>
    %c192_i32 = arith.constant 192 : i32
    %27 = vector.broadcast %c192_i32 : i32 to vector<2x256xi32>
    %28 = arith.cmpi sge, %7, %27 : vector<2x256xi32>
    %c224_i32 = arith.constant 224 : i32
    %29 = vector.broadcast %c224_i32 : i32 to vector<2x256xi32>
    %30 = arith.cmpi slt, %7, %29 : vector<2x256xi32>
    %31 = arith.andi %28, %30 : vector<2x256xi1>
    %32 = arith.ori %26, %31 : vector<2x256xi1>
    %c128_i32_5 = arith.constant 128 : i32
    %33 = vector.broadcast %c128_i32_5 : i32 to vector<2x256xi32>
    %34 = arith.cmpi sge, %7, %33 : vector<2x256xi32>
    %c192_i32_6 = arith.constant 192 : i32
    %35 = vector.broadcast %c192_i32_6 : i32 to vector<2x256xi32>
    %36 = arith.cmpi slt, %7, %35 : vector<2x256xi32>
    %37 = arith.andi %34, %36 : vector<2x256xi1>
    %cst_7 = arith.constant 2.000000e+00 : f32
    %cst_8 = arith.constant 1.000000e+00 : f32
    %38 = vector.broadcast %cst_7 : f32 to vector<2x256xf32>
    %39 = vector.broadcast %cst_8 : f32 to vector<2x256xf32>
    %40 = arith.select %37, %38, %39 : vector<2x256xi1>, vector<2x256xf32>
    %cst_9 = arith.constant -1.000000e+00 : f32
    %cst_10 = arith.constant 0.000000e+00 : f32
    %41 = vector.broadcast %cst_9 : f32 to vector<2x256xf32>
    %42 = vector.broadcast %cst_10 : f32 to vector<2x256xf32>
    %43 = arith.select %37, %41, %42 : vector<2x256xi1>, vector<2x256xf32>
    %cst_11 = arith.constant 0.000000e+00 : f32
    %44 = vector.broadcast %cst_11 : f32 to vector<2x64xf32>
    %c0_12 = arith.constant 0 : index
    %c0_13 = arith.constant 0 : index
    %45 = vector.load %arg3[%c0_12, %c0_13] : memref<32x256xf32, #tpu.memory_space<vmem>>, vector<32x256xf32>
    %c0_14 = arith.constant 0 : index
    %c0_15 = arith.constant 0 : index
    %46 = vector.load %arg4[%c0_14, %c0_15] : memref<64x256xf32, #tpu.memory_space<vmem>>, vector<64x256xf32>
    %c0_16 = arith.constant 0 : index
    %c0_17 = arith.constant 0 : index
    %47 = vector.load %arg5[%c0_16, %c0_17] : memref<1x256xf32, #tpu.memory_space<vmem>>, vector<1x256xf32>
    %cst_18 = arith.constant dense<0.000000e+00> : vector<16x256xf32>
    %48 = tpu.matmul %6, %45, %cst_18 {dimension_numbers = #tpu.dot_dimension_numbers<[1], [0], [0], [1], [0, 0, 1, 1], [], []>} : vector<16x32xf32>, vector<32x256xf32>, vector<16x256xf32> -> vector<16x256xf32>
    %49 = vector.broadcast %47 : vector<1x256xf32> to vector<16x256xf32>
    %50 = arith.addf %48, %49 : vector<16x256xf32>
    %51 = vector.extract_strided_slice %50 {offsets = [0, 0], sizes = [2, 256], strides = [1, 1]} : vector<16x256xf32> to vector<2x256xf32>
    %52 = vector.extract_strided_slice %50 {offsets = [14, 0], sizes = [2, 256], strides = [1, 1]} : vector<16x256xf32> to vector<2x256xf32>
    %53 = arith.select %32, %51, %52 : vector<2x256xi1>, vector<2x256xf32>
    %cst_19 = arith.constant dense<0.000000e+00> : vector<2x256xf32>
    %54 = tpu.matmul %44, %46, %cst_19 {dimension_numbers = #tpu.dot_dimension_numbers<[1], [0], [0], [1], [0, 0, 1, 1], [], []>} : vector<2x64xf32>, vector<64x256xf32>, vector<2x256xf32> -> vector<2x256xf32>
    %55 = arith.addf %53, %54 : vector<2x256xf32>
    %56 = arith.negf %55 : vector<2x256xf32>
    %57 = math.exp %56 : vector<2x256xf32>
    %cst_20 = arith.constant 1.000000e+00 : f32
    %58 = vector.broadcast %cst_20 : f32 to vector<2x256xf32>
    %59 = arith.addf %58, %57 : vector<2x256xf32>
    %60 = arith.divf %58, %59 : vector<2x256xf32>
    %61 = arith.mulf %60, %40 : vector<2x256xf32>
    %62 = arith.addf %61, %43 : vector<2x256xf32>
    %63 = vector.extract_strided_slice %62 {offsets = [0, 0], sizes = [2, 64], strides = [1, 1]} : vector<2x256xf32> to vector<2x64xf32>
    %64 = vector.extract_strided_slice %62 {offsets = [0, 64], sizes = [2, 64], strides = [1, 1]} : vector<2x256xf32> to vector<2x64xf32>
    %65 = vector.extract_strided_slice %62 {offsets = [0, 128], sizes = [2, 64], strides = [1, 1]} : vector<2x256xf32> to vector<2x64xf32>
    %66 = vector.extract_strided_slice %62 {offsets = [0, 192], sizes = [2, 64], strides = [1, 1]} : vector<2x256xf32> to vector<2x64xf32>
    %67 = arith.mulf %64, %44 : vector<2x64xf32>
    %68 = arith.mulf %63, %65 : vector<2x64xf32>
    %69 = arith.addf %67, %68 : vector<2x64xf32>
    %70 = math.tanh %69 : vector<2x64xf32>
    %71 = arith.mulf %66, %70 : vector<2x64xf32>
    %72 = vector.extract_strided_slice %71 {offsets = [0, 0], sizes = [2, 32], strides = [1, 1]} : vector<2x64xf32> to vector<2x32xf32>
    %c0_21 = arith.constant 0 : index
    %c0_22 = arith.constant 0 : index
    %73 = vector.load %arg10[%c0_21, %c0_22] : memref<16x64xf32, #tpu.memory_space<vmem>>, vector<2x32xf32>
    tpu.vector_store %arg10[%c0_21, %c0_22], %72 {strides = array<i32>} : memref<16x64xf32, #tpu.memory_space<vmem>>, vector<2x32xf32>,
    %74 = vector.extract_strided_slice %71 {offsets = [0, 32], sizes = [2, 32], strides = [1, 1]} : vector<2x64xf32> to vector<2x32xf32>
    %c14 = arith.constant 14 : index
    %c32 = arith.constant 32 : index
    %75 = vector.load %arg10[%c14, %c32] : memref<16x64xf32, #tpu.memory_space<vmem>>, vector<2x32xf32>
    tpu.vector_store %arg10[%c14, %c32], %74 {strides = array<i32>} : memref<16x64xf32, #tpu.memory_space<vmem>>, vector<2x32xf32>,
    %76 = vector.extract_strided_slice %50 {offsets = [2, 0], sizes = [2, 256], strides = [1, 1]} : vector<16x256xf32> to vector<2x256xf32>
    %77 = vector.extract_strided_slice %50 {offsets = [12, 0], sizes = [2, 256], strides = [1, 1]} : vector<16x256xf32> to vector<2x256xf32>
    %78 = arith.select %32, %76, %77 : vector<2x256xi1>, vector<2x256xf32>
    %cst_23 = arith.constant dense<0.000000e+00> : vector<2x256xf32>
    %79 = tpu.matmul %71, %46, %cst_23 {dimension_numbers = #tpu.dot_dimension_numbers<[1], [0], [0], [1], [0, 0, 1, 1], [], []>} : vector<2x64xf32>, vector<64x256xf32>, vector<2x256xf32> -> vector<2x256xf32>
    %80 = arith.addf %78, %79 : vector<2x256xf32>
    %81 = arith.negf %80 : vector<2x256xf32>
    %82 = math.exp %81 : vector<2x256xf32>
    %cst_24 = arith.constant 1.000000e+00 : f32
    %83 = vector.broadcast %cst_24 : f32 to vector<2x256xf32>
    %84 = arith.addf %83, %82 : vector<2x256xf32>
    %85 = arith.divf %83, %84 : vector<2x256xf32>
    %86 = arith.mulf %85, %40 : vector<2x256xf32>
    %87 = arith.addf %86, %43 : vector<2x256xf32>
    %88 = vector.extract_strided_slice %87 {offsets = [0, 0], sizes = [2, 64], strides = [1, 1]} : vector<2x256xf32> to vector<2x64xf32>
    %89 = vector.extract_strided_slice %87 {offsets = [0, 64], sizes = [2, 64], strides = [1, 1]} : vector<2x256xf32> to vector<2x64xf32>
    %90 = vector.extract_strided_slice %87 {offsets = [0, 128], sizes = [2, 64], strides = [1, 1]} : vector<2x256xf32> to vector<2x64xf32>
    %91 = vector.extract_strided_slice %87 {offsets = [0, 192], sizes = [2, 64], strides = [1, 1]} : vector<2x256xf32> to vector<2x64xf32>
    %92 = arith.mulf %89, %69 : vector<2x64xf32>
    %93 = arith.mulf %88, %90 : vector<2x64xf32>
    %94 = arith.addf %92, %93 : vector<2x64xf32>
    %95 = math.tanh %94 : vector<2x64xf32>
    %96 = arith.mulf %91, %95 : vector<2x64xf32>
    %97 = vector.extract_strided_slice %96 {offsets = [0, 0], sizes = [2, 32], strides = [1, 1]} : vector<2x64xf32> to vector<2x32xf32>
    %c2 = arith.constant 2 : index
    %c0_25 = arith.constant 0 : index
    %98 = vector.load %arg10[%c2, %c0_25] : memref<16x64xf32, #tpu.memory_space<vmem>>, vector<2x32xf32>
    tpu.vector_store %arg10[%c2, %c0_25], %97 {strides = array<i32>} : memref<16x64xf32, #tpu.memory_space<vmem>>, vector<2x32xf32>,
    %99 = vector.extract_strided_slice %96 {offsets = [0, 32], sizes = [2, 32], strides = [1, 1]} : vector<2x64xf32> to vector<2x32xf32>
    %c12 = arith.constant 12 : index
    %c32_26 = arith.constant 32 : index
    %100 = vector.load %arg10[%c12, %c32_26] : memref<16x64xf32, #tpu.memory_space<vmem>>, vector<2x32xf32>
    tpu.vector_store %arg10[%c12, %c32_26], %99 {strides = array<i32>} : memref<16x64xf32, #tpu.memory_space<vmem>>, vector<2x32xf32>,
    %101 = vector.extract_strided_slice %50 {offsets = [4, 0], sizes = [2, 256], strides = [1, 1]} : vector<16x256xf32> to vector<2x256xf32>
    %102 = vector.extract_strided_slice %50 {offsets = [10, 0], sizes = [2, 256], strides = [1, 1]} : vector<16x256xf32> to vector<2x256xf32>
    %103 = arith.select %32, %101, %102 : vector<2x256xi1>, vector<2x256xf32>
    %cst_27 = arith.constant dense<0.000000e+00> : vector<2x256xf32>
    %104 = tpu.matmul %96, %46, %cst_27 {dimension_numbers = #tpu.dot_dimension_numbers<[1], [0], [0], [1], [0, 0, 1, 1], [], []>} : vector<2x64xf32>, vector<64x256xf32>, vector<2x256xf32> -> vector<2x256xf32>
    %105 = arith.addf %103, %104 : vector<2x256xf32>
    %106 = arith.negf %105 : vector<2x256xf32>
    %107 = math.exp %106 : vector<2x256xf32>
    %cst_28 = arith.constant 1.000000e+00 : f32
    %108 = vector.broadcast %cst_28 : f32 to vector<2x256xf32>
    %109 = arith.addf %108, %107 : vector<2x256xf32>
    %110 = arith.divf %108, %109 : vector<2x256xf32>
    %111 = arith.mulf %110, %40 : vector<2x256xf32>
    %112 = arith.addf %111, %43 : vector<2x256xf32>
    %113 = vector.extract_strided_slice %112 {offsets = [0, 0], sizes = [2, 64], strides = [1, 1]} : vector<2x256xf32> to vector<2x64xf32>
    %114 = vector.extract_strided_slice %112 {offsets = [0, 64], sizes = [2, 64], strides = [1, 1]} : vector<2x256xf32> to vector<2x64xf32>
    %115 = vector.extract_strided_slice %112 {offsets = [0, 128], sizes = [2, 64], strides = [1, 1]} : vector<2x256xf32> to vector<2x64xf32>
    %116 = vector.extract_strided_slice %112 {offsets = [0, 192], sizes = [2, 64], strides = [1, 1]} : vector<2x256xf32> to vector<2x64xf32>
    %117 = arith.mulf %114, %94 : vector<2x64xf32>
    %118 = arith.mulf %113, %115 : vector<2x64xf32>
    %119 = arith.addf %117, %118 : vector<2x64xf32>
    %120 = math.tanh %119 : vector<2x64xf32>
    %121 = arith.mulf %116, %120 : vector<2x64xf32>
    %122 = vector.extract_strided_slice %121 {offsets = [0, 0], sizes = [2, 32], strides = [1, 1]} : vector<2x64xf32> to vector<2x32xf32>
    %c4 = arith.constant 4 : index
    %c0_29 = arith.constant 0 : index
    %123 = vector.load %arg10[%c4, %c0_29] : memref<16x64xf32, #tpu.memory_space<vmem>>, vector<2x32xf32>
    tpu.vector_store %arg10[%c4, %c0_29], %122 {strides = array<i32>} : memref<16x64xf32, #tpu.memory_space<vmem>>, vector<2x32xf32>,
    %124 = vector.extract_strided_slice %121 {offsets = [0, 32], sizes = [2, 32], strides = [1, 1]} : vector<2x64xf32> to vector<2x32xf32>
    %c10 = arith.constant 10 : index
    %c32_30 = arith.constant 32 : index
    %125 = vector.load %arg10[%c10, %c32_30] : memref<16x64xf32, #tpu.memory_space<vmem>>, vector<2x32xf32>
    tpu.vector_store %arg10[%c10, %c32_30], %124 {strides = array<i32>} : memref<16x64xf32, #tpu.memory_space<vmem>>, vector<2x32xf32>,
    %126 = vector.extract_strided_slice %50 {offsets = [6, 0], sizes = [2, 256], strides = [1, 1]} : vector<16x256xf32> to vector<2x256xf32>
    %127 = vector.extract_strided_slice %50 {offsets = [8, 0], sizes = [2, 256], strides = [1, 1]} : vector<16x256xf32> to vector<2x256xf32>
    %128 = arith.select %32, %126, %127 : vector<2x256xi1>, vector<2x256xf32>
    %cst_31 = arith.constant dense<0.000000e+00> : vector<2x256xf32>
    %129 = tpu.matmul %121, %46, %cst_31 {dimension_numbers = #tpu.dot_dimension_numbers<[1], [0], [0], [1], [0, 0, 1, 1], [], []>} : vector<2x64xf32>, vector<64x256xf32>, vector<2x256xf32> -> vector<2x256xf32>
    %130 = arith.addf %128, %129 : vector<2x256xf32>
    %131 = arith.negf %130 : vector<2x256xf32>
    %132 = math.exp %131 : vector<2x256xf32>
    %cst_32 = arith.constant 1.000000e+00 : f32
    %133 = vector.broadcast %cst_32 : f32 to vector<2x256xf32>
    %134 = arith.addf %133, %132 : vector<2x256xf32>
    %135 = arith.divf %133, %134 : vector<2x256xf32>
    %136 = arith.mulf %135, %40 : vector<2x256xf32>
    %137 = arith.addf %136, %43 : vector<2x256xf32>
    %138 = vector.extract_strided_slice %137 {offsets = [0, 0], sizes = [2, 64], strides = [1, 1]} : vector<2x256xf32> to vector<2x64xf32>
    %139 = vector.extract_strided_slice %137 {offsets = [0, 64], sizes = [2, 64], strides = [1, 1]} : vector<2x256xf32> to vector<2x64xf32>
    %140 = vector.extract_strided_slice %137 {offsets = [0, 128], sizes = [2, 64], strides = [1, 1]} : vector<2x256xf32> to vector<2x64xf32>
    %141 = vector.extract_strided_slice %137 {offsets = [0, 192], sizes = [2, 64], strides = [1, 1]} : vector<2x256xf32> to vector<2x64xf32>
    %142 = arith.mulf %139, %119 : vector<2x64xf32>
    %143 = arith.mulf %138, %140 : vector<2x64xf32>
    %144 = arith.addf %142, %143 : vector<2x64xf32>
    %145 = math.tanh %144 : vector<2x64xf32>
    %146 = arith.mulf %141, %145 : vector<2x64xf32>
    %147 = vector.extract_strided_slice %146 {offsets = [0, 0], sizes = [2, 32], strides = [1, 1]} : vector<2x64xf32> to vector<2x32xf32>
    %c6 = arith.constant 6 : index
    %c0_33 = arith.constant 0 : index
    %148 = vector.load %arg10[%c6, %c0_33] : memref<16x64xf32, #tpu.memory_space<vmem>>, vector<2x32xf32>
    tpu.vector_store %arg10[%c6, %c0_33], %147 {strides = array<i32>} : memref<16x64xf32, #tpu.memory_space<vmem>>, vector<2x32xf32>,
    %149 = vector.extract_strided_slice %146 {offsets = [0, 32], sizes = [2, 32], strides = [1, 1]} : vector<2x64xf32> to vector<2x32xf32>
    %c8 = arith.constant 8 : index
    %c32_34 = arith.constant 32 : index
    %150 = vector.load %arg10[%c8, %c32_34] : memref<16x64xf32, #tpu.memory_space<vmem>>, vector<2x32xf32>
    tpu.vector_store %arg10[%c8, %c32_34], %149 {strides = array<i32>} : memref<16x64xf32, #tpu.memory_space<vmem>>, vector<2x32xf32>,
    %151 = vector.extract_strided_slice %50 {offsets = [8, 0], sizes = [2, 256], strides = [1, 1]} : vector<16x256xf32> to vector<2x256xf32>
    %152 = vector.extract_strided_slice %50 {offsets = [6, 0], sizes = [2, 256], strides = [1, 1]} : vector<16x256xf32> to vector<2x256xf32>
    %153 = arith.select %32, %151, %152 : vector<2x256xi1>, vector<2x256xf32>
    %cst_35 = arith.constant dense<0.000000e+00> : vector<2x256xf32>
    %154 = tpu.matmul %146, %46, %cst_35 {dimension_numbers = #tpu.dot_dimension_numbers<[1], [0], [0], [1], [0, 0, 1, 1], [], []>} : vector<2x64xf32>, vector<64x256xf32>, vector<2x256xf32> -> vector<2x256xf32>
    %155 = arith.addf %153, %154 : vector<2x256xf32>
    %156 = arith.negf %155 : vector<2x256xf32>
    %157 = math.exp %156 : vector<2x256xf32>
    %cst_36 = arith.constant 1.000000e+00 : f32
    %158 = vector.broadcast %cst_36 : f32 to vector<2x256xf32>
    %159 = arith.addf %158, %157 : vector<2x256xf32>
    %160 = arith.divf %158, %159 : vector<2x256xf32>
    %161 = arith.mulf %160, %40 : vector<2x256xf32>
    %162 = arith.addf %161, %43 : vector<2x256xf32>
    %163 = vector.extract_strided_slice %162 {offsets = [0, 0], sizes = [2, 64], strides = [1, 1]} : vector<2x256xf32> to vector<2x64xf32>
    %164 = vector.extract_strided_slice %162 {offsets = [0, 64], sizes = [2, 64], strides = [1, 1]} : vector<2x256xf32> to vector<2x64xf32>
    %165 = vector.extract_strided_slice %162 {offsets = [0, 128], sizes = [2, 64], strides = [1, 1]} : vector<2x256xf32> to vector<2x64xf32>
    %166 = vector.extract_strided_slice %162 {offsets = [0, 192], sizes = [2, 64], strides = [1, 1]} : vector<2x256xf32> to vector<2x64xf32>
    %167 = arith.mulf %164, %144 : vector<2x64xf32>
    %168 = arith.mulf %163, %165 : vector<2x64xf32>
    %169 = arith.addf %167, %168 : vector<2x64xf32>
    %170 = math.tanh %169 : vector<2x64xf32>
    %171 = arith.mulf %166, %170 : vector<2x64xf32>
    %172 = vector.extract_strided_slice %171 {offsets = [0, 0], sizes = [2, 32], strides = [1, 1]} : vector<2x64xf32> to vector<2x32xf32>
    %c8_37 = arith.constant 8 : index
    %c0_38 = arith.constant 0 : index
    %173 = vector.load %arg10[%c8_37, %c0_38] : memref<16x64xf32, #tpu.memory_space<vmem>>, vector<2x32xf32>
    tpu.vector_store %arg10[%c8_37, %c0_38], %172 {strides = array<i32>} : memref<16x64xf32, #tpu.memory_space<vmem>>, vector<2x32xf32>,
    %174 = vector.extract_strided_slice %171 {offsets = [0, 32], sizes = [2, 32], strides = [1, 1]} : vector<2x64xf32> to vector<2x32xf32>
    %c6_39 = arith.constant 6 : index
    %c32_40 = arith.constant 32 : index
    %175 = vector.load %arg10[%c6_39, %c32_40] : memref<16x64xf32, #tpu.memory_space<vmem>>, vector<2x32xf32>
    tpu.vector_store %arg10[%c6_39, %c32_40], %174 {strides = array<i32>} : memref<16x64xf32, #tpu.memory_space<vmem>>, vector<2x32xf32>,
    %176 = vector.extract_strided_slice %50 {offsets = [10, 0], sizes = [2, 256], strides = [1, 1]} : vector<16x256xf32> to vector<2x256xf32>
    %177 = vector.extract_strided_slice %50 {offsets = [4, 0], sizes = [2, 256], strides = [1, 1]} : vector<16x256xf32> to vector<2x256xf32>
    %178 = arith.select %32, %176, %177 : vector<2x256xi1>, vector<2x256xf32>
    %cst_41 = arith.constant dense<0.000000e+00> : vector<2x256xf32>
    %179 = tpu.matmul %171, %46, %cst_41 {dimension_numbers = #tpu.dot_dimension_numbers<[1], [0], [0], [1], [0, 0, 1, 1], [], []>} : vector<2x64xf32>, vector<64x256xf32>, vector<2x256xf32> -> vector<2x256xf32>
    %180 = arith.addf %178, %179 : vector<2x256xf32>
    %181 = arith.negf %180 : vector<2x256xf32>
    %182 = math.exp %181 : vector<2x256xf32>
    %cst_42 = arith.constant 1.000000e+00 : f32
    %183 = vector.broadcast %cst_42 : f32 to vector<2x256xf32>
    %184 = arith.addf %183, %182 : vector<2x256xf32>
    %185 = arith.divf %183, %184 : vector<2x256xf32>
    %186 = arith.mulf %185, %40 : vector<2x256xf32>
    %187 = arith.addf %186, %43 : vector<2x256xf32>
    %188 = vector.extract_strided_slice %187 {offsets = [0, 0], sizes = [2, 64], strides = [1, 1]} : vector<2x256xf32> to vector<2x64xf32>
    %189 = vector.extract_strided_slice %187 {offsets = [0, 64], sizes = [2, 64], strides = [1, 1]} : vector<2x256xf32> to vector<2x64xf32>
    %190 = vector.extract_strided_slice %187 {offsets = [0, 128], sizes = [2, 64], strides = [1, 1]} : vector<2x256xf32> to vector<2x64xf32>
    %191 = vector.extract_strided_slice %187 {offsets = [0, 192], sizes = [2, 64], strides = [1, 1]} : vector<2x256xf32> to vector<2x64xf32>
    %192 = arith.mulf %189, %169 : vector<2x64xf32>
    %193 = arith.mulf %188, %190 : vector<2x64xf32>
    %194 = arith.addf %192, %193 : vector<2x64xf32>
    %195 = math.tanh %194 : vector<2x64xf32>
    %196 = arith.mulf %191, %195 : vector<2x64xf32>
    %197 = vector.extract_strided_slice %196 {offsets = [0, 0], sizes = [2, 32], strides = [1, 1]} : vector<2x64xf32> to vector<2x32xf32>
    %c10_43 = arith.constant 10 : index
    %c0_44 = arith.constant 0 : index
    %198 = vector.load %arg10[%c10_43, %c0_44] : memref<16x64xf32, #tpu.memory_space<vmem>>, vector<2x32xf32>
    tpu.vector_store %arg10[%c10_43, %c0_44], %197 {strides = array<i32>} : memref<16x64xf32, #tpu.memory_space<vmem>>, vector<2x32xf32>,
    %199 = vector.extract_strided_slice %196 {offsets = [0, 32], sizes = [2, 32], strides = [1, 1]} : vector<2x64xf32> to vector<2x32xf32>
    %c4_45 = arith.constant 4 : index
    %c32_46 = arith.constant 32 : index
    %200 = vector.load %arg10[%c4_45, %c32_46] : memref<16x64xf32, #tpu.memory_space<vmem>>, vector<2x32xf32>
    tpu.vector_store %arg10[%c4_45, %c32_46], %199 {strides = array<i32>} : memref<16x64xf32, #tpu.memory_space<vmem>>, vector<2x32xf32>,
    %201 = vector.extract_strided_slice %50 {offsets = [12, 0], sizes = [2, 256], strides = [1, 1]} : vector<16x256xf32> to vector<2x256xf32>
    %202 = vector.extract_strided_slice %50 {offsets = [2, 0], sizes = [2, 256], strides = [1, 1]} : vector<16x256xf32> to vector<2x256xf32>
    %203 = arith.select %32, %201, %202 : vector<2x256xi1>, vector<2x256xf32>
    %cst_47 = arith.constant dense<0.000000e+00> : vector<2x256xf32>
    %204 = tpu.matmul %196, %46, %cst_47 {dimension_numbers = #tpu.dot_dimension_numbers<[1], [0], [0], [1], [0, 0, 1, 1], [], []>} : vector<2x64xf32>, vector<64x256xf32>, vector<2x256xf32> -> vector<2x256xf32>
    %205 = arith.addf %203, %204 : vector<2x256xf32>
    %206 = arith.negf %205 : vector<2x256xf32>
    %207 = math.exp %206 : vector<2x256xf32>
    %cst_48 = arith.constant 1.000000e+00 : f32
    %208 = vector.broadcast %cst_48 : f32 to vector<2x256xf32>
    %209 = arith.addf %208, %207 : vector<2x256xf32>
    %210 = arith.divf %208, %209 : vector<2x256xf32>
    %211 = arith.mulf %210, %40 : vector<2x256xf32>
    %212 = arith.addf %211, %43 : vector<2x256xf32>
    %213 = vector.extract_strided_slice %212 {offsets = [0, 0], sizes = [2, 64], strides = [1, 1]} : vector<2x256xf32> to vector<2x64xf32>
    %214 = vector.extract_strided_slice %212 {offsets = [0, 64], sizes = [2, 64], strides = [1, 1]} : vector<2x256xf32> to vector<2x64xf32>
    %215 = vector.extract_strided_slice %212 {offsets = [0, 128], sizes = [2, 64], strides = [1, 1]} : vector<2x256xf32> to vector<2x64xf32>
    %216 = vector.extract_strided_slice %212 {offsets = [0, 192], sizes = [2, 64], strides = [1, 1]} : vector<2x256xf32> to vector<2x64xf32>
    %217 = arith.mulf %214, %194 : vector<2x64xf32>
    %218 = arith.mulf %213, %215 : vector<2x64xf32>
    %219 = arith.addf %217, %218 : vector<2x64xf32>
    %220 = math.tanh %219 : vector<2x64xf32>
    %221 = arith.mulf %216, %220 : vector<2x64xf32>
    %222 = vector.extract_strided_slice %221 {offsets = [0, 0], sizes = [2, 32], strides = [1, 1]} : vector<2x64xf32> to vector<2x32xf32>
    %c12_49 = arith.constant 12 : index
    %c0_50 = arith.constant 0 : index
    %223 = vector.load %arg10[%c12_49, %c0_50] : memref<16x64xf32, #tpu.memory_space<vmem>>, vector<2x32xf32>
    tpu.vector_store %arg10[%c12_49, %c0_50], %222 {strides = array<i32>} : memref<16x64xf32, #tpu.memory_space<vmem>>, vector<2x32xf32>,
    %224 = vector.extract_strided_slice %221 {offsets = [0, 32], sizes = [2, 32], strides = [1, 1]} : vector<2x64xf32> to vector<2x32xf32>
    %c2_51 = arith.constant 2 : index
    %c32_52 = arith.constant 32 : index
    %225 = vector.load %arg10[%c2_51, %c32_52] : memref<16x64xf32, #tpu.memory_space<vmem>>, vector<2x32xf32>
    tpu.vector_store %arg10[%c2_51, %c32_52], %224 {strides = array<i32>} : memref<16x64xf32, #tpu.memory_space<vmem>>, vector<2x32xf32>,
    %226 = vector.extract_strided_slice %50 {offsets = [14, 0], sizes = [2, 256], strides = [1, 1]} : vector<16x256xf32> to vector<2x256xf32>
    %227 = vector.extract_strided_slice %50 {offsets = [0, 0], sizes = [2, 256], strides = [1, 1]} : vector<16x256xf32> to vector<2x256xf32>
    %228 = arith.select %32, %226, %227 : vector<2x256xi1>, vector<2x256xf32>
    %cst_53 = arith.constant dense<0.000000e+00> : vector<2x256xf32>
    %229 = tpu.matmul %221, %46, %cst_53 {dimension_numbers = #tpu.dot_dimension_numbers<[1], [0], [0], [1], [0, 0, 1, 1], [], []>} : vector<2x64xf32>, vector<64x256xf32>, vector<2x256xf32> -> vector<2x256xf32>
    %230 = arith.addf %228, %229 : vector<2x256xf32>
    %231 = arith.negf %230 : vector<2x256xf32>
    %232 = math.exp %231 : vector<2x256xf32>
    %cst_54 = arith.constant 1.000000e+00 : f32
    %233 = vector.broadcast %cst_54 : f32 to vector<2x256xf32>
    %234 = arith.addf %233, %232 : vector<2x256xf32>
    %235 = arith.divf %233, %234 : vector<2x256xf32>
    %236 = arith.mulf %235, %40 : vector<2x256xf32>
    %237 = arith.addf %236, %43 : vector<2x256xf32>
    %238 = vector.extract_strided_slice %237 {offsets = [0, 0], sizes = [2, 64], strides = [1, 1]} : vector<2x256xf32> to vector<2x64xf32>
    %239 = vector.extract_strided_slice %237 {offsets = [0, 64], sizes = [2, 64], strides = [1, 1]} : vector<2x256xf32> to vector<2x64xf32>
    %240 = vector.extract_strided_slice %237 {offsets = [0, 128], sizes = [2, 64], strides = [1, 1]} : vector<2x256xf32> to vector<2x64xf32>
    %241 = vector.extract_strided_slice %237 {offsets = [0, 192], sizes = [2, 64], strides = [1, 1]} : vector<2x256xf32> to vector<2x64xf32>
    %242 = arith.mulf %239, %219 : vector<2x64xf32>
    %243 = arith.mulf %238, %240 : vector<2x64xf32>
    %244 = arith.addf %242, %243 : vector<2x64xf32>
    %245 = math.tanh %244 : vector<2x64xf32>
    %246 = arith.mulf %241, %245 : vector<2x64xf32>
    %247 = vector.extract_strided_slice %246 {offsets = [0, 0], sizes = [2, 32], strides = [1, 1]} : vector<2x64xf32> to vector<2x32xf32>
    %c14_55 = arith.constant 14 : index
    %c0_56 = arith.constant 0 : index
    %248 = vector.load %arg10[%c14_55, %c0_56] : memref<16x64xf32, #tpu.memory_space<vmem>>, vector<2x32xf32>
    tpu.vector_store %arg10[%c14_55, %c0_56], %247 {strides = array<i32>} : memref<16x64xf32, #tpu.memory_space<vmem>>, vector<2x32xf32>,
    %249 = vector.extract_strided_slice %246 {offsets = [0, 32], sizes = [2, 32], strides = [1, 1]} : vector<2x64xf32> to vector<2x32xf32>
    %c0_57 = arith.constant 0 : index
    %c32_58 = arith.constant 32 : index
    %250 = vector.load %arg10[%c0_57, %c32_58] : memref<16x64xf32, #tpu.memory_space<vmem>>, vector<2x32xf32>
    tpu.vector_store %arg10[%c0_57, %c32_58], %249 {strides = array<i32>} : memref<16x64xf32, #tpu.memory_space<vmem>>, vector<2x32xf32>,
    %c0_59 = arith.constant 0 : index
    %c0_60 = arith.constant 0 : index
    %251 = vector.load %arg6[%c0_59, %c0_60] : memref<64x256xf32, #tpu.memory_space<vmem>>, vector<64x256xf32>
    %c0_61 = arith.constant 0 : index
    %c0_62 = arith.constant 0 : index
    %252 = vector.load %arg7[%c0_61, %c0_62] : memref<64x256xf32, #tpu.memory_space<vmem>>, vector<64x256xf32>
    %c0_63 = arith.constant 0 : index
    %c0_64 = arith.constant 0 : index
    %253 = vector.load %arg8[%c0_63, %c0_64] : memref<1x256xf32, #tpu.memory_space<vmem>>, vector<1x256xf32>
    %c0_65 = arith.constant 0 : index
    %c0_66 = arith.constant 0 : index
    %254 = vector.load %arg10[%c0_65, %c0_66] : memref<16x64xf32, #tpu.memory_space<vmem>>, vector<16x64xf32>
    %cst_67 = arith.constant dense<0.000000e+00> : vector<16x256xf32>
    %255 = tpu.matmul %254, %251, %cst_67 {dimension_numbers = #tpu.dot_dimension_numbers<[1], [0], [0], [1], [0, 0, 1, 1], [], []>} : vector<16x64xf32>, vector<64x256xf32>, vector<16x256xf32> -> vector<16x256xf32>
    %256 = vector.broadcast %253 : vector<1x256xf32> to vector<16x256xf32>
    %257 = arith.addf %255, %256 : vector<16x256xf32>
    %258 = vector.extract_strided_slice %257 {offsets = [0, 0], sizes = [2, 256], strides = [1, 1]} : vector<16x256xf32> to vector<2x256xf32>
    %259 = vector.extract_strided_slice %257 {offsets = [14, 0], sizes = [2, 256], strides = [1, 1]} : vector<16x256xf32> to vector<2x256xf32>
    %260 = arith.select %32, %258, %259 : vector<2x256xi1>, vector<2x256xf32>
    %cst_68 = arith.constant dense<0.000000e+00> : vector<2x256xf32>
    %261 = tpu.matmul %44, %252, %cst_68 {dimension_numbers = #tpu.dot_dimension_numbers<[1], [0], [0], [1], [0, 0, 1, 1], [], []>} : vector<2x64xf32>, vector<64x256xf32>, vector<2x256xf32> -> vector<2x256xf32>
    %262 = arith.addf %260, %261 : vector<2x256xf32>
    %263 = arith.negf %262 : vector<2x256xf32>
    %264 = math.exp %263 : vector<2x256xf32>
    %cst_69 = arith.constant 1.000000e+00 : f32
    %265 = vector.broadcast %cst_69 : f32 to vector<2x256xf32>
    %266 = arith.addf %265, %264 : vector<2x256xf32>
    %267 = arith.divf %265, %266 : vector<2x256xf32>
    %268 = arith.mulf %267, %40 : vector<2x256xf32>
    %269 = arith.addf %268, %43 : vector<2x256xf32>
    %270 = vector.extract_strided_slice %269 {offsets = [0, 0], sizes = [2, 64], strides = [1, 1]} : vector<2x256xf32> to vector<2x64xf32>
    %271 = vector.extract_strided_slice %269 {offsets = [0, 64], sizes = [2, 64], strides = [1, 1]} : vector<2x256xf32> to vector<2x64xf32>
    %272 = vector.extract_strided_slice %269 {offsets = [0, 128], sizes = [2, 64], strides = [1, 1]} : vector<2x256xf32> to vector<2x64xf32>
    %273 = vector.extract_strided_slice %269 {offsets = [0, 192], sizes = [2, 64], strides = [1, 1]} : vector<2x256xf32> to vector<2x64xf32>
    %274 = arith.mulf %271, %44 : vector<2x64xf32>
    %275 = arith.mulf %270, %272 : vector<2x64xf32>
    %276 = arith.addf %274, %275 : vector<2x64xf32>
    %277 = math.tanh %276 : vector<2x64xf32>
    %278 = arith.mulf %273, %277 : vector<2x64xf32>
    %279 = vector.extract_strided_slice %278 {offsets = [0, 0], sizes = [2, 32], strides = [1, 1]} : vector<2x64xf32> to vector<2x32xf32>
    %c0_70 = arith.constant 0 : index
    %c0_71 = arith.constant 0 : index
    %280 = vector.load %arg9[%c0_70, %c0_71] : memref<2x512xf32, #tpu.memory_space<vmem>>, vector<2x32xf32>
    tpu.vector_store %arg9[%c0_70, %c0_71], %279 {strides = array<i32>} : memref<2x512xf32, #tpu.memory_space<vmem>>, vector<2x32xf32>,
    %281 = vector.extract_strided_slice %278 {offsets = [0, 32], sizes = [2, 32], strides = [1, 1]} : vector<2x64xf32> to vector<2x32xf32>
    %c0_72 = arith.constant 0 : index
    %c480 = arith.constant 480 : index
    %282 = vector.load %arg9[%c0_72, %c480] : memref<2x512xf32, #tpu.memory_space<vmem>>, vector<2x32xf32>
    tpu.vector_store %arg9[%c0_72, %c480], %281 {strides = array<i32>} : memref<2x512xf32, #tpu.memory_space<vmem>>, vector<2x32xf32>,
    %283 = vector.extract_strided_slice %257 {offsets = [2, 0], sizes = [2, 256], strides = [1, 1]} : vector<16x256xf32> to vector<2x256xf32>
    %284 = vector.extract_strided_slice %257 {offsets = [12, 0], sizes = [2, 256], strides = [1, 1]} : vector<16x256xf32> to vector<2x256xf32>
    %285 = arith.select %32, %283, %284 : vector<2x256xi1>, vector<2x256xf32>
    %cst_73 = arith.constant dense<0.000000e+00> : vector<2x256xf32>
    %286 = tpu.matmul %278, %252, %cst_73 {dimension_numbers = #tpu.dot_dimension_numbers<[1], [0], [0], [1], [0, 0, 1, 1], [], []>} : vector<2x64xf32>, vector<64x256xf32>, vector<2x256xf32> -> vector<2x256xf32>
    %287 = arith.addf %285, %286 : vector<2x256xf32>
    %288 = arith.negf %287 : vector<2x256xf32>
    %289 = math.exp %288 : vector<2x256xf32>
    %cst_74 = arith.constant 1.000000e+00 : f32
    %290 = vector.broadcast %cst_74 : f32 to vector<2x256xf32>
    %291 = arith.addf %290, %289 : vector<2x256xf32>
    %292 = arith.divf %290, %291 : vector<2x256xf32>
    %293 = arith.mulf %292, %40 : vector<2x256xf32>
    %294 = arith.addf %293, %43 : vector<2x256xf32>
    %295 = vector.extract_strided_slice %294 {offsets = [0, 0], sizes = [2, 64], strides = [1, 1]} : vector<2x256xf32> to vector<2x64xf32>
    %296 = vector.extract_strided_slice %294 {offsets = [0, 64], sizes = [2, 64], strides = [1, 1]} : vector<2x256xf32> to vector<2x64xf32>
    %297 = vector.extract_strided_slice %294 {offsets = [0, 128], sizes = [2, 64], strides = [1, 1]} : vector<2x256xf32> to vector<2x64xf32>
    %298 = vector.extract_strided_slice %294 {offsets = [0, 192], sizes = [2, 64], strides = [1, 1]} : vector<2x256xf32> to vector<2x64xf32>
    %299 = arith.mulf %296, %276 : vector<2x64xf32>
    %300 = arith.mulf %295, %297 : vector<2x64xf32>
    %301 = arith.addf %299, %300 : vector<2x64xf32>
    %302 = math.tanh %301 : vector<2x64xf32>
    %303 = arith.mulf %298, %302 : vector<2x64xf32>
    %304 = vector.extract_strided_slice %303 {offsets = [0, 0], sizes = [2, 32], strides = [1, 1]} : vector<2x64xf32> to vector<2x32xf32>
    %c0_75 = arith.constant 0 : index
    %c64 = arith.constant 64 : index
    %305 = vector.load %arg9[%c0_75, %c64] : memref<2x512xf32, #tpu.memory_space<vmem>>, vector<2x32xf32>
    tpu.vector_store %arg9[%c0_75, %c64], %304 {strides = array<i32>} : memref<2x512xf32, #tpu.memory_space<vmem>>, vector<2x32xf32>,
    %306 = vector.extract_strided_slice %303 {offsets = [0, 32], sizes = [2, 32], strides = [1, 1]} : vector<2x64xf32> to vector<2x32xf32>
    %c0_76 = arith.constant 0 : index
    %c416 = arith.constant 416 : index
    %307 = vector.load %arg9[%c0_76, %c416] : memref<2x512xf32, #tpu.memory_space<vmem>>, vector<2x32xf32>
    tpu.vector_store %arg9[%c0_76, %c416], %306 {strides = array<i32>} : memref<2x512xf32, #tpu.memory_space<vmem>>, vector<2x32xf32>,
    %308 = vector.extract_strided_slice %257 {offsets = [4, 0], sizes = [2, 256], strides = [1, 1]} : vector<16x256xf32> to vector<2x256xf32>
    %309 = vector.extract_strided_slice %257 {offsets = [10, 0], sizes = [2, 256], strides = [1, 1]} : vector<16x256xf32> to vector<2x256xf32>
    %310 = arith.select %32, %308, %309 : vector<2x256xi1>, vector<2x256xf32>
    %cst_77 = arith.constant dense<0.000000e+00> : vector<2x256xf32>
    %311 = tpu.matmul %303, %252, %cst_77 {dimension_numbers = #tpu.dot_dimension_numbers<[1], [0], [0], [1], [0, 0, 1, 1], [], []>} : vector<2x64xf32>, vector<64x256xf32>, vector<2x256xf32> -> vector<2x256xf32>
    %312 = arith.addf %310, %311 : vector<2x256xf32>
    %313 = arith.negf %312 : vector<2x256xf32>
    %314 = math.exp %313 : vector<2x256xf32>
    %cst_78 = arith.constant 1.000000e+00 : f32
    %315 = vector.broadcast %cst_78 : f32 to vector<2x256xf32>
    %316 = arith.addf %315, %314 : vector<2x256xf32>
    %317 = arith.divf %315, %316 : vector<2x256xf32>
    %318 = arith.mulf %317, %40 : vector<2x256xf32>
    %319 = arith.addf %318, %43 : vector<2x256xf32>
    %320 = vector.extract_strided_slice %319 {offsets = [0, 0], sizes = [2, 64], strides = [1, 1]} : vector<2x256xf32> to vector<2x64xf32>
    %321 = vector.extract_strided_slice %319 {offsets = [0, 64], sizes = [2, 64], strides = [1, 1]} : vector<2x256xf32> to vector<2x64xf32>
    %322 = vector.extract_strided_slice %319 {offsets = [0, 128], sizes = [2, 64], strides = [1, 1]} : vector<2x256xf32> to vector<2x64xf32>
    %323 = vector.extract_strided_slice %319 {offsets = [0, 192], sizes = [2, 64], strides = [1, 1]} : vector<2x256xf32> to vector<2x64xf32>
    %324 = arith.mulf %321, %301 : vector<2x64xf32>
    %325 = arith.mulf %320, %322 : vector<2x64xf32>
    %326 = arith.addf %324, %325 : vector<2x64xf32>
    %327 = math.tanh %326 : vector<2x64xf32>
    %328 = arith.mulf %323, %327 : vector<2x64xf32>
    %329 = vector.extract_strided_slice %328 {offsets = [0, 0], sizes = [2, 32], strides = [1, 1]} : vector<2x64xf32> to vector<2x32xf32>
    %c0_79 = arith.constant 0 : index
    %c128 = arith.constant 128 : index
    %330 = vector.load %arg9[%c0_79, %c128] : memref<2x512xf32, #tpu.memory_space<vmem>>, vector<2x32xf32>
    tpu.vector_store %arg9[%c0_79, %c128], %329 {strides = array<i32>} : memref<2x512xf32, #tpu.memory_space<vmem>>, vector<2x32xf32>,
    %331 = vector.extract_strided_slice %328 {offsets = [0, 32], sizes = [2, 32], strides = [1, 1]} : vector<2x64xf32> to vector<2x32xf32>
    %c0_80 = arith.constant 0 : index
    %c352 = arith.constant 352 : index
    %332 = vector.load %arg9[%c0_80, %c352] : memref<2x512xf32, #tpu.memory_space<vmem>>, vector<2x32xf32>
    tpu.vector_store %arg9[%c0_80, %c352], %331 {strides = array<i32>} : memref<2x512xf32, #tpu.memory_space<vmem>>, vector<2x32xf32>,
    %333 = vector.extract_strided_slice %257 {offsets = [6, 0], sizes = [2, 256], strides = [1, 1]} : vector<16x256xf32> to vector<2x256xf32>
    %334 = vector.extract_strided_slice %257 {offsets = [8, 0], sizes = [2, 256], strides = [1, 1]} : vector<16x256xf32> to vector<2x256xf32>
    %335 = arith.select %32, %333, %334 : vector<2x256xi1>, vector<2x256xf32>
    %cst_81 = arith.constant dense<0.000000e+00> : vector<2x256xf32>
    %336 = tpu.matmul %328, %252, %cst_81 {dimension_numbers = #tpu.dot_dimension_numbers<[1], [0], [0], [1], [0, 0, 1, 1], [], []>} : vector<2x64xf32>, vector<64x256xf32>, vector<2x256xf32> -> vector<2x256xf32>
    %337 = arith.addf %335, %336 : vector<2x256xf32>
    %338 = arith.negf %337 : vector<2x256xf32>
    %339 = math.exp %338 : vector<2x256xf32>
    %cst_82 = arith.constant 1.000000e+00 : f32
    %340 = vector.broadcast %cst_82 : f32 to vector<2x256xf32>
    %341 = arith.addf %340, %339 : vector<2x256xf32>
    %342 = arith.divf %340, %341 : vector<2x256xf32>
    %343 = arith.mulf %342, %40 : vector<2x256xf32>
    %344 = arith.addf %343, %43 : vector<2x256xf32>
    %345 = vector.extract_strided_slice %344 {offsets = [0, 0], sizes = [2, 64], strides = [1, 1]} : vector<2x256xf32> to vector<2x64xf32>
    %346 = vector.extract_strided_slice %344 {offsets = [0, 64], sizes = [2, 64], strides = [1, 1]} : vector<2x256xf32> to vector<2x64xf32>
    %347 = vector.extract_strided_slice %344 {offsets = [0, 128], sizes = [2, 64], strides = [1, 1]} : vector<2x256xf32> to vector<2x64xf32>
    %348 = vector.extract_strided_slice %344 {offsets = [0, 192], sizes = [2, 64], strides = [1, 1]} : vector<2x256xf32> to vector<2x64xf32>
    %349 = arith.mulf %346, %326 : vector<2x64xf32>
    %350 = arith.mulf %345, %347 : vector<2x64xf32>
    %351 = arith.addf %349, %350 : vector<2x64xf32>
    %352 = math.tanh %351 : vector<2x64xf32>
    %353 = arith.mulf %348, %352 : vector<2x64xf32>
    %354 = vector.extract_strided_slice %353 {offsets = [0, 0], sizes = [2, 32], strides = [1, 1]} : vector<2x64xf32> to vector<2x32xf32>
    %c0_83 = arith.constant 0 : index
    %c192 = arith.constant 192 : index
    %355 = vector.load %arg9[%c0_83, %c192] : memref<2x512xf32, #tpu.memory_space<vmem>>, vector<2x32xf32>
    tpu.vector_store %arg9[%c0_83, %c192], %354 {strides = array<i32>} : memref<2x512xf32, #tpu.memory_space<vmem>>, vector<2x32xf32>,
    %356 = vector.extract_strided_slice %353 {offsets = [0, 32], sizes = [2, 32], strides = [1, 1]} : vector<2x64xf32> to vector<2x32xf32>
    %c0_84 = arith.constant 0 : index
    %c288 = arith.constant 288 : index
    %357 = vector.load %arg9[%c0_84, %c288] : memref<2x512xf32, #tpu.memory_space<vmem>>, vector<2x32xf32>
    tpu.vector_store %arg9[%c0_84, %c288], %356 {strides = array<i32>} : memref<2x512xf32, #tpu.memory_space<vmem>>, vector<2x32xf32>,
    %358 = vector.extract_strided_slice %257 {offsets = [8, 0], sizes = [2, 256], strides = [1, 1]} : vector<16x256xf32> to vector<2x256xf32>
    %359 = vector.extract_strided_slice %257 {offsets = [6, 0], sizes = [2, 256], strides = [1, 1]} : vector<16x256xf32> to vector<2x256xf32>
    %360 = arith.select %32, %358, %359 : vector<2x256xi1>, vector<2x256xf32>
    %cst_85 = arith.constant dense<0.000000e+00> : vector<2x256xf32>
    %361 = tpu.matmul %353, %252, %cst_85 {dimension_numbers = #tpu.dot_dimension_numbers<[1], [0], [0], [1], [0, 0, 1, 1], [], []>} : vector<2x64xf32>, vector<64x256xf32>, vector<2x256xf32> -> vector<2x256xf32>
    %362 = arith.addf %360, %361 : vector<2x256xf32>
    %363 = arith.negf %362 : vector<2x256xf32>
    %364 = math.exp %363 : vector<2x256xf32>
    %cst_86 = arith.constant 1.000000e+00 : f32
    %365 = vector.broadcast %cst_86 : f32 to vector<2x256xf32>
    %366 = arith.addf %365, %364 : vector<2x256xf32>
    %367 = arith.divf %365, %366 : vector<2x256xf32>
    %368 = arith.mulf %367, %40 : vector<2x256xf32>
    %369 = arith.addf %368, %43 : vector<2x256xf32>
    %370 = vector.extract_strided_slice %369 {offsets = [0, 0], sizes = [2, 64], strides = [1, 1]} : vector<2x256xf32> to vector<2x64xf32>
    %371 = vector.extract_strided_slice %369 {offsets = [0, 64], sizes = [2, 64], strides = [1, 1]} : vector<2x256xf32> to vector<2x64xf32>
    %372 = vector.extract_strided_slice %369 {offsets = [0, 128], sizes = [2, 64], strides = [1, 1]} : vector<2x256xf32> to vector<2x64xf32>
    %373 = vector.extract_strided_slice %369 {offsets = [0, 192], sizes = [2, 64], strides = [1, 1]} : vector<2x256xf32> to vector<2x64xf32>
    %374 = arith.mulf %371, %351 : vector<2x64xf32>
    %375 = arith.mulf %370, %372 : vector<2x64xf32>
    %376 = arith.addf %374, %375 : vector<2x64xf32>
    %377 = math.tanh %376 : vector<2x64xf32>
    %378 = arith.mulf %373, %377 : vector<2x64xf32>
    %379 = vector.extract_strided_slice %378 {offsets = [0, 0], sizes = [2, 32], strides = [1, 1]} : vector<2x64xf32> to vector<2x32xf32>
    %c0_87 = arith.constant 0 : index
    %c256 = arith.constant 256 : index
    %380 = vector.load %arg9[%c0_87, %c256] : memref<2x512xf32, #tpu.memory_space<vmem>>, vector<2x32xf32>
    tpu.vector_store %arg9[%c0_87, %c256], %379 {strides = array<i32>} : memref<2x512xf32, #tpu.memory_space<vmem>>, vector<2x32xf32>,
    %381 = vector.extract_strided_slice %378 {offsets = [0, 32], sizes = [2, 32], strides = [1, 1]} : vector<2x64xf32> to vector<2x32xf32>
    %c0_88 = arith.constant 0 : index
    %c224 = arith.constant 224 : index
    %382 = vector.load %arg9[%c0_88, %c224] : memref<2x512xf32, #tpu.memory_space<vmem>>, vector<2x32xf32>
    tpu.vector_store %arg9[%c0_88, %c224], %381 {strides = array<i32>} : memref<2x512xf32, #tpu.memory_space<vmem>>, vector<2x32xf32>,
    %383 = vector.extract_strided_slice %257 {offsets = [10, 0], sizes = [2, 256], strides = [1, 1]} : vector<16x256xf32> to vector<2x256xf32>
    %384 = vector.extract_strided_slice %257 {offsets = [4, 0], sizes = [2, 256], strides = [1, 1]} : vector<16x256xf32> to vector<2x256xf32>
    %385 = arith.select %32, %383, %384 : vector<2x256xi1>, vector<2x256xf32>
    %cst_89 = arith.constant dense<0.000000e+00> : vector<2x256xf32>
    %386 = tpu.matmul %378, %252, %cst_89 {dimension_numbers = #tpu.dot_dimension_numbers<[1], [0], [0], [1], [0, 0, 1, 1], [], []>} : vector<2x64xf32>, vector<64x256xf32>, vector<2x256xf32> -> vector<2x256xf32>
    %387 = arith.addf %385, %386 : vector<2x256xf32>
    %388 = arith.negf %387 : vector<2x256xf32>
    %389 = math.exp %388 : vector<2x256xf32>
    %cst_90 = arith.constant 1.000000e+00 : f32
    %390 = vector.broadcast %cst_90 : f32 to vector<2x256xf32>
    %391 = arith.addf %390, %389 : vector<2x256xf32>
    %392 = arith.divf %390, %391 : vector<2x256xf32>
    %393 = arith.mulf %392, %40 : vector<2x256xf32>
    %394 = arith.addf %393, %43 : vector<2x256xf32>
    %395 = vector.extract_strided_slice %394 {offsets = [0, 0], sizes = [2, 64], strides = [1, 1]} : vector<2x256xf32> to vector<2x64xf32>
    %396 = vector.extract_strided_slice %394 {offsets = [0, 64], sizes = [2, 64], strides = [1, 1]} : vector<2x256xf32> to vector<2x64xf32>
    %397 = vector.extract_strided_slice %394 {offsets = [0, 128], sizes = [2, 64], strides = [1, 1]} : vector<2x256xf32> to vector<2x64xf32>
    %398 = vector.extract_strided_slice %394 {offsets = [0, 192], sizes = [2, 64], strides = [1, 1]} : vector<2x256xf32> to vector<2x64xf32>
    %399 = arith.mulf %396, %376 : vector<2x64xf32>
    %400 = arith.mulf %395, %397 : vector<2x64xf32>
    %401 = arith.addf %399, %400 : vector<2x64xf32>
    %402 = math.tanh %401 : vector<2x64xf32>
    %403 = arith.mulf %398, %402 : vector<2x64xf32>
    %404 = vector.extract_strided_slice %403 {offsets = [0, 0], sizes = [2, 32], strides = [1, 1]} : vector<2x64xf32> to vector<2x32xf32>
    %c0_91 = arith.constant 0 : index
    %c320 = arith.constant 320 : index
    %405 = vector.load %arg9[%c0_91, %c320] : memref<2x512xf32, #tpu.memory_space<vmem>>, vector<2x32xf32>
    tpu.vector_store %arg9[%c0_91, %c320], %404 {strides = array<i32>} : memref<2x512xf32, #tpu.memory_space<vmem>>, vector<2x32xf32>,
    %406 = vector.extract_strided_slice %403 {offsets = [0, 32], sizes = [2, 32], strides = [1, 1]} : vector<2x64xf32> to vector<2x32xf32>
    %c0_92 = arith.constant 0 : index
    %c160 = arith.constant 160 : index
    %407 = vector.load %arg9[%c0_92, %c160] : memref<2x512xf32, #tpu.memory_space<vmem>>, vector<2x32xf32>
    tpu.vector_store %arg9[%c0_92, %c160], %406 {strides = array<i32>} : memref<2x512xf32, #tpu.memory_space<vmem>>, vector<2x32xf32>,
    %408 = vector.extract_strided_slice %257 {offsets = [12, 0], sizes = [2, 256], strides = [1, 1]} : vector<16x256xf32> to vector<2x256xf32>
    %409 = vector.extract_strided_slice %257 {offsets = [2, 0], sizes = [2, 256], strides = [1, 1]} : vector<16x256xf32> to vector<2x256xf32>
    %410 = arith.select %32, %408, %409 : vector<2x256xi1>, vector<2x256xf32>
    %cst_93 = arith.constant dense<0.000000e+00> : vector<2x256xf32>
    %411 = tpu.matmul %403, %252, %cst_93 {dimension_numbers = #tpu.dot_dimension_numbers<[1], [0], [0], [1], [0, 0, 1, 1], [], []>} : vector<2x64xf32>, vector<64x256xf32>, vector<2x256xf32> -> vector<2x256xf32>
    %412 = arith.addf %410, %411 : vector<2x256xf32>
    %413 = arith.negf %412 : vector<2x256xf32>
    %414 = math.exp %413 : vector<2x256xf32>
    %cst_94 = arith.constant 1.000000e+00 : f32
    %415 = vector.broadcast %cst_94 : f32 to vector<2x256xf32>
    %416 = arith.addf %415, %414 : vector<2x256xf32>
    %417 = arith.divf %415, %416 : vector<2x256xf32>
    %418 = arith.mulf %417, %40 : vector<2x256xf32>
    %419 = arith.addf %418, %43 : vector<2x256xf32>
    %420 = vector.extract_strided_slice %419 {offsets = [0, 0], sizes = [2, 64], strides = [1, 1]} : vector<2x256xf32> to vector<2x64xf32>
    %421 = vector.extract_strided_slice %419 {offsets = [0, 64], sizes = [2, 64], strides = [1, 1]} : vector<2x256xf32> to vector<2x64xf32>
    %422 = vector.extract_strided_slice %419 {offsets = [0, 128], sizes = [2, 64], strides = [1, 1]} : vector<2x256xf32> to vector<2x64xf32>
    %423 = vector.extract_strided_slice %419 {offsets = [0, 192], sizes = [2, 64], strides = [1, 1]} : vector<2x256xf32> to vector<2x64xf32>
    %424 = arith.mulf %421, %401 : vector<2x64xf32>
    %425 = arith.mulf %420, %422 : vector<2x64xf32>
    %426 = arith.addf %424, %425 : vector<2x64xf32>
    %427 = math.tanh %426 : vector<2x64xf32>
    %428 = arith.mulf %423, %427 : vector<2x64xf32>
    %429 = vector.extract_strided_slice %428 {offsets = [0, 0], sizes = [2, 32], strides = [1, 1]} : vector<2x64xf32> to vector<2x32xf32>
    %c0_95 = arith.constant 0 : index
    %c384 = arith.constant 384 : index
    %430 = vector.load %arg9[%c0_95, %c384] : memref<2x512xf32, #tpu.memory_space<vmem>>, vector<2x32xf32>
    tpu.vector_store %arg9[%c0_95, %c384], %429 {strides = array<i32>} : memref<2x512xf32, #tpu.memory_space<vmem>>, vector<2x32xf32>,
    %431 = vector.extract_strided_slice %428 {offsets = [0, 32], sizes = [2, 32], strides = [1, 1]} : vector<2x64xf32> to vector<2x32xf32>
    %c0_96 = arith.constant 0 : index
    %c96 = arith.constant 96 : index
    %432 = vector.load %arg9[%c0_96, %c96] : memref<2x512xf32, #tpu.memory_space<vmem>>, vector<2x32xf32>
    tpu.vector_store %arg9[%c0_96, %c96], %431 {strides = array<i32>} : memref<2x512xf32, #tpu.memory_space<vmem>>, vector<2x32xf32>,
    %433 = vector.extract_strided_slice %257 {offsets = [14, 0], sizes = [2, 256], strides = [1, 1]} : vector<16x256xf32> to vector<2x256xf32>
    %434 = vector.extract_strided_slice %257 {offsets = [0, 0], sizes = [2, 256], strides = [1, 1]} : vector<16x256xf32> to vector<2x256xf32>
    %435 = arith.select %32, %433, %434 : vector<2x256xi1>, vector<2x256xf32>
    %cst_97 = arith.constant dense<0.000000e+00> : vector<2x256xf32>
    %436 = tpu.matmul %428, %252, %cst_97 {dimension_numbers = #tpu.dot_dimension_numbers<[1], [0], [0], [1], [0, 0, 1, 1], [], []>} : vector<2x64xf32>, vector<64x256xf32>, vector<2x256xf32> -> vector<2x256xf32>
    %437 = arith.addf %435, %436 : vector<2x256xf32>
    %438 = arith.negf %437 : vector<2x256xf32>
    %439 = math.exp %438 : vector<2x256xf32>
    %cst_98 = arith.constant 1.000000e+00 : f32
    %440 = vector.broadcast %cst_98 : f32 to vector<2x256xf32>
    %441 = arith.addf %440, %439 : vector<2x256xf32>
    %442 = arith.divf %440, %441 : vector<2x256xf32>
    %443 = arith.mulf %442, %40 : vector<2x256xf32>
    %444 = arith.addf %443, %43 : vector<2x256xf32>
    %445 = vector.extract_strided_slice %444 {offsets = [0, 0], sizes = [2, 64], strides = [1, 1]} : vector<2x256xf32> to vector<2x64xf32>
    %446 = vector.extract_strided_slice %444 {offsets = [0, 64], sizes = [2, 64], strides = [1, 1]} : vector<2x256xf32> to vector<2x64xf32>
    %447 = vector.extract_strided_slice %444 {offsets = [0, 128], sizes = [2, 64], strides = [1, 1]} : vector<2x256xf32> to vector<2x64xf32>
    %448 = vector.extract_strided_slice %444 {offsets = [0, 192], sizes = [2, 64], strides = [1, 1]} : vector<2x256xf32> to vector<2x64xf32>
    %449 = arith.mulf %446, %426 : vector<2x64xf32>
    %450 = arith.mulf %445, %447 : vector<2x64xf32>
    %451 = arith.addf %449, %450 : vector<2x64xf32>
    %452 = math.tanh %451 : vector<2x64xf32>
    %453 = arith.mulf %448, %452 : vector<2x64xf32>
    %454 = vector.extract_strided_slice %453 {offsets = [0, 0], sizes = [2, 32], strides = [1, 1]} : vector<2x64xf32> to vector<2x32xf32>
    %c0_99 = arith.constant 0 : index
    %c448 = arith.constant 448 : index
    %455 = vector.load %arg9[%c0_99, %c448] : memref<2x512xf32, #tpu.memory_space<vmem>>, vector<2x32xf32>
    tpu.vector_store %arg9[%c0_99, %c448], %454 {strides = array<i32>} : memref<2x512xf32, #tpu.memory_space<vmem>>, vector<2x32xf32>,
    %456 = vector.extract_strided_slice %453 {offsets = [0, 32], sizes = [2, 32], strides = [1, 1]} : vector<2x64xf32> to vector<2x32xf32>
    %c0_100 = arith.constant 0 : index
    %c32_101 = arith.constant 32 : index
    %457 = vector.load %arg9[%c0_100, %c32_101] : memref<2x512xf32, #tpu.memory_space<vmem>>, vector<2x32xf32>
    tpu.vector_store %arg9[%c0_100, %c32_101], %456 {strides = array<i32>} : memref<2x512xf32, #tpu.memory_space<vmem>>, vector<2x32xf32>,
    return
  }
}

</mosaic_0001>

<llo_original>
// kernel: seq2seqvec_cnnrnn_forward.1
$region0: #{seq2seqvec_cnnrnn_forward.1}
  #allocation0 [shape = 'u32[]', space=smem, size = 0x4, offset = 0x4, fixed_abs, tag = 'smem constant byte address 0x4 - core index']
  #allocation1 [shape = 'u32[72,128]{1,0:T(1,128)}', space=vmem, size = 0x9000, scoped, tag = 'internal scratch']
  #allocation2 [shape = 'f32[16,64]{1,0:T(8,128)}', space=vmem, size = 0x2000, scoped, tag = 'scratch operand']
  %s0 = inlined_call_operand.vmem [shape: f32[16,48], index: 0, kind: input, shape index: {}]
  %s1 = inlined_call_operand.vmem [shape: f32[48,32], index: 1, kind: input, shape index: {}]
  %s2 = inlined_call_operand.vmem [shape: f32[1,32], index: 2, kind: input, shape index: {}]
  %s3 = inlined_call_operand.vmem [shape: f32[32,256], index: 3, kind: input, shape index: {}]
  %s4 = inlined_call_operand.hbm [shape: f32[64,256], index: 4, kind: input, shape index: {}]
  %s5 = inlined_call_operand.vmem [shape: f32[1,256], index: 5, kind: input, shape index: {}]
  %s6 = inlined_call_operand.hbm [shape: f32[64,256], index: 6, kind: input, shape index: {}]
  %s7 = inlined_call_operand.hbm [shape: f32[64,256], index: 7, kind: input, shape index: {}]
  %s8 = inlined_call_operand.vmem [shape: f32[1,256], index: 8, kind: input, shape index: {}]
  %s9 = inlined_call_operand.vmem [shape: f32[2,512], index: 9, kind: output, shape index: {}]
  %s10 = sld [smem:[#allocation0]]
  $region58: #{seq2seqvec_cnnrnn_forward.1} parent=0
    _
  %s12 = ssub.s32 1, %s10
  %s13 = scalar_select 0, %s12, %s10
  $region1: #{seq2seqvec_cnnrnn_forward.1} parent=0
    #allocation3 [shape = 'u8[65536]{0}', space=vmem, size = 0x10000, scoped, tag = 'input window, operand 4, single buffered']
    #allocation4 [shape = 's32[1]{0}', space=sflag, size = 0x4, scoped, tag = 'scoped memory for seq2seqvec_cnnrnn_forward.1']
    #allocation5 [shape = 'u8[65536]{0}', space=vmem, size = 0x10000, scoped, tag = 'input window, operand 6, single buffered']
    #allocation6 [shape = 's32[1]{0}', space=sflag, size = 0x4, scoped, tag = 'scoped memory for seq2seqvec_cnnrnn_forward.1']
    #allocation7 [shape = 'u8[65536]{0}', space=vmem, size = 0x10000, scoped, tag = 'input window, operand 7, single buffered']
    %14 = vsyncpa [#allocation4], 0
    %15 = vsyncpa [#allocation6], 0
    // Predicated region
    $region2: #{seq2seqvec_cnnrnn_forward.1} parent=1 // pred_check
      _
    $region3: #{seq2seqvec_cnnrnn_forward.1} parent=1 // pred_check_branch
      %17 = sbr.rel (0) target = $region5
    $region4: #{seq2seqvec_cnnrnn_forward.1} parent=1 // pred_region
      _
    $region5: #{seq2seqvec_cnnrnn_forward.1} parent=1 // pred_fallthru
      _
    // Predicated region
    $region6: #{seq2seqvec_cnnrnn_forward.1} parent=1 // pred_check
      _
    $region7: #{seq2seqvec_cnnrnn_forward.1} parent=1 // pred_check_branch
      %19 = sbr.rel (0) target = $region9
    $region8: #{seq2seqvec_cnnrnn_forward.1} parent=1 // pred_region
      _
    $region9: #{seq2seqvec_cnnrnn_forward.1} parent=1 // pred_fallthru
      _
    // Predicated region
    $region10: #{seq2seqvec_cnnrnn_forward.1} parent=1 // pred_check
      _
    $region11: #{seq2seqvec_cnnrnn_forward.1} parent=1 // pred_check_branch
      %21 = sbr.rel (0) target = $region13
    $region12: #{seq2seqvec_cnnrnn_forward.1} parent=1 // pred_region
      _
    $region13: #{seq2seqvec_cnnrnn_forward.1} parent=1 // pred_fallthru
      _
    // Predicated region
    $region14: #{seq2seqvec_cnnrnn_forward.1} parent=1 // pred_check
      _
    $region15: #{seq2seqvec_cnnrnn_forward.1} parent=1 // pred_check_branch
      %23 = sbr.rel (0) target = $region17
    $region16: #{seq2seqvec_cnnrnn_forward.1} parent=1 // pred_region
      _
    $region17: #{seq2seqvec_cnnrnn_forward.1} parent=1 // pred_fallthru
      _
    // Predicated region
    $region18: #{seq2seqvec_cnnrnn_forward.1} parent=1 // pred_check
      _
    $region19: #{seq2seqvec_cnnrnn_forward.1} parent=1 // pred_check_branch
      %25 = sbr.rel (0) target = $region21
    $region20: #{seq2seqvec_cnnrnn_forward.1} parent=1 // pred_region
      %27 = vsyncadd [#allocation4], 0
      %s28 = sshll.u32 %s4, 4
      %s29 = int_to_ptr.hbm [resolvable:$true] %s28
      %s30 = sshll.u32 [#allocation3], 4
      %s31 = int_to_ptr.vmem [resolvable:$true] %s30
      %36 = dma.hbm_to_vmem [thread:$0]  %s29, 2048, %s31, [#allocation4], 256, 256, 16
    $region21: #{seq2seqvec_cnnrnn_forward.1} parent=1 // pred_fallthru
      _
    // Predicated region
    $region22: #{seq2seqvec_cnnrnn_forward.1} parent=1 // pred_check
      _
    $region23: #{seq2seqvec_cnnrnn_forward.1} parent=1 // pred_check_branch
      %38 = sbr.rel (0) target = $region25
    $region24: #{seq2seqvec_cnnrnn_forward.1} parent=1 // pred_region
      _
    $region25: #{seq2seqvec_cnnrnn_forward.1} parent=1 // pred_fallthru
      _
    // Predicated region
    $region26: #{seq2seqvec_cnnrnn_forward.1} parent=1 // pred_check
      _
    $region27: #{seq2seqvec_cnnrnn_forward.1} parent=1 // pred_check_branch
      %40 = sbr.rel (0) target = $region29
    $region28: #{seq2seqvec_cnnrnn_forward.1} parent=1 // pred_region
      %42 = vsyncadd [#allocation6], 0
      %s43 = sshll.u32 %s6, 4
      %s44 = int_to_ptr.hbm [resolvable:$true] %s43
      %s45 = sshll.u32 [#allocation5], 4
      %s46 = int_to_ptr.vmem [resolvable:$true] %s45
      %51 = dma.hbm_to_vmem [thread:$0]  %s44, 2048, %s46, [#allocation6], 256, 256, 16
    $region29: #{seq2seqvec_cnnrnn_forward.1} parent=1 // pred_fallthru
      _
    // Predicated region
    $region30: #{seq2seqvec_cnnrnn_forward.1} parent=1 // pred_check
      _
    $region31: #{seq2seqvec_cnnrnn_forward.1} parent=1 // pred_check_branch
      %53 = sbr.rel (0) target = $region33
    $region32: #{seq2seqvec_cnnrnn_forward.1} parent=1 // pred_region
      %55 = vsyncadd [#allocation6], 0
      %s56 = sshll.u32 %s7, 4
      %s57 = int_to_ptr.hbm [resolvable:$true] %s56
      %s58 = sshll.u32 [#allocation7], 4
      %s59 = int_to_ptr.vmem [resolvable:$true] %s58
      %64 = dma.hbm_to_vmem [thread:$0]  %s57, 2048, %s59, [#allocation6], 256, 256, 16
    $region33: #{seq2seqvec_cnnrnn_forward.1} parent=1 // pred_fallthru
      _
    // Predicated region
    $region34: #{seq2seqvec_cnnrnn_forward.1} parent=1 // pred_check
      _
    $region35: #{seq2seqvec_cnnrnn_forward.1} parent=1 // pred_check_branch
      %66 = sbr.rel (0) target = $region37
    $region36: #{seq2seqvec_cnnrnn_forward.1} parent=1 // pred_region
      _
    $region37: #{seq2seqvec_cnnrnn_forward.1} parent=1 // pred_fallthru
      _
    // Predicated region
    $region38: #{seq2seqvec_cnnrnn_forward.1} parent=1 // pred_check
      _
    $region39: #{seq2seqvec_cnnrnn_forward.1} parent=1 // pred_check_branch
      %68 = sbr.rel (0) target = $region41
    $region40: #{seq2seqvec_cnnrnn_forward.1} parent=1 // pred_region
      %70 = dma.done [#allocation4], 2048
    $region41: #{seq2seqvec_cnnrnn_forward.1} parent=1 // pred_fallthru
      _
    // Predicated region
    $region42: #{seq2seqvec_cnnrnn_forward.1} parent=1 // pred_check
      _
    $region43: #{seq2seqvec_cnnrnn_forward.1} parent=1 // pred_check_branch
      %72 = sbr.rel (0) target = $region45
    $region44: #{seq2seqvec_cnnrnn_forward.1} parent=1 // pred_region
      %74 = dma.done [#allocation6], 2048
    $region45: #{seq2seqvec_cnnrnn_forward.1} parent=1 // pred_fallthru
      _
    // Predicated region
    $region46: #{seq2seqvec_cnnrnn_forward.1} parent=1 // pred_check
      _
    $region47: #{seq2seqvec_cnnrnn_forward.1} parent=1 // pred_check_branch
      %76 = sbr.rel (0) target = $region49
    $region48: #{seq2seqvec_cnnrnn_forward.1} parent=1 // pred_region
      %78 = dma.done [#allocation6], 2048
    $region49: #{seq2seqvec_cnnrnn_forward.1} parent=1 // pred_fallthru
      _
    %v79 = vld [vmem:[%s0] sm:$0xff]
    %v80 = vld [vmem:[%s0 + $0x8] sm:$0xff]
    %v81 = vld [vmem:[%s1] sm:$0xff]
    %v82 = vld [vmem:[%s1 + $0x8] sm:$0xff]
    %v83 = vld [vmem:[%s1 + $0x10] sm:$0xff]
    %v84 = vld [vmem:[%s1 + $0x18] sm:$0xff]
    %v85 = vld [vmem:[%s1 + $0x20] sm:$0xff]
    %v86 = vld [vmem:[%s1 + $0x28] sm:$0xff]
    %v87 = vld [vmem:[%s2] sm:$0x1]
    %v89 = vperm.slane %v87, 0
    %vm91 = vcmask 392192
    %v93 = vsel %vm91, %v79, 0
    %v96 = vsel %vm91, %v80, 0
    %98 = vmatpush.msra.mxu0 0.0
    %99 = vmatpush.msra.mxu0 0.0
    %100 = vmatpush.msra.mxu0 0.0
    %101 = vmatpush.msra.mxu0 0.0
    %102 = vmatpush.msra.mxu0 0.0
    %103 = vmatpush.msra.mxu0 0.0
    %104 = vmatpush.msra.mxu0 0.0
    %105 = vmatpush.msra.mxu0 0.0
    %106 = vmatpush.msra.mxu0 0.0
    %107 = vmatpush.msra.mxu0 0.0
    %108 = vmatpush.msra.mxu0 %v86
    %109 = vmatpush.msra.mxu0 %v85
    %110 = vmatpush.msra.mxu0 %v84
    %111 = vmatpush.msra.mxu0 %v83
    %112 = vmatpush.msra.mxu0 %v82
    %113 = vmatpush.msra.mxu0 %v81
    %114 = vmatmul.f32.gmra.mxu0 %v93
    %v115 = vpop.f32.mrf.mxu0
    %v116 = vadd.f32 %v89, %v115
    %117 = vmatmul.f32.gmra.mxu0 %v96
    %v118 = vpop.f32.mrf.mxu0
    %v119 = vadd.f32 %v89, %v118
    %120 = vdwg.mxu0
    %v121 = vtanh.pop %v116
    %v122 = vtanh.pop %v119
    %v123 = vlaneseq
    %v124 = vand.u32 %v123, 127
    %v125 = vadd.s32 %v124, 128
    %vm126 = vcmp.ge.s32.totalorder %v124, 0
    %vm127 = vcmp.ge.s32.totalorder %v125, 0
    %vm128 = vcmp.lt.s32.totalorder %v124, 32
    %vm129 = vcmp.lt.s32.totalorder %v125, 32
    %vm130 = vmand %vm126, %vm128
    %vm131 = vmand %vm127, %vm129
    %vm132 = vcmp.ge.s32.totalorder %v124, 64
    %vm133 = vcmp.ge.s32.totalorder %v125, 64
    %vm134 = vcmp.lt.s32.totalorder %v124, 96
    %vm135 = vcmp.lt.s32.totalorder %v125, 96
    %vm136 = vmand %vm132, %vm134
    %vm137 = vmand %vm133, %vm135
    %vm138 = vmor %vm130, %vm136
    %vm139 = vmor %vm131, %vm137
    %vm140 = vcmp.ge.s32.totalorder %v124, 128
    %vm141 = vcmp.ge.s32.totalorder %v125, 128
    %vm142 = vcmp.lt.s32.totalorder %v124, 160
    %vm143 = vcmp.lt.s32.totalorder %v125, 160
    %vm144 = vmand %vm140, %vm142
    %vm145 = vmand %vm141, %vm143
    %vm146 = vmor %vm138, %vm144
    %vm147 = vmor %vm139, %vm145
    %vm148 = vcmp.ge.s32.totalorder %v124, 192
    %vm149 = vcmp.ge.s32.totalorder %v125, 192
    %vm150 = vcmp.lt.s32.totalorder %v124, 224
    %vm151 = vcmp.lt.s32.totalorder %v125, 224
    %vm152 = vmand %vm148, %vm150
    %vm153 = vmand %vm149, %vm151
    %vm154 = vmor %vm146, %vm152
    %vm155 = vmor %vm147, %vm153
    %vm156 = vcmp.lt.s32.totalorder %v124, 192
    %vm157 = vcmp.lt.s32.totalorder %v125, 192
    %vm158 = vmand %vm140, %vm156
    %vm159 = vmand %vm141, %vm157
    %v160 = vsel %vm158, 2.0, 1.0
    %v161 = vsel %vm159, 2.0, 1.0
    %v162 = vsel %vm158, -1.0, 0.0
    %v163 = vsel %vm159, -1.0, 0.0
    %v164 = vld [vmem:[%s3] sm:$0xff]
    %v165 = vld [vmem:[%s3 + $0x8] sm:$0xff]
    %v166 = vld [vmem:[%s3 + $0x10] sm:$0xff]
    %v167 = vld [vmem:[%s3 + $0x18] sm:$0xff]
    %v168 = vld [vmem:[%s3 + $0x20] sm:$0xff]
    %v169 = vld [vmem:[%s3 + $0x28] sm:$0xff]
    %v170 = vld [vmem:[%s3 + $0x30] sm:$0xff]
    %v171 = vld [vmem:[%s3 + $0x38] sm:$0xff]
    %v172 = vld [vmem:[#allocation3] sm:$0xff]
    %v173 = vld [vmem:[#allocation3 + $0x8] sm:$0xff]
    %v174 = vld [vmem:[#allocation3 + $0x10] sm:$0xff]
    %v175 = vld [vmem:[#allocation3 + $0x18] sm:$0xff]
    %v176 = vld [vmem:[#allocation3 + $0x20] sm:$0xff]
    %v177 = vld [vmem:[#allocation3 + $0x28] sm:$0xff]
    %v178 = vld [vmem:[#allocation3 + $0x30] sm:$0xff]
    %v179 = vld [vmem:[#allocation3 + $0x38] sm:$0xff]
    %v180 = vld [vmem:[#allocation3 + $0x40] sm:$0xff]
    %v181 = vld [vmem:[#allocation3 + $0x48] sm:$0xff]
    %v182 = vld [vmem:[#allocation3 + $0x50] sm:$0xff]
    %v183 = vld [vmem:[#allocation3 + $0x58] sm:$0xff]
    %v184 = vld [vmem:[#allocation3 + $0x60] sm:$0xff]
    %v185 = vld [vmem:[#allocation3 + $0x68] sm:$0xff]
    %v186 = vld [vmem:[#allocation3 + $0x70] sm:$0xff]
    %v187 = vld [vmem:[#allocation3 + $0x78] sm:$0xff]
    %v188 = vld [vmem:[%s5] sm:$0x3]
    %v190 = vperm.slane %v188, 0
    %v191 = vperm.slane %v188, 1
    %vm194 = vcmask 261120
    %v196 = vsel %vm194, %v121, 0
    %v199 = vsel %vm194, %v122, 0
    %201 = vmatpush.msra.mxu0 0.0
    %202 = vmatpush.msra.mxu0 0.0
    %203 = vmatpush.msra.mxu0 0.0
    %204 = vmatpush.msra.mxu0 0.0
    %205 = vmatpush.msra.mxu0 0.0
    %206 = vmatpush.msra.mxu0 0.0
    %207 = vmatpush.msra.mxu0 0.0
    %208 = vmatpush.msra.mxu0 0.0
    %209 = vmatpush.msra.mxu0 0.0
    %210 = vmatpush.msra.mxu0 0.0
    %211 = vmatpush.msra.mxu0 0.0
    %212 = vmatpush.msra.mxu0 0.0
    %213 = vmatpush.msra.mxu0 %v170
    %214 = vmatpush.msra.mxu0 %v168
    %215 = vmatpush.msra.mxu0 %v166
    %216 = vmatpush.msra.mxu0 %v164
    %217 = vmatmul.f32.gmra.mxu0 %v196
    %v218 = vpop.f32.mrf.mxu0
    %v219 = vadd.f32 %v190, %v218
    %220 = vmatmul.f32.gmra.mxu0 %v199
    %v221 = vpop.f32.mrf.mxu0
    %v222 = vadd.f32 %v190, %v221
    %223 = vdwg.mxu0
    %224 = vmatpush.msra.mxu0 0.0
    %225 = vmatpush.msra.mxu0 0.0
    %226 = vmatpush.msra.mxu0 0.0
    %227 = vmatpush.msra.mxu0 0.0
    %228 = vmatpush.msra.mxu0 0.0
    %229 = vmatpush.msra.mxu0 0.0
    %230 = vmatpush.msra.mxu0 0.0
    %231 = vmatpush.msra.mxu0 0.0
    %232 = vmatpush.msra.mxu0 0.0
    %233 = vmatpush.msra.mxu0 0.0
    %234 = vmatpush.msra.mxu0 0.0
    %235 = vmatpush.msra.mxu0 0.0
    %236 = vmatpush.msra.mxu0 %v171
    %237 = vmatpush.msra.mxu0 %v169
    %238 = vmatpush.msra.mxu0 %v167
    %239 = vmatpush.msra.mxu0 %v165
    %240 = vmatmul.f32.gmra.mxu0 %v196
    %v241 = vpop.f32.mrf.mxu0
    %v242 = vadd.f32 %v191, %v241
    %243 = vmatmul.f32.gmra.mxu0 %v199
    %v244 = vpop.f32.mrf.mxu0
    %v245 = vadd.f32 %v191, %v244
    %246 = vdwg.mxu0
    %v249 = vrot.slane %v222, 6
    %v250 = vrot.slane %v245, 6
    %v253 = vsel %vm154, %v219, %v249
    %v254 = vsel %vm155, %v242, %v250
    %vm255 = vcmask 523264
    %v257 = vsel %vm255, 0.0, 0
    %259 = vmatpush.msra.mxu0 0.0
    %260 = vmatpush.msra.mxu0 0.0
    %261 = vmatpush.msra.mxu0 0.0
    %262 = vmatpush.msra.mxu0 0.0
    %263 = vmatpush.msra.mxu0 0.0
    %264 = vmatpush.msra.mxu0 0.0
    %265 = vmatpush.msra.mxu0 0.0
    %266 = vmatpush.msra.mxu0 0.0
    %267 = vmatpush.msra.mxu0 %v186
    %268 = vmatpush.msra.mxu0 %v184
    %269 = vmatpush.msra.mxu0 %v182
    %270 = vmatpush.msra.mxu0 %v180
    %271 = vmatpush.msra.mxu0 %v178
    %272 = vmatpush.msra.mxu0 %v176
    %273 = vmatpush.msra.mxu0 %v174
    %274 = vmatpush.msra.mxu0 %v172
    %275 = vmatmul.f32.gmra.mxu0 %v257
    %v276 = vpop.f32.mrf.mxu0
    %v277 = vadd.f32 0.0, %v276
    %278 = vdwg.mxu0
    %279 = vmatpush.msra.mxu0 0.0
    %280 = vmatpush.msra.mxu0 0.0
    %281 = vmatpush.msra.mxu0 0.0
    %282 = vmatpush.msra.mxu0 0.0
    %283 = vmatpush.msra.mxu0 0.0
    %284 = vmatpush.msra.mxu0 0.0
    %285 = vmatpush.msra.mxu0 0.0
    %286 = vmatpush.msra.mxu0 0.0
    %287 = vmatpush.msra.mxu0 %v187
    %288 = vmatpush.msra.mxu0 %v185
    %289 = vmatpush.msra.mxu0 %v183
    %290 = vmatpush.msra.mxu0 %v181
    %291 = vmatpush.msra.mxu0 %v179
    %292 = vmatpush.msra.mxu0 %v177
    %293 = vmatpush.msra.mxu0 %v175
    %294 = vmatpush.msra.mxu0 %v173
    %295 = vmatmul.f32.gmra.mxu0 %v257
    %v296 = vpop.f32.mrf.mxu0
    %v297 = vadd.f32 0.0, %v296
    %298 = vdwg.mxu0
    %v299 = vadd.f32 %v253, %v277
    %v300 = vadd.f32 %v254, %v297
    %v301 = vxor.u32 %v299, 2147483648
    %v302 = vxor.u32 %v300, 2147483648
    %v303 = vmul.f32 %v301, 1.442695
    %v304 = vpow.pop %v303
    %v305 = vmul.f32 %v302, 1.442695
    %v306 = vpow.pop %v305
    %v307 = vadd.f32 %v304, 1.0
    %v308 = vadd.f32 %v306, 1.0
    %v309 = vrcp.pop %v307
    %v310 = vmul.f32 %v307, %v309
    %v311 = vsub.f32 1.0, %v310
    %v312 = vmul.f32 %v309, %v311
    %v313 = vadd.f32 %v309, %v312
    %vm314 = vweird.f32 %v307
    %vm315 = vweird.f32 %v309
    %vm316 = vmor %vm314, %vm315
    %v317 = vsel %vm316, %v309, %v313
    %v318 = vand.u32 2147483647, %v307
    %vm319 = vcmp.eq.f32.partialorder %v318, 8.507059e+37
    %v320 = vand.u32 %v307, 2147483648
    %v321 = vor.u32 1.1754944e-38, %v320
    %v322 = vsel %vm319, %v321, %v317
    %v323 = vmul.f32 1.0, %v322
    %v324 = vrcp.pop %v308
    %v325 = vmul.f32 %v308, %v324
    %v326 = vsub.f32 1.0, %v325
    %v327 = vmul.f32 %v324, %v326
    %v328 = vadd.f32 %v324, %v327
    %vm329 = vweird.f32 %v308
    %vm330 = vweird.f32 %v324
    %vm331 = vmor %vm329, %vm330
    %v332 = vsel %vm331, %v324, %v328
    %v333 = vand.u32 2147483647, %v308
    %vm334 = vcmp.eq.f32.partialorder %v333, 8.507059e+37
    %v335 = vand.u32 %v308, 2147483648
    %v336 = vor.u32 1.1754944e-38, %v335
    %v337 = vsel %vm334, %v336, %v332
    %v338 = vmul.f32 1.0, %v337
    %v339 = vmul.f32 %v323, %v160
    %v340 = vmul.f32 %v338, %v161
    %v341 = vadd.f32 %v339, %v162
    %v342 = vadd.f32 %v340, %v163
    %v343 = vmul.f32 %v341, 0.0
    %v344 = vmul.f32 %v341, %v342
    %346 = vrot.lane.b32.xlu0 %v344, 64
    %v347 = vpop.permute.xlu0 %346
    %v349 = vadd.f32 %v343, %v347
    %v350 = vtanh.pop %v349
    %v351 = vmul.f32 %v342, %v350
    %353 = vrot.lane.b32.xlu0 %v351, 64
    %v354 = vpop.permute.xlu0 %353
    %vm356 = vcmask 254976
    %357 = vst.msk [vmem:[#allocation2] sm:$0x3] %vm356, %v354
    %vm358 = vcmask 517376
    %359 = vst.msk [vmem:[#allocation2 + $0xe] sm:$0x3] %vm358, %v354
    %v360 = vrot.slane %v222, 2
    %v361 = vrot.slane %v245, 2
    %v364 = vsel %vm154, %v219, %v360
    %v365 = vsel %vm155, %v242, %v361
    %v366 = vsel %vm255, %v354, 0
    %368 = vmatpush.msra.mxu0 0.0
    %369 = vmatpush.msra.mxu0 0.0
    %370 = vmatpush.msra.mxu0 0.0
    %371 = vmatpush.msra.mxu0 0.0
    %372 = vmatpush.msra.mxu0 0.0
    %373 = vmatpush.msra.mxu0 0.0
    %374 = vmatpush.msra.mxu0 0.0
    %375 = vmatpush.msra.mxu0 0.0
    %376 = vmatpush.msra.mxu0 %v186
    %377 = vmatpush.msra.mxu0 %v184
    %378 = vmatpush.msra.mxu0 %v182
    %379 = vmatpush.msra.mxu0 %v180
    %380 = vmatpush.msra.mxu0 %v178
    %381 = vmatpush.msra.mxu0 %v176
    %382 = vmatpush.msra.mxu0 %v174
    %383 = vmatpush.msra.mxu0 %v172
    %384 = vmatmul.f32.gmra.mxu0 %v366
    %v385 = vpop.f32.mrf.mxu0
    %v386 = vadd.f32 0.0, %v385
    %387 = vdwg.mxu0
    %388 = vmatpush.msra.mxu0 0.0
    %389 = vmatpush.msra.mxu0 0.0
    %390 = vmatpush.msra.mxu0 0.0
    %391 = vmatpush.msra.mxu0 0.0
    %392 = vmatpush.msra.mxu0 0.0
    %393 = vmatpush.msra.mxu0 0.0
    %394 = vmatpush.msra.mxu0 0.0
    %395 = vmatpush.msra.mxu0 0.0
    %396 = vmatpush.msra.mxu0 %v187
    %397 = vmatpush.msra.mxu0 %v185
    %398 = vmatpush.msra.mxu0 %v183
    %399 = vmatpush.msra.mxu0 %v181
    %400 = vmatpush.msra.mxu0 %v179
    %401 = vmatpush.msra.mxu0 %v177
    %402 = vmatpush.msra.mxu0 %v175
    %403 = vmatpush.msra.mxu0 %v173
    %404 = vmatmul.f32.gmra.mxu0 %v366
    %v405 = vpop.f32.mrf.mxu0
    %v406 = vadd.f32 0.0, %v405
    %407 = vdwg.mxu0
    %v410 = vrot.slane %v386, 6
    %v411 = vrot.slane %v406, 6
    %v414 = vadd.f32 %v364, %v410
    %v415 = vadd.f32 %v365, %v411
    %v416 = vxor.u32 %v414, 2147483648
    %v417 = vxor.u32 %v415, 2147483648
    %v418 = vmul.f32 %v416, 1.442695
    %v419 = vpow.pop %v418
    %v420 = vmul.f32 %v417, 1.442695
    %v421 = vpow.pop %v420
    %v422 = vadd.f32 %v419, 1.0
    %v423 = vadd.f32 %v421, 1.0
    %v424 = vrcp.pop %v422
    %v425 = vmul.f32 %v422, %v424
    %v426 = vsub.f32 1.0, %v425
    %v427 = vmul.f32 %v424, %v426
    %v428 = vadd.f32 %v424, %v427
    %vm429 = vweird.f32 %v422
    %vm430 = vweird.f32 %v424
    %vm431 = vmor %vm429, %vm430
    %v432 = vsel %vm431, %v424, %v428
    %v433 = vand.u32 2147483647, %v422
    %vm434 = vcmp.eq.f32.partialorder %v433, 8.507059e+37
    %v435 = vand.u32 %v422, 2147483648
    %v436 = vor.u32 1.1754944e-38, %v435
    %v437 = vsel %vm434, %v436, %v432
    %v438 = vmul.f32 1.0, %v437
    %v439 = vrcp.pop %v423
    %v440 = vmul.f32 %v423, %v439
    %v441 = vsub.f32 1.0, %v440
    %v442 = vmul.f32 %v439, %v441
    %v443 = vadd.f32 %v439, %v442
    %vm444 = vweird.f32 %v423
    %vm445 = vweird.f32 %v439
    %vm446 = vmor %vm444, %vm445
    %v447 = vsel %vm446, %v439, %v443
    %v448 = vand.u32 2147483647, %v423
    %vm449 = vcmp.eq.f32.partialorder %v448, 8.507059e+37
    %v450 = vand.u32 %v423, 2147483648
    %v451 = vor.u32 1.1754944e-38, %v450
    %v452 = vsel %vm449, %v451, %v447
    %v453 = vmul.f32 1.0, %v452
    %v454 = vmul.f32 %v438, %v160
    %v455 = vmul.f32 %v453, %v161
    %v456 = vadd.f32 %v454, %v162
    %v457 = vadd.f32 %v455, %v163
    %v459 = vrot.slane %v349, 6
    %v461 = vmul.f32 %v456, %v459
    %v462 = vmul.f32 %v456, %v457
    %464 = vrot.lane.b32.xlu0 %v462, 64
    %v465 = vpop.permute.xlu0 %464
    %v467 = vadd.f32 %v461, %v465
    %v468 = vtanh.pop %v467
    %v469 = vmul.f32 %v457, %v468
    %471 = vrot.lane.b32.xlu0 %v469, 64
    %v472 = vpop.permute.xlu0 %471
    %vm474 = vcmask 257026
    %475 = vst.msk [vmem:[#allocation2] sm:$0xc] %vm474, %v472
    %vm476 = vcmask 519426
    %477 = vst.msk [vmem:[#allocation2 + $0xa] sm:$0xc] %vm476, %v472
    %v478 = vrot.slane %v469, 2
    %479 = vrot.lane.b32.xlu0 %v478, 64
    %v480 = vpop.permute.xlu0 %479
    %v481 = vsel %vm255, %v480, 0
    %483 = vmatpush.msra.mxu0 0.0
    %484 = vmatpush.msra.mxu0 0.0
    %485 = vmatpush.msra.mxu0 0.0
    %486 = vmatpush.msra.mxu0 0.0
    %487 = vmatpush.msra.mxu0 0.0
    %488 = vmatpush.msra.mxu0 0.0
    %489 = vmatpush.msra.mxu0 0.0
    %490 = vmatpush.msra.mxu0 0.0
    %491 = vmatpush.msra.mxu0 %v186
    %492 = vmatpush.msra.mxu0 %v184
    %493 = vmatpush.msra.mxu0 %v182
    %494 = vmatpush.msra.mxu0 %v180
    %495 = vmatpush.msra.mxu0 %v178
    %496 = vmatpush.msra.mxu0 %v176
    %497 = vmatpush.msra.mxu0 %v174
    %498 = vmatpush.msra.mxu0 %v172
    %499 = vmatmul.f32.gmra.mxu0 %v481
    %v500 = vpop.f32.mrf.mxu0
    %v501 = vadd.f32 0.0, %v500
    %502 = vdwg.mxu0
    %503 = vmatpush.msra.mxu0 0.0
    %504 = vmatpush.msra.mxu0 0.0
    %505 = vmatpush.msra.mxu0 0.0
    %506 = vmatpush.msra.mxu0 0.0
    %507 = vmatpush.msra.mxu0 0.0
    %508 = vmatpush.msra.mxu0 0.0
    %509 = vmatpush.msra.mxu0 0.0
    %510 = vmatpush.msra.mxu0 0.0
    %511 = vmatpush.msra.mxu0 %v187
    %512 = vmatpush.msra.mxu0 %v185
    %513 = vmatpush.msra.mxu0 %v183
    %514 = vmatpush.msra.mxu0 %v181
    %515 = vmatpush.msra.mxu0 %v179
    %516 = vmatpush.msra.mxu0 %v177
    %517 = vmatpush.msra.mxu0 %v175
    %518 = vmatpush.msra.mxu0 %v173
    %519 = vmatmul.f32.gmra.mxu0 %v481
    %v520 = vpop.f32.mrf.mxu0
    %v521 = vadd.f32 0.0, %v520
    %522 = vdwg.mxu0
    %v525 = vrot.slane %v501, 4
    %v526 = vrot.slane %v521, 4
    %v529 = vadd.f32 %v253, %v525
    %v530 = vadd.f32 %v254, %v526
    %v531 = vxor.u32 %v529, 2147483648
    %v532 = vxor.u32 %v530, 2147483648
    %v533 = vmul.f32 %v531, 1.442695
    %v534 = vpow.pop %v533
    %v535 = vmul.f32 %v532, 1.442695
    %v536 = vpow.pop %v535
    %v537 = vadd.f32 %v534, 1.0
    %v538 = vadd.f32 %v536, 1.0
    %v539 = vrcp.pop %v537
    %v540 = vmul.f32 %v537, %v539
    %v541 = vsub.f32 1.0, %v540
    %v542 = vmul.f32 %v539, %v541
    %v543 = vadd.f32 %v539, %v542
    %vm544 = vweird.f32 %v537
    %vm545 = vweird.f32 %v539
    %vm546 = vmor %vm544, %vm545
    %v547 = vsel %vm546, %v539, %v543
    %v548 = vand.u32 2147483647, %v537
    %vm549 = vcmp.eq.f32.partialorder %v548, 8.507059e+37
    %v550 = vand.u32 %v537, 2147483648
    %v551 = vor.u32 1.1754944e-38, %v550
    %v552 = vsel %vm549, %v551, %v547
    %v553 = vmul.f32 1.0, %v552
    %v554 = vrcp.pop %v538
    %v555 = vmul.f32 %v538, %v554
    %v556 = vsub.f32 1.0, %v555
    %v557 = vmul.f32 %v554, %v556
    %v558 = vadd.f32 %v554, %v557
    %vm559 = vweird.f32 %v538
    %vm560 = vweird.f32 %v554
    %vm561 = vmor %vm559, %vm560
    %v562 = vsel %vm561, %v554, %v558
    %v563 = vand.u32 2147483647, %v538
    %vm564 = vcmp.eq.f32.partialorder %v563, 8.507059e+37
    %v565 = vand.u32 %v538, 2147483648
    %v566 = vor.u32 1.1754944e-38, %v565
    %v567 = vsel %vm564, %v566, %v562
    %v568 = vmul.f32 1.0, %v567
    %v569 = vmul.f32 %v553, %v160
    %v570 = vmul.f32 %v568, %v161
    %v571 = vadd.f32 %v569, %v162
    %v572 = vadd.f32 %v570, %v163
    %v574 = vrot.slane %v467, 6
    %v576 = vmul.f32 %v571, %v574
    %v577 = vmul.f32 %v571, %v572
    %579 = vrot.lane.b32.xlu0 %v577, 64
    %v580 = vpop.permute.xlu0 %579
    %v582 = vadd.f32 %v576, %v580
    %v583 = vtanh.pop %v582
    %v584 = vmul.f32 %v572, %v583
    %586 = vrot.lane.b32.xlu0 %v584, 64
    %v587 = vpop.permute.xlu0 %586
    %vm589 = vcmask 259076
    %590 = vst.msk [vmem:[#allocation2] sm:$0x30] %vm589, %v587
    %vm591 = vcmask 521476
    %592 = vst.msk [vmem:[#allocation2 + $0x6] sm:$0x30] %vm591, %v587
    %v593 = vrot.slane %v584, 4
    %594 = vrot.lane.b32.xlu0 %v593, 64
    %v595 = vpop.permute.xlu0 %594
    %v596 = vsel %vm255, %v595, 0
    %598 = vmatpush.msra.mxu0 0.0
    %599 = vmatpush.msra.mxu0 0.0
    %600 = vmatpush.msra.mxu0 0.0
    %601 = vmatpush.msra.mxu0 0.0
    %602 = vmatpush.msra.mxu0 0.0
    %603 = vmatpush.msra.mxu0 0.0
    %604 = vmatpush.msra.mxu0 0.0
    %605 = vmatpush.msra.mxu0 0.0
    %606 = vmatpush.msra.mxu0 %v186
    %607 = vmatpush.msra.mxu0 %v184
    %608 = vmatpush.msra.mxu0 %v182
    %609 = vmatpush.msra.mxu0 %v180
    %610 = vmatpush.msra.mxu0 %v178
    %611 = vmatpush.msra.mxu0 %v176
    %612 = vmatpush.msra.mxu0 %v174
    %613 = vmatpush.msra.mxu0 %v172
    %614 = vmatmul.f32.gmra.mxu0 %v596
    %v615 = vpop.f32.mrf.mxu0
    %v616 = vadd.f32 0.0, %v615
    %617 = vdwg.mxu0
    %618 = vmatpush.msra.mxu0 0.0
    %619 = vmatpush.msra.mxu0 0.0
    %620 = vmatpush.msra.mxu0 0.0
    %621 = vmatpush.msra.mxu0 0.0
    %622 = vmatpush.msra.mxu0 0.0
    %623 = vmatpush.msra.mxu0 0.0
    %624 = vmatpush.msra.mxu0 0.0
    %625 = vmatpush.msra.mxu0 0.0
    %626 = vmatpush.msra.mxu0 %v187
    %627 = vmatpush.msra.mxu0 %v185
    %628 = vmatpush.msra.mxu0 %v183
    %629 = vmatpush.msra.mxu0 %v181
    %630 = vmatpush.msra.mxu0 %v179
    %631 = vmatpush.msra.mxu0 %v177
    %632 = vmatpush.msra.mxu0 %v175
    %633 = vmatpush.msra.mxu0 %v173
    %634 = vmatmul.f32.gmra.mxu0 %v596
    %v635 = vpop.f32.mrf.mxu0
    %v636 = vadd.f32 0.0, %v635
    %637 = vdwg.mxu0
    %v640 = vrot.slane %v616, 2
    %v641 = vrot.slane %v636, 2
    %v644 = vadd.f32 %v364, %v640
    %v645 = vadd.f32 %v365, %v641
    %v646 = vxor.u32 %v644, 2147483648
    %v647 = vxor.u32 %v645, 2147483648
    %v648 = vmul.f32 %v646, 1.442695
    %v649 = vpow.pop %v648
    %v650 = vmul.f32 %v647, 1.442695
    %v651 = vpow.pop %v650
    %v652 = vadd.f32 %v649, 1.0
    %v653 = vadd.f32 %v651, 1.0
    %v654 = vrcp.pop %v652
    %v655 = vmul.f32 %v652, %v654
    %v656 = vsub.f32 1.0, %v655
    %v657 = vmul.f32 %v654, %v656
    %v658 = vadd.f32 %v654, %v657
    %vm659 = vweird.f32 %v652
    %vm660 = vweird.f32 %v654
    %vm661 = vmor %vm659, %vm660
    %v662 = vsel %vm661, %v654, %v658
    %v663 = vand.u32 2147483647, %v652
    %vm664 = vcmp.eq.f32.partialorder %v663, 8.507059e+37
    %v665 = vand.u32 %v652, 2147483648
    %v666 = vor.u32 1.1754944e-38, %v665
    %v667 = vsel %vm664, %v666, %v662
    %v668 = vmul.f32 1.0, %v667
    %v669 = vrcp.pop %v653
    %v670 = vmul.f32 %v653, %v669
    %v671 = vsub.f32 1.0, %v670
    %v672 = vmul.f32 %v669, %v671
    %v673 = vadd.f32 %v669, %v672
    %vm674 = vweird.f32 %v653
    %vm675 = vweird.f32 %v669
    %vm676 = vmor %vm674, %vm675
    %v677 = vsel %vm676, %v669, %v673
    %v678 = vand.u32 2147483647, %v653
    %vm679 = vcmp.eq.f32.partialorder %v678, 8.507059e+37
    %v680 = vand.u32 %v653, 2147483648
    %v681 = vor.u32 1.1754944e-38, %v680
    %v682 = vsel %vm679, %v681, %v677
    %v683 = vmul.f32 1.0, %v682
    %v684 = vmul.f32 %v668, %v160
    %v685 = vmul.f32 %v683, %v161
    %v686 = vadd.f32 %v684, %v162
    %v687 = vadd.f32 %v685, %v163
    %v689 = vrot.slane %v582, 6
    %v691 = vmul.f32 %v686, %v689
    %v692 = vmul.f32 %v686, %v687
    %694 = vrot.lane.b32.xlu0 %v692, 64
    %v695 = vpop.permute.xlu0 %694
    %v697 = vadd.f32 %v691, %v695
    %v698 = vtanh.pop %v697
    %v699 = vmul.f32 %v687, %v698
    %701 = vrot.lane.b32.xlu0 %v699, 64
    %v702 = vpop.permute.xlu0 %701
    %vm704 = vcmask 261126
    %705 = vst.msk [vmem:[#allocation2] sm:$0xc0] %vm704, %v702
    %vm706 = vcmask 523526
    %707 = vst.msk [vmem:[#allocation2 + $0x2] sm:$0xc0] %vm706, %v702
    %v710 = vrot.slane %v219, 6
    %v711 = vrot.slane %v242, 6
    %v714 = vsel %vm154, %v222, %v710
    %v715 = vsel %vm155, %v245, %v711
    %v716 = vrot.slane %v699, 6
    %717 = vrot.lane.b32.xlu0 %v716, 64
    %v718 = vpop.permute.xlu0 %717
    %v719 = vsel %vm255, %v718, 0
    %721 = vmatpush.msra.mxu0 0.0
    %722 = vmatpush.msra.mxu0 0.0
    %723 = vmatpush.msra.mxu0 0.0
    %724 = vmatpush.msra.mxu0 0.0
    %725 = vmatpush.msra.mxu0 0.0
    %726 = vmatpush.msra.mxu0 0.0
    %727 = vmatpush.msra.mxu0 0.0
    %728 = vmatpush.msra.mxu0 0.0
    %729 = vmatpush.msra.mxu0 %v186
    %730 = vmatpush.msra.mxu0 %v184
    %731 = vmatpush.msra.mxu0 %v182
    %732 = vmatpush.msra.mxu0 %v180
    %733 = vmatpush.msra.mxu0 %v178
    %734 = vmatpush.msra.mxu0 %v176
    %735 = vmatpush.msra.mxu0 %v174
    %736 = vmatpush.msra.mxu0 %v172
    %737 = vmatmul.f32.gmra.mxu0 %v719
    %v738 = vpop.f32.mrf.mxu0
    %v739 = vadd.f32 0.0, %v738
    %740 = vdwg.mxu0
    %741 = vmatpush.msra.mxu0 0.0
    %742 = vmatpush.msra.mxu0 0.0
    %743 = vmatpush.msra.mxu0 0.0
    %744 = vmatpush.msra.mxu0 0.0
    %745 = vmatpush.msra.mxu0 0.0
    %746 = vmatpush.msra.mxu0 0.0
    %747 = vmatpush.msra.mxu0 0.0
    %748 = vmatpush.msra.mxu0 0.0
    %749 = vmatpush.msra.mxu0 %v187
    %750 = vmatpush.msra.mxu0 %v185
    %751 = vmatpush.msra.mxu0 %v183
    %752 = vmatpush.msra.mxu0 %v181
    %753 = vmatpush.msra.mxu0 %v179
    %754 = vmatpush.msra.mxu0 %v177
    %755 = vmatpush.msra.mxu0 %v175
    %756 = vmatpush.msra.mxu0 %v173
    %757 = vmatmul.f32.gmra.mxu0 %v719
    %v758 = vpop.f32.mrf.mxu0
    %v759 = vadd.f32 0.0, %v758
    %760 = vdwg.mxu0
    %v761 = vadd.f32 %v714, %v739
    %v762 = vadd.f32 %v715, %v759
    %v763 = vxor.u32 %v761, 2147483648
    %v764 = vxor.u32 %v762, 2147483648
    %v765 = vmul.f32 %v763, 1.442695
    %v766 = vpow.pop %v765
    %v767 = vmul.f32 %v764, 1.442695
    %v768 = vpow.pop %v767
    %v769 = vadd.f32 %v766, 1.0
    %v770 = vadd.f32 %v768, 1.0
    %v771 = vrcp.pop %v769
    %v772 = vmul.f32 %v769, %v771
    %v773 = vsub.f32 1.0, %v772
    %v774 = vmul.f32 %v771, %v773
    %v775 = vadd.f32 %v771, %v774
    %vm776 = vweird.f32 %v769
    %vm777 = vweird.f32 %v771
    %vm778 = vmor %vm776, %vm777
    %v779 = vsel %vm778, %v771, %v775
    %v780 = vand.u32 2147483647, %v769
    %vm781 = vcmp.eq.f32.partialorder %v780, 8.507059e+37
    %v782 = vand.u32 %v769, 2147483648
    %v783 = vor.u32 1.1754944e-38, %v782
    %v784 = vsel %vm781, %v783, %v779
    %v785 = vmul.f32 1.0, %v784
    %v786 = vrcp.pop %v770
    %v787 = vmul.f32 %v770, %v786
    %v788 = vsub.f32 1.0, %v787
    %v789 = vmul.f32 %v786, %v788
    %v790 = vadd.f32 %v786, %v789
    %vm791 = vweird.f32 %v770
    %vm792 = vweird.f32 %v786
    %vm793 = vmor %vm791, %vm792
    %v794 = vsel %vm793, %v786, %v790
    %v795 = vand.u32 2147483647, %v770
    %vm796 = vcmp.eq.f32.partialorder %v795, 8.507059e+37
    %v797 = vand.u32 %v770, 2147483648
    %v798 = vor.u32 1.1754944e-38, %v797
    %v799 = vsel %vm796, %v798, %v794
    %v800 = vmul.f32 1.0, %v799
    %v801 = vmul.f32 %v785, %v160
    %v802 = vmul.f32 %v800, %v161
    %v803 = vadd.f32 %v801, %v162
    %v804 = vadd.f32 %v802, %v163
    %v806 = vrot.slane %v697, 6
    %v808 = vmul.f32 %v803, %v806
    %v809 = vmul.f32 %v803, %v804
    %811 = vrot.lane.b32.xlu0 %v809, 64
    %v812 = vpop.permute.xlu0 %811
    %v814 = vadd.f32 %v808, %v812
    %v815 = vtanh.pop %v814
    %v816 = vmul.f32 %v804, %v815
    %818 = vrot.lane.b32.xlu0 %v816, 64
    %v819 = vpop.permute.xlu0 %818
    %821 = vst.msk [vmem:[#allocation2 + $0x8] sm:$0x3] %vm356, %v819
    %822 = vst.msk [vmem:[#allocation2 + $0x6] sm:$0x3] %vm358, %v819
    %v823 = vrot.slane %v219, 2
    %v824 = vrot.slane %v242, 2
    %v827 = vsel %vm154, %v222, %v823
    %v828 = vsel %vm155, %v245, %v824
    %v829 = vsel %vm255, %v819, 0
    %831 = vmatpush.msra.mxu0 0.0
    %832 = vmatpush.msra.mxu0 0.0
    %833 = vmatpush.msra.mxu0 0.0
    %834 = vmatpush.msra.mxu0 0.0
    %835 = vmatpush.msra.mxu0 0.0
    %836 = vmatpush.msra.mxu0 0.0
    %837 = vmatpush.msra.mxu0 0.0
    %838 = vmatpush.msra.mxu0 0.0
    %839 = vmatpush.msra.mxu0 %v186
    %840 = vmatpush.msra.mxu0 %v184
    %841 = vmatpush.msra.mxu0 %v182
    %842 = vmatpush.msra.mxu0 %v180
    %843 = vmatpush.msra.mxu0 %v178
    %844 = vmatpush.msra.mxu0 %v176
    %845 = vmatpush.msra.mxu0 %v174
    %846 = vmatpush.msra.mxu0 %v172
    %847 = vmatmul.f32.gmra.mxu0 %v829
    %v848 = vpop.f32.mrf.mxu0
    %v849 = vadd.f32 0.0, %v848
    %850 = vdwg.mxu0
    %851 = vmatpush.msra.mxu0 0.0
    %852 = vmatpush.msra.mxu0 0.0
    %853 = vmatpush.msra.mxu0 0.0
    %854 = vmatpush.msra.mxu0 0.0
    %855 = vmatpush.msra.mxu0 0.0
    %856 = vmatpush.msra.mxu0 0.0
    %857 = vmatpush.msra.mxu0 0.0
    %858 = vmatpush.msra.mxu0 0.0
    %859 = vmatpush.msra.mxu0 %v187
    %860 = vmatpush.msra.mxu0 %v185
    %861 = vmatpush.msra.mxu0 %v183
    %862 = vmatpush.msra.mxu0 %v181
    %863 = vmatpush.msra.mxu0 %v179
    %864 = vmatpush.msra.mxu0 %v177
    %865 = vmatpush.msra.mxu0 %v175
    %866 = vmatpush.msra.mxu0 %v173
    %867 = vmatmul.f32.gmra.mxu0 %v829
    %v868 = vpop.f32.mrf.mxu0
    %v869 = vadd.f32 0.0, %v868
    %870 = vdwg.mxu0
    %v873 = vrot.slane %v849, 6
    %v874 = vrot.slane %v869, 6
    %v877 = vadd.f32 %v827, %v873
    %v878 = vadd.f32 %v828, %v874
    %v879 = vxor.u32 %v877, 2147483648
    %v880 = vxor.u32 %v878, 2147483648
    %v881 = vmul.f32 %v879, 1.442695
    %v882 = vpow.pop %v881
    %v883 = vmul.f32 %v880, 1.442695
    %v884 = vpow.pop %v883
    %v885 = vadd.f32 %v882, 1.0
    %v886 = vadd.f32 %v884, 1.0
    %v887 = vrcp.pop %v885
    %v888 = vmul.f32 %v885, %v887
    %v889 = vsub.f32 1.0, %v888
    %v890 = vmul.f32 %v887, %v889
    %v891 = vadd.f32 %v887, %v890
    %vm892 = vweird.f32 %v885
    %vm893 = vweird.f32 %v887
    %vm894 = vmor %vm892, %vm893
    %v895 = vsel %vm894, %v887, %v891
    %v896 = vand.u32 2147483647, %v885
    %vm897 = vcmp.eq.f32.partialorder %v896, 8.507059e+37
    %v898 = vand.u32 %v885, 2147483648
    %v899 = vor.u32 1.1754944e-38, %v898
    %v900 = vsel %vm897, %v899, %v895
    %v901 = vmul.f32 1.0, %v900
    %v902 = vrcp.pop %v886
    %v903 = vmul.f32 %v886, %v902
    %v904 = vsub.f32 1.0, %v903
    %v905 = vmul.f32 %v902, %v904
    %v906 = vadd.f32 %v902, %v905
    %vm907 = vweird.f32 %v886
    %vm908 = vweird.f32 %v902
    %vm909 = vmor %vm907, %vm908
    %v910 = vsel %vm909, %v902, %v906
    %v911 = vand.u32 2147483647, %v886
    %vm912 = vcmp.eq.f32.partialorder %v911, 8.507059e+37
    %v913 = vand.u32 %v886, 2147483648
    %v914 = vor.u32 1.1754944e-38, %v913
    %v915 = vsel %vm912, %v914, %v910
    %v916 = vmul.f32 1.0, %v915
    %v917 = vmul.f32 %v901, %v160
    %v918 = vmul.f32 %v916, %v161
    %v919 = vadd.f32 %v917, %v162
    %v920 = vadd.f32 %v918, %v163
    %v922 = vrot.slane %v814, 6
    %v924 = vmul.f32 %v919, %v922
    %v925 = vmul.f32 %v919, %v920
    %927 = vrot.lane.b32.xlu0 %v925, 64
    %v928 = vpop.permute.xlu0 %927
    %v930 = vadd.f32 %v924, %v928
    %v931 = vtanh.pop %v930
    %v932 = vmul.f32 %v920, %v931
    %934 = vrot.lane.b32.xlu0 %v932, 64
    %v935 = vpop.permute.xlu0 %934
    %937 = vst.msk [vmem:[#allocation2 + $0x8] sm:$0xc] %vm474, %v935
    %938 = vst.msk [vmem:[#allocation2 + $0x2] sm:$0xc] %vm476, %v935
    %v939 = vrot.slane %v932, 2
    %940 = vrot.lane.b32.xlu0 %v939, 64
    %v941 = vpop.permute.xlu0 %940
    %v942 = vsel %vm255, %v941, 0
    %944 = vmatpush.msra.mxu0 0.0
    %945 = vmatpush.msra.mxu0 0.0
    %946 = vmatpush.msra.mxu0 0.0
    %947 = vmatpush.msra.mxu0 0.0
    %948 = vmatpush.msra.mxu0 0.0
    %949 = vmatpush.msra.mxu0 0.0
    %950 = vmatpush.msra.mxu0 0.0
    %951 = vmatpush.msra.mxu0 0.0
    %952 = vmatpush.msra.mxu0 %v186
    %953 = vmatpush.msra.mxu0 %v184
    %954 = vmatpush.msra.mxu0 %v182
    %955 = vmatpush.msra.mxu0 %v180
    %956 = vmatpush.msra.mxu0 %v178
    %957 = vmatpush.msra.mxu0 %v176
    %958 = vmatpush.msra.mxu0 %v174
    %959 = vmatpush.msra.mxu0 %v172
    %960 = vmatmul.f32.gmra.mxu0 %v942
    %v961 = vpop.f32.mrf.mxu0
    %v962 = vadd.f32 0.0, %v961
    %963 = vdwg.mxu0
    %964 = vmatpush.msra.mxu0 0.0
    %965 = vmatpush.msra.mxu0 0.0
    %966 = vmatpush.msra.mxu0 0.0
    %967 = vmatpush.msra.mxu0 0.0
    %968 = vmatpush.msra.mxu0 0.0
    %969 = vmatpush.msra.mxu0 0.0
    %970 = vmatpush.msra.mxu0 0.0
    %971 = vmatpush.msra.mxu0 0.0
    %972 = vmatpush.msra.mxu0 %v187
    %973 = vmatpush.msra.mxu0 %v185
    %974 = vmatpush.msra.mxu0 %v183
    %975 = vmatpush.msra.mxu0 %v181
    %976 = vmatpush.msra.mxu0 %v179
    %977 = vmatpush.msra.mxu0 %v177
    %978 = vmatpush.msra.mxu0 %v175
    %979 = vmatpush.msra.mxu0 %v173
    %980 = vmatmul.f32.gmra.mxu0 %v942
    %v981 = vpop.f32.mrf.mxu0
    %v982 = vadd.f32 0.0, %v981
    %983 = vdwg.mxu0
    %v986 = vrot.slane %v962, 4
    %v987 = vrot.slane %v982, 4
    %v990 = vadd.f32 %v714, %v986
    %v991 = vadd.f32 %v715, %v987
    %v992 = vxor.u32 %v990, 2147483648
    %v993 = vxor.u32 %v991, 2147483648
    %v994 = vmul.f32 %v992, 1.442695
    %v995 = vpow.pop %v994
    %v996 = vmul.f32 %v993, 1.442695
    %v997 = vpow.pop %v996
    %v998 = vadd.f32 %v995, 1.0
    %v999 = vadd.f32 %v997, 1.0
    %v1000 = vrcp.pop %v998
    %v1001 = vmul.f32 %v998, %v1000
    %v1002 = vsub.f32 1.0, %v1001
    %v1003 = vmul.f32 %v1000, %v1002
    %v1004 = vadd.f32 %v1000, %v1003
    %vm1005 = vweird.f32 %v998
    %vm1006 = vweird.f32 %v1000
    %vm1007 = vmor %vm1005, %vm1006
    %v1008 = vsel %vm1007, %v1000, %v1004
    %v1009 = vand.u32 2147483647, %v998
    %vm1010 = vcmp.eq.f32.partialorder %v1009, 8.507059e+37
    %v1011 = vand.u32 %v998, 2147483648
    %v1012 = vor.u32 1.1754944e-38, %v1011
    %v1013 = vsel %vm1010, %v1012, %v1008
    %v1014 = vmul.f32 1.0, %v1013
    %v1015 = vrcp.pop %v999
    %v1016 = vmul.f32 %v999, %v1015
    %v1017 = vsub.f32 1.0, %v1016
    %v1018 = vmul.f32 %v1015, %v1017
    %v1019 = vadd.f32 %v1015, %v1018
    %vm1020 = vweird.f32 %v999
    %vm1021 = vweird.f32 %v1015
    %vm1022 = vmor %vm1020, %vm1021
    %v1023 = vsel %vm1022, %v1015, %v1019
    %v1024 = vand.u32 2147483647, %v999
    %vm1025 = vcmp.eq.f32.partialorder %v1024, 8.507059e+37
    %v1026 = vand.u32 %v999, 2147483648
    %v1027 = vor.u32 1.1754944e-38, %v1026
    %v1028 = vsel %vm1025, %v1027, %v1023
    %v1029 = vmul.f32 1.0, %v1028
    %v1030 = vmul.f32 %v1014, %v160
    %v1031 = vmul.f32 %v1029, %v161
    %v1032 = vadd.f32 %v1030, %v162
    %v1033 = vadd.f32 %v1031, %v163
    %v1035 = vrot.slane %v930, 6
    %v1037 = vmul.f32 %v1032, %v1035
    %v1038 = vmul.f32 %v1032, %v1033
    %1040 = vrot.lane.b32.xlu0 %v1038, 64
    %v1041 = vpop.permute.xlu0 %1040
    %v1043 = vadd.f32 %v1037, %v1041
    %v1044 = vtanh.pop %v1043
    %v1045 = vmul.f32 %v1033, %v1044
    %1047 = vrot.lane.b32.xlu0 %v1045, 64
    %v1048 = vpop.permute.xlu0 %1047
    %1050 = vst.msk [vmem:[#allocation2 + $0x8] sm:$0x30] %vm589, %v1048
    %1051 = vst.msk [vmem:[#allocation2 - $0x2] sm:$0x30] %vm591, %v1048
    %v1052 = vrot.slane %v1045, 4
    %1053 = vrot.lane.b32.xlu0 %v1052, 64
    %v1054 = vpop.permute.xlu0 %1053
    %v1055 = vsel %vm255, %v1054, 0
    %1057 = vmatpush.msra.mxu0 0.0
    %1058 = vmatpush.msra.mxu0 0.0
    %1059 = vmatpush.msra.mxu0 0.0
    %1060 = vmatpush.msra.mxu0 0.0
    %1061 = vmatpush.msra.mxu0 0.0
    %1062 = vmatpush.msra.mxu0 0.0
    %1063 = vmatpush.msra.mxu0 0.0
    %1064 = vmatpush.msra.mxu0 0.0
    %1065 = vmatpush.msra.mxu0 %v186
    %1066 = vmatpush.msra.mxu0 %v184
    %1067 = vmatpush.msra.mxu0 %v182
    %1068 = vmatpush.msra.mxu0 %v180
    %1069 = vmatpush.msra.mxu0 %v178
    %1070 = vmatpush.msra.mxu0 %v176
    %1071 = vmatpush.msra.mxu0 %v174
    %1072 = vmatpush.msra.mxu0 %v172
    %1073 = vmatmul.f32.gmra.mxu0 %v1055
    %v1074 = vpop.f32.mrf.mxu0
    %v1075 = vadd.f32 0.0, %v1074
    %1076 = vdwg.mxu0
    %1077 = vmatpush.msra.mxu0 0.0
    %1078 = vmatpush.msra.mxu0 0.0
    %1079 = vmatpush.msra.mxu0 0.0
    %1080 = vmatpush.msra.mxu0 0.0
    %1081 = vmatpush.msra.mxu0 0.0
    %1082 = vmatpush.msra.mxu0 0.0
    %1083 = vmatpush.msra.mxu0 0.0
    %1084 = vmatpush.msra.mxu0 0.0
    %1085 = vmatpush.msra.mxu0 %v187
    %1086 = vmatpush.msra.mxu0 %v185
    %1087 = vmatpush.msra.mxu0 %v183
    %1088 = vmatpush.msra.mxu0 %v181
    %1089 = vmatpush.msra.mxu0 %v179
    %1090 = vmatpush.msra.mxu0 %v177
    %1091 = vmatpush.msra.mxu0 %v175
    %1092 = vmatpush.msra.mxu0 %v173
    %1093 = vmatmul.f32.gmra.mxu0 %v1055
    %v1094 = vpop.f32.mrf.mxu0
    %v1095 = vadd.f32 0.0, %v1094
    %1096 = vdwg.mxu0
    %v1099 = vrot.slane %v1075, 2
    %v1100 = vrot.slane %v1095, 2
    %v1103 = vadd.f32 %v827, %v1099
    %v1104 = vadd.f32 %v828, %v1100
    %v1105 = vxor.u32 %v1103, 2147483648
    %v1106 = vxor.u32 %v1104, 2147483648
    %v1107 = vmul.f32 %v1105, 1.442695
    %v1108 = vpow.pop %v1107
    %v1109 = vmul.f32 %v1106, 1.442695
    %v1110 = vpow.pop %v1109
    %v1111 = vadd.f32 %v1108, 1.0
    %v1112 = vadd.f32 %v1110, 1.0
    %v1113 = vrcp.pop %v1111
    %v1114 = vmul.f32 %v1111, %v1113
    %v1115 = vsub.f32 1.0, %v1114
    %v1116 = vmul.f32 %v1113, %v1115
    %v1117 = vadd.f32 %v1113, %v1116
    %vm1118 = vweird.f32 %v1111
    %vm1119 = vweird.f32 %v1113
    %vm1120 = vmor %vm1118, %vm1119
    %v1121 = vsel %vm1120, %v1113, %v1117
    %v1122 = vand.u32 2147483647, %v1111
    %vm1123 = vcmp.eq.f32.partialorder %v1122, 8.507059e+37
    %v1124 = vand.u32 %v1111, 2147483648
    %v1125 = vor.u32 1.1754944e-38, %v1124
    %v1126 = vsel %vm1123, %v1125, %v1121
    %v1127 = vmul.f32 1.0, %v1126
    %v1128 = vrcp.pop %v1112
    %v1129 = vmul.f32 %v1112, %v1128
    %v1130 = vsub.f32 1.0, %v1129
    %v1131 = vmul.f32 %v1128, %v1130
    %v1132 = vadd.f32 %v1128, %v1131
    %vm1133 = vweird.f32 %v1112
    %vm1134 = vweird.f32 %v1128
    %vm1135 = vmor %vm1133, %vm1134
    %v1136 = vsel %vm1135, %v1128, %v1132
    %v1137 = vand.u32 2147483647, %v1112
    %vm1138 = vcmp.eq.f32.partialorder %v1137, 8.507059e+37
    %v1139 = vand.u32 %v1112, 2147483648
    %v1140 = vor.u32 1.1754944e-38, %v1139
    %v1141 = vsel %vm1138, %v1140, %v1136
    %v1142 = vmul.f32 1.0, %v1141
    %v1143 = vmul.f32 %v1127, %v160
    %v1144 = vmul.f32 %v1142, %v161
    %v1145 = vadd.f32 %v1143, %v162
    %v1146 = vadd.f32 %v1144, %v163
    %v1148 = vrot.slane %v1043, 6
    %v1150 = vmul.f32 %v1145, %v1148
    %v1151 = vmul.f32 %v1145, %v1146
    %1153 = vrot.lane.b32.xlu0 %v1151, 64
    %v1154 = vpop.permute.xlu0 %1153
    %v1156 = vadd.f32 %v1150, %v1154
    %v1157 = vtanh.pop %v1156
    %v1158 = vmul.f32 %v1146, %v1157
    %1160 = vrot.lane.b32.xlu0 %v1158, 64
    %v1161 = vpop.permute.xlu0 %1160
    %1163 = vst.msk [vmem:[#allocation2 + $0x8] sm:$0xc0] %vm704, %v1161
    %1164 = vst.msk [vmem:[#allocation2 - $0x6] sm:$0xc0] %vm706, %v1161
    %v1165 = vld [vmem:[#allocation5] sm:$0xff]
    %v1166 = vld [vmem:[#allocation5 + $0x8] sm:$0xff]
    %v1167 = vld [vmem:[#allocation5 + $0x10] sm:$0xff]
    %v1168 = vld [vmem:[#allocation5 + $0x18] sm:$0xff]
    %v1169 = vld [vmem:[#allocation5 + $0x20] sm:$0xff]
    %v1170 = vld [vmem:[#allocation5 + $0x28] sm:$0xff]
    %v1171 = vld [vmem:[#allocation5 + $0x30] sm:$0xff]
    %v1172 = vld [vmem:[#allocation5 + $0x38] sm:$0xff]
    %v1173 = vld [vmem:[#allocation5 + $0x40] sm:$0xff]
    %v1174 = vld [vmem:[#allocation5 + $0x48] sm:$0xff]
    %v1175 = vld [vmem:[#allocation5 + $0x50] sm:$0xff]
    %v1176 = vld [vmem:[#allocation5 + $0x58] sm:$0xff]
    %v1177 = vld [vmem:[#allocation5 + $0x60] sm:$0xff]
    %v1178 = vld [vmem:[#allocation5 + $0x68] sm:$0xff]
    %v1179 = vld [vmem:[#allocation5 + $0x70] sm:$0xff]
    %v1180 = vld [vmem:[#allocation5 + $0x78] sm:$0xff]
    %v1181 = vld [vmem:[#allocation7] sm:$0xff]
    %v1182 = vld [vmem:[#allocation7 + $0x8] sm:$0xff]
    %v1183 = vld [vmem:[#allocation7 + $0x10] sm:$0xff]
    %v1184 = vld [vmem:[#allocation7 + $0x18] sm:$0xff]
    %v1185 = vld [vmem:[#allocation7 + $0x20] sm:$0xff]
    %v1186 = vld [vmem:[#allocation7 + $0x28] sm:$0xff]
    %v1187 = vld [vmem:[#allocation7 + $0x30] sm:$0xff]
    %v1188 = vld [vmem:[#allocation7 + $0x38] sm:$0xff]
    %v1189 = vld [vmem:[#allocation7 + $0x40] sm:$0xff]
    %v1190 = vld [vmem:[#allocation7 + $0x48] sm:$0xff]
    %v1191 = vld [vmem:[#allocation7 + $0x50] sm:$0xff]
    %v1192 = vld [vmem:[#allocation7 + $0x58] sm:$0xff]
    %v1193 = vld [vmem:[#allocation7 + $0x60] sm:$0xff]
    %v1194 = vld [vmem:[#allocation7 + $0x68] sm:$0xff]
    %v1195 = vld [vmem:[#allocation7 + $0x70] sm:$0xff]
    %v1196 = vld [vmem:[#allocation7 + $0x78] sm:$0xff]
    %v1197 = vld [vmem:[%s8] sm:$0x3]
    %v1198 = vld [vmem:[#allocation2] sm:$0xff]
    %v1199 = vld [vmem:[#allocation2 + $0x8] sm:$0xff]
    %v1201 = vperm.slane %v1197, 0
    %v1202 = vperm.slane %v1197, 1
    %v1206 = vsel %vm255, %v1198, 0
    %v1209 = vsel %vm255, %v1199, 0
    %1211 = vmatpush.msra.mxu0 0.0
    %1212 = vmatpush.msra.mxu0 0.0
    %1213 = vmatpush.msra.mxu0 0.0
    %1214 = vmatpush.msra.mxu0 0.0
    %1215 = vmatpush.msra.mxu0 0.0
    %1216 = vmatpush.msra.mxu0 0.0
    %1217 = vmatpush.msra.mxu0 0.0
    %1218 = vmatpush.msra.mxu0 0.0
    %1219 = vmatpush.msra.mxu0 %v1179
    %1220 = vmatpush.msra.mxu0 %v1177
    %1221 = vmatpush.msra.mxu0 %v1175
    %1222 = vmatpush.msra.mxu0 %v1173
    %1223 = vmatpush.msra.mxu0 %v1171
    %1224 = vmatpush.msra.mxu0 %v1169
    %1225 = vmatpush.msra.mxu0 %v1167
    %1226 = vmatpush.msra.mxu0 %v1165
    %1227 = vmatmul.f32.gmra.mxu0 %v1206
    %v1228 = vpop.f32.mrf.mxu0
    %v1229 = vadd.f32 %v1201, %v1228
    %1230 = vmatmul.f32.gmra.mxu0 %v1209
    %v1231 = vpop.f32.mrf.mxu0
    %v1232 = vadd.f32 %v1201, %v1231
    %1233 = vdwg.mxu0
    %1234 = vmatpush.msra.mxu0 0.0
    %1235 = vmatpush.msra.mxu0 0.0
    %1236 = vmatpush.msra.mxu0 0.0
    %1237 = vmatpush.msra.mxu0 0.0
    %1238 = vmatpush.msra.mxu0 0.0
    %1239 = vmatpush.msra.mxu0 0.0
    %1240 = vmatpush.msra.mxu0 0.0
    %1241 = vmatpush.msra.mxu0 0.0
    %1242 = vmatpush.msra.mxu0 %v1180
    %1243 = vmatpush.msra.mxu0 %v1178
    %1244 = vmatpush.msra.mxu0 %v1176
    %1245 = vmatpush.msra.mxu0 %v1174
    %1246 = vmatpush.msra.mxu0 %v1172
    %1247 = vmatpush.msra.mxu0 %v1170
    %1248 = vmatpush.msra.mxu0 %v1168
    %1249 = vmatpush.msra.mxu0 %v1166
    %1250 = vmatmul.f32.gmra.mxu0 %v1206
    %v1251 = vpop.f32.mrf.mxu0
    %v1252 = vadd.f32 %v1202, %v1251
    %1253 = vmatmul.f32.gmra.mxu0 %v1209
    %v1254 = vpop.f32.mrf.mxu0
    %v1255 = vadd.f32 %v1202, %v1254
    %1256 = vdwg.mxu0
    %v1259 = vrot.slane %v1232, 6
    %v1260 = vrot.slane %v1255, 6
    %v1263 = vsel %vm154, %v1229, %v1259
    %v1264 = vsel %vm155, %v1252, %v1260
    %1265 = vmatpush.msra.mxu0 0.0
    %1266 = vmatpush.msra.mxu0 0.0
    %1267 = vmatpush.msra.mxu0 0.0
    %1268 = vmatpush.msra.mxu0 0.0
    %1269 = vmatpush.msra.mxu0 0.0
    %1270 = vmatpush.msra.mxu0 0.0
    %1271 = vmatpush.msra.mxu0 0.0
    %1272 = vmatpush.msra.mxu0 0.0
    %1273 = vmatpush.msra.mxu0 %v1195
    %1274 = vmatpush.msra.mxu0 %v1193
    %1275 = vmatpush.msra.mxu0 %v1191
    %1276 = vmatpush.msra.mxu0 %v1189
    %1277 = vmatpush.msra.mxu0 %v1187
    %1278 = vmatpush.msra.mxu0 %v1185
    %1279 = vmatpush.msra.mxu0 %v1183
    %1280 = vmatpush.msra.mxu0 %v1181
    %1281 = vmatmul.f32.gmra.mxu0 %v257
    %v1282 = vpop.f32.mrf.mxu0
    %v1283 = vadd.f32 0.0, %v1282
    %1284 = vdwg.mxu0
    %1285 = vmatpush.msra.mxu0 0.0
    %1286 = vmatpush.msra.mxu0 0.0
    %1287 = vmatpush.msra.mxu0 0.0
    %1288 = vmatpush.msra.mxu0 0.0
    %1289 = vmatpush.msra.mxu0 0.0
    %1290 = vmatpush.msra.mxu0 0.0
    %1291 = vmatpush.msra.mxu0 0.0
    %1292 = vmatpush.msra.mxu0 0.0
    %1293 = vmatpush.msra.mxu0 %v1196
    %1294 = vmatpush.msra.mxu0 %v1194
    %1295 = vmatpush.msra.mxu0 %v1192
    %1296 = vmatpush.msra.mxu0 %v1190
    %1297 = vmatpush.msra.mxu0 %v1188
    %1298 = vmatpush.msra.mxu0 %v1186
    %1299 = vmatpush.msra.mxu0 %v1184
    %1300 = vmatpush.msra.mxu0 %v1182
    %1301 = vmatmul.f32.gmra.mxu0 %v257
    %v1302 = vpop.f32.mrf.mxu0
    %v1303 = vadd.f32 0.0, %v1302
    %1304 = vdwg.mxu0
    %v1305 = vadd.f32 %v1263, %v1283
    %v1306 = vadd.f32 %v1264, %v1303
    %v1307 = vxor.u32 %v1305, 2147483648
    %v1308 = vxor.u32 %v1306, 2147483648
    %v1309 = vmul.f32 %v1307, 1.442695
    %v1310 = vpow.pop %v1309
    %v1311 = vmul.f32 %v1308, 1.442695
    %v1312 = vpow.pop %v1311
    %v1313 = vadd.f32 %v1310, 1.0
    %v1314 = vadd.f32 %v1312, 1.0
    %v1315 = vrcp.pop %v1313
    %v1316 = vmul.f32 %v1313, %v1315
    %v1317 = vsub.f32 1.0, %v1316
    %v1318 = vmul.f32 %v1315, %v1317
    %v1319 = vadd.f32 %v1315, %v1318
    %vm1320 = vweird.f32 %v1313
    %vm1321 = vweird.f32 %v1315
    %vm1322 = vmor %vm1320, %vm1321
    %v1323 = vsel %vm1322, %v1315, %v1319
    %v1324 = vand.u32 2147483647, %v1313
    %vm1325 = vcmp.eq.f32.partialorder %v1324, 8.507059e+37
    %v1326 = vand.u32 %v1313, 2147483648
    %v1327 = vor.u32 1.1754944e-38, %v1326
    %v1328 = vsel %vm1325, %v1327, %v1323
    %v1329 = vmul.f32 1.0, %v1328
    %v1330 = vrcp.pop %v1314
    %v1331 = vmul.f32 %v1314, %v1330
    %v1332 = vsub.f32 1.0, %v1331
    %v1333 = vmul.f32 %v1330, %v1332
    %v1334 = vadd.f32 %v1330, %v1333
    %vm1335 = vweird.f32 %v1314
    %vm1336 = vweird.f32 %v1330
    %vm1337 = vmor %vm1335, %vm1336
    %v1338 = vsel %vm1337, %v1330, %v1334
    %v1339 = vand.u32 2147483647, %v1314
    %vm1340 = vcmp.eq.f32.partialorder %v1339, 8.507059e+37
    %v1341 = vand.u32 %v1314, 2147483648
    %v1342 = vor.u32 1.1754944e-38, %v1341
    %v1343 = vsel %vm1340, %v1342, %v1338
    %v1344 = vmul.f32 1.0, %v1343
    %v1345 = vmul.f32 %v1329, %v160
    %v1346 = vmul.f32 %v1344, %v161
    %v1347 = vadd.f32 %v1345, %v162
    %v1348 = vadd.f32 %v1346, %v163
    %v1349 = vmul.f32 %v1347, 0.0
    %v1350 = vmul.f32 %v1347, %v1348
    %1352 = vrot.lane.b32.xlu0 %v1350, 64
    %v1353 = vpop.permute.xlu0 %1352
    %v1355 = vadd.f32 %v1349, %v1353
    %v1356 = vtanh.pop %v1355
    %v1357 = vmul.f32 %v1348, %v1356
    %1359 = vrot.lane.b32.xlu0 %v1357, 64
    %v1360 = vpop.permute.xlu0 %1359
    %1362 = vst.msk [vmem:[%s9] sm:$0x3] %vm356, %v1360
    %vm1363 = vcmask 1042176
    %1364 = vst.msk [vmem:[%s9 + $0x6] sm:$0x3] %vm1363, %v1357
    %v1365 = vrot.slane %v1232, 2
    %v1366 = vrot.slane %v1255, 2
    %v1369 = vsel %vm154, %v1229, %v1365
    %v1370 = vsel %vm155, %v1252, %v1366
    %v1371 = vsel %vm255, %v1360, 0
    %1373 = vmatpush.msra.mxu0 0.0
    %1374 = vmatpush.msra.mxu0 0.0
    %1375 = vmatpush.msra.mxu0 0.0
    %1376 = vmatpush.msra.mxu0 0.0
    %1377 = vmatpush.msra.mxu0 0.0
    %1378 = vmatpush.msra.mxu0 0.0
    %1379 = vmatpush.msra.mxu0 0.0
    %1380 = vmatpush.msra.mxu0 0.0
    %1381 = vmatpush.msra.mxu0 %v1195
    %1382 = vmatpush.msra.mxu0 %v1193
    %1383 = vmatpush.msra.mxu0 %v1191
    %1384 = vmatpush.msra.mxu0 %v1189
    %1385 = vmatpush.msra.mxu0 %v1187
    %1386 = vmatpush.msra.mxu0 %v1185
    %1387 = vmatpush.msra.mxu0 %v1183
    %1388 = vmatpush.msra.mxu0 %v1181
    %1389 = vmatmul.f32.gmra.mxu0 %v1371
    %v1390 = vpop.f32.mrf.mxu0
    %v1391 = vadd.f32 0.0, %v1390
    %1392 = vdwg.mxu0
    %1393 = vmatpush.msra.mxu0 0.0
    %1394 = vmatpush.msra.mxu0 0.0
    %1395 = vmatpush.msra.mxu0 0.0
    %1396 = vmatpush.msra.mxu0 0.0
    %1397 = vmatpush.msra.mxu0 0.0
    %1398 = vmatpush.msra.mxu0 0.0
    %1399 = vmatpush.msra.mxu0 0.0
    %1400 = vmatpush.msra.mxu0 0.0
    %1401 = vmatpush.msra.mxu0 %v1196
    %1402 = vmatpush.msra.mxu0 %v1194
    %1403 = vmatpush.msra.mxu0 %v1192
    %1404 = vmatpush.msra.mxu0 %v1190
    %1405 = vmatpush.msra.mxu0 %v1188
    %1406 = vmatpush.msra.mxu0 %v1186
    %1407 = vmatpush.msra.mxu0 %v1184
    %1408 = vmatpush.msra.mxu0 %v1182
    %1409 = vmatmul.f32.gmra.mxu0 %v1371
    %v1410 = vpop.f32.mrf.mxu0
    %v1411 = vadd.f32 0.0, %v1410
    %1412 = vdwg.mxu0
    %v1415 = vrot.slane %v1391, 6
    %v1416 = vrot.slane %v1411, 6
    %v1419 = vadd.f32 %v1369, %v1415
    %v1420 = vadd.f32 %v1370, %v1416
    %v1421 = vxor.u32 %v1419, 2147483648
    %v1422 = vxor.u32 %v1420, 2147483648
    %v1423 = vmul.f32 %v1421, 1.442695
    %v1424 = vpow.pop %v1423
    %v1425 = vmul.f32 %v1422, 1.442695
    %v1426 = vpow.pop %v1425
    %v1427 = vadd.f32 %v1424, 1.0
    %v1428 = vadd.f32 %v1426, 1.0
    %v1429 = vrcp.pop %v1427
    %v1430 = vmul.f32 %v1427, %v1429
    %v1431 = vsub.f32 1.0, %v1430
    %v1432 = vmul.f32 %v1429, %v1431
    %v1433 = vadd.f32 %v1429, %v1432
    %vm1434 = vweird.f32 %v1427
    %vm1435 = vweird.f32 %v1429
    %vm1436 = vmor %vm1434, %vm1435
    %v1437 = vsel %vm1436, %v1429, %v1433
    %v1438 = vand.u32 2147483647, %v1427
    %vm1439 = vcmp.eq.f32.partialorder %v1438, 8.507059e+37
    %v1440 = vand.u32 %v1427, 2147483648
    %v1441 = vor.u32 1.1754944e-38, %v1440
    %v1442 = vsel %vm1439, %v1441, %v1437
    %v1443 = vmul.f32 1.0, %v1442
    %v1444 = vrcp.pop %v1428
    %v1445 = vmul.f32 %v1428, %v1444
    %v1446 = vsub.f32 1.0, %v1445
    %v1447 = vmul.f32 %v1444, %v1446
    %v1448 = vadd.f32 %v1444, %v1447
    %vm1449 = vweird.f32 %v1428
    %vm1450 = vweird.f32 %v1444
    %vm1451 = vmor %vm1449, %vm1450
    %v1452 = vsel %vm1451, %v1444, %v1448
    %v1453 = vand.u32 2147483647, %v1428
    %vm1454 = vcmp.eq.f32.partialorder %v1453, 8.507059e+37
    %v1455 = vand.u32 %v1428, 2147483648
    %v1456 = vor.u32 1.1754944e-38, %v1455
    %v1457 = vsel %vm1454, %v1456, %v1452
    %v1458 = vmul.f32 1.0, %v1457
    %v1459 = vmul.f32 %v1443, %v160
    %v1460 = vmul.f32 %v1458, %v161
    %v1461 = vadd.f32 %v1459, %v162
    %v1462 = vadd.f32 %v1460, %v163
    %v1464 = vrot.slane %v1355, 6
    %v1466 = vmul.f32 %v1461, %v1464
    %v1467 = vmul.f32 %v1461, %v1462
    %1469 = vrot.lane.b32.xlu0 %v1467, 64
    %v1470 = vpop.permute.xlu0 %1469
    %v1472 = vadd.f32 %v1466, %v1470
    %v1473 = vtanh.pop %v1472
    %v1474 = vmul.f32 %v1462, %v1473
    %1476 = vst.sshfl [vmem:[#allocation1] sm:$0xff pattern:$0x73625140] %v1474
    %s1477 = scalar_lea.vmem [#allocation1], 1
    %v1478 = vld [vmem:[%s1477] ss:$4 sm:$0xff]
    %vm1480 = vcmask 779776
    %1481 = vst.msk [vmem:[%s9] sm:$0x3] %vm1480, %v1478
    %1482 = vst.sshfl [vmem:[#allocation1] sm:$0xff pattern:$0x73625140] %v1474
    %s1483 = scalar_lea.vmem [#allocation1], 1
    %v1484 = vld [vmem:[%s1483] ss:$4 sm:$0xff]
    %1485 = vrot.lane.b32.xlu0 %v1484, 64
    %v1486 = vpop.permute.xlu0 %1485
    %1488 = vst.msk [vmem:[%s9 + $0x6] sm:$0x3] %vm358, %v1486
    %v1489 = vrot.slane %v1474, 2
    %1490 = vrot.lane.b32.xlu0 %v1489, 64
    %v1491 = vpop.permute.xlu0 %1490
    %v1492 = vsel %vm255, %v1491, 0
    %1494 = vmatpush.msra.mxu0 0.0
    %1495 = vmatpush.msra.mxu0 0.0
    %1496 = vmatpush.msra.mxu0 0.0
    %1497 = vmatpush.msra.mxu0 0.0
    %1498 = vmatpush.msra.mxu0 0.0
    %1499 = vmatpush.msra.mxu0 0.0
    %1500 = vmatpush.msra.mxu0 0.0
    %1501 = vmatpush.msra.mxu0 0.0
    %1502 = vmatpush.msra.mxu0 %v1195
    %1503 = vmatpush.msra.mxu0 %v1193
    %1504 = vmatpush.msra.mxu0 %v1191
    %1505 = vmatpush.msra.mxu0 %v1189
    %1506 = vmatpush.msra.mxu0 %v1187
    %1507 = vmatpush.msra.mxu0 %v1185
    %1508 = vmatpush.msra.mxu0 %v1183
    %1509 = vmatpush.msra.mxu0 %v1181
    %1510 = vmatmul.f32.gmra.mxu0 %v1492
    %v1511 = vpop.f32.mrf.mxu0
    %v1512 = vadd.f32 0.0, %v1511
    %1513 = vdwg.mxu0
    %1514 = vmatpush.msra.mxu0 0.0
    %1515 = vmatpush.msra.mxu0 0.0
    %1516 = vmatpush.msra.mxu0 0.0
    %1517 = vmatpush.msra.mxu0 0.0
    %1518 = vmatpush.msra.mxu0 0.0
    %1519 = vmatpush.msra.mxu0 0.0
    %1520 = vmatpush.msra.mxu0 0.0
    %1521 = vmatpush.msra.mxu0 0.0
    %1522 = vmatpush.msra.mxu0 %v1196
    %1523 = vmatpush.msra.mxu0 %v1194
    %1524 = vmatpush.msra.mxu0 %v1192
    %1525 = vmatpush.msra.mxu0 %v1190
    %1526 = vmatpush.msra.mxu0 %v1188
    %1527 = vmatpush.msra.mxu0 %v1186
    %1528 = vmatpush.msra.mxu0 %v1184
    %1529 = vmatpush.msra.mxu0 %v1182
    %1530 = vmatmul.f32.gmra.mxu0 %v1492
    %v1531 = vpop.f32.mrf.mxu0
    %v1532 = vadd.f32 0.0, %v1531
    %1533 = vdwg.mxu0
    %v1536 = vrot.slane %v1512, 4
    %v1537 = vrot.slane %v1532, 4
    %v1540 = vadd.f32 %v1263, %v1536
    %v1541 = vadd.f32 %v1264, %v1537
    %v1542 = vxor.u32 %v1540, 2147483648
    %v1543 = vxor.u32 %v1541, 2147483648
    %v1544 = vmul.f32 %v1542, 1.442695
    %v1545 = vpow.pop %v1544
    %v1546 = vmul.f32 %v1543, 1.442695
    %v1547 = vpow.pop %v1546
    %v1548 = vadd.f32 %v1545, 1.0
    %v1549 = vadd.f32 %v1547, 1.0
    %v1550 = vrcp.pop %v1548
    %v1551 = vmul.f32 %v1548, %v1550
    %v1552 = vsub.f32 1.0, %v1551
    %v1553 = vmul.f32 %v1550, %v1552
    %v1554 = vadd.f32 %v1550, %v1553
    %vm1555 = vweird.f32 %v1548
    %vm1556 = vweird.f32 %v1550
    %vm1557 = vmor %vm1555, %vm1556
    %v1558 = vsel %vm1557, %v1550, %v1554
    %v1559 = vand.u32 2147483647, %v1548
    %vm1560 = vcmp.eq.f32.partialorder %v1559, 8.507059e+37
    %v1561 = vand.u32 %v1548, 2147483648
    %v1562 = vor.u32 1.1754944e-38, %v1561
    %v1563 = vsel %vm1560, %v1562, %v1558
    %v1564 = vmul.f32 1.0, %v1563
    %v1565 = vrcp.pop %v1549
    %v1566 = vmul.f32 %v1549, %v1565
    %v1567 = vsub.f32 1.0, %v1566
    %v1568 = vmul.f32 %v1565, %v1567
    %v1569 = vadd.f32 %v1565, %v1568
    %vm1570 = vweird.f32 %v1549
    %vm1571 = vweird.f32 %v1565
    %vm1572 = vmor %vm1570, %vm1571
    %v1573 = vsel %vm1572, %v1565, %v1569
    %v1574 = vand.u32 2147483647, %v1549
    %vm1575 = vcmp.eq.f32.partialorder %v1574, 8.507059e+37
    %v1576 = vand.u32 %v1549, 2147483648
    %v1577 = vor.u32 1.1754944e-38, %v1576
    %v1578 = vsel %vm1575, %v1577, %v1573
    %v1579 = vmul.f32 1.0, %v1578
    %v1580 = vmul.f32 %v1564, %v160
    %v1581 = vmul.f32 %v1579, %v161
    %v1582 = vadd.f32 %v1580, %v162
    %v1583 = vadd.f32 %v1581, %v163
    %v1585 = vrot.slane %v1472, 6
    %v1587 = vmul.f32 %v1582, %v1585
    %v1588 = vmul.f32 %v1582, %v1583
    %1590 = vrot.lane.b32.xlu0 %v1588, 64
    %v1591 = vpop.permute.xlu0 %1590
    %v1593 = vadd.f32 %v1587, %v1591
    %v1594 = vtanh.pop %v1593
    %v1595 = vmul.f32 %v1583, %v1594
    %1597 = vst.sshfl [vmem:[#allocation1] sm:$0xff pattern:$0x73625140] %v1595
    %s1598 = scalar_lea.vmem [#allocation1], 2
    %v1599 = vld [vmem:[%s1598] ss:$4 sm:$0xff]
    %1600 = vrot.lane.b32.xlu0 %v1599, 64
    %v1601 = vpop.permute.xlu0 %1600
    %1603 = vst.msk [vmem:[%s9 + $0x2] sm:$0x3] %vm356, %v1601
    %1604 = vst.sshfl [vmem:[#allocation1] sm:$0xff pattern:$0x73625140] %v1595
    %s1605 = scalar_lea.vmem [#allocation1], 2
    %v1606 = vld [vmem:[%s1605] ss:$4 sm:$0xff]
    %1608 = vst.msk [vmem:[%s9 + $0x4] sm:$0x3] %vm1363, %v1606
    %v1609 = vrot.slane %v1595, 4
    %1610 = vrot.lane.b32.xlu0 %v1609, 64
    %v1611 = vpop.permute.xlu0 %1610
    %v1612 = vsel %vm255, %v1611, 0
    %1614 = vmatpush.msra.mxu0 0.0
    %1615 = vmatpush.msra.mxu0 0.0
    %1616 = vmatpush.msra.mxu0 0.0
    %1617 = vmatpush.msra.mxu0 0.0
    %1618 = vmatpush.msra.mxu0 0.0
    %1619 = vmatpush.msra.mxu0 0.0
    %1620 = vmatpush.msra.mxu0 0.0
    %1621 = vmatpush.msra.mxu0 0.0
    %1622 = vmatpush.msra.mxu0 %v1195
    %1623 = vmatpush.msra.mxu0 %v1193
    %1624 = vmatpush.msra.mxu0 %v1191
    %1625 = vmatpush.msra.mxu0 %v1189
    %1626 = vmatpush.msra.mxu0 %v1187
    %1627 = vmatpush.msra.mxu0 %v1185
    %1628 = vmatpush.msra.mxu0 %v1183
    %1629 = vmatpush.msra.mxu0 %v1181
    %1630 = vmatmul.f32.gmra.mxu0 %v1612
    %v1631 = vpop.f32.mrf.mxu0
    %v1632 = vadd.f32 0.0, %v1631
    %1633 = vdwg.mxu0
    %1634 = vmatpush.msra.mxu0 0.0
    %1635 = vmatpush.msra.mxu0 0.0
    %1636 = vmatpush.msra.mxu0 0.0
    %1637 = vmatpush.msra.mxu0 0.0
    %1638 = vmatpush.msra.mxu0 0.0
    %1639 = vmatpush.msra.mxu0 0.0
    %1640 = vmatpush.msra.mxu0 0.0
    %1641 = vmatpush.msra.mxu0 0.0
    %1642 = vmatpush.msra.mxu0 %v1196
    %1643 = vmatpush.msra.mxu0 %v1194
    %1644 = vmatpush.msra.mxu0 %v1192
    %1645 = vmatpush.msra.mxu0 %v1190
    %1646 = vmatpush.msra.mxu0 %v1188
    %1647 = vmatpush.msra.mxu0 %v1186
    %1648 = vmatpush.msra.mxu0 %v1184
    %1649 = vmatpush.msra.mxu0 %v1182
    %1650 = vmatmul.f32.gmra.mxu0 %v1612
    %v1651 = vpop.f32.mrf.mxu0
    %v1652 = vadd.f32 0.0, %v1651
    %1653 = vdwg.mxu0
    %v1656 = vrot.slane %v1632, 2
    %v1657 = vrot.slane %v1652, 2
    %v1660 = vadd.f32 %v1369, %v1656
    %v1661 = vadd.f32 %v1370, %v1657
    %v1662 = vxor.u32 %v1660, 2147483648
    %v1663 = vxor.u32 %v1661, 2147483648
    %v1664 = vmul.f32 %v1662, 1.442695
    %v1665 = vpow.pop %v1664
    %v1666 = vmul.f32 %v1663, 1.442695
    %v1667 = vpow.pop %v1666
    %v1668 = vadd.f32 %v1665, 1.0
    %v1669 = vadd.f32 %v1667, 1.0
    %v1670 = vrcp.pop %v1668
    %v1671 = vmul.f32 %v1668, %v1670
    %v1672 = vsub.f32 1.0, %v1671
    %v1673 = vmul.f32 %v1670, %v1672
    %v1674 = vadd.f32 %v1670, %v1673
    %vm1675 = vweird.f32 %v1668
    %vm1676 = vweird.f32 %v1670
    %vm1677 = vmor %vm1675, %vm1676
    %v1678 = vsel %vm1677, %v1670, %v1674
    %v1679 = vand.u32 2147483647, %v1668
    %vm1680 = vcmp.eq.f32.partialorder %v1679, 8.507059e+37
    %v1681 = vand.u32 %v1668, 2147483648
    %v1682 = vor.u32 1.1754944e-38, %v1681
    %v1683 = vsel %vm1680, %v1682, %v1678
    %v1684 = vmul.f32 1.0, %v1683
    %v1685 = vrcp.pop %v1669
    %v1686 = vmul.f32 %v1669, %v1685
    %v1687 = vsub.f32 1.0, %v1686
    %v1688 = vmul.f32 %v1685, %v1687
    %v1689 = vadd.f32 %v1685, %v1688
    %vm1690 = vweird.f32 %v1669
    %vm1691 = vweird.f32 %v1685
    %vm1692 = vmor %vm1690, %vm1691
    %v1693 = vsel %vm1692, %v1685, %v1689
    %v1694 = vand.u32 2147483647, %v1669
    %vm1695 = vcmp.eq.f32.partialorder %v1694, 8.507059e+37
    %v1696 = vand.u32 %v1669, 2147483648
    %v1697 = vor.u32 1.1754944e-38, %v1696
    %v1698 = vsel %vm1695, %v1697, %v1693
    %v1699 = vmul.f32 1.0, %v1698
    %v1700 = vmul.f32 %v1684, %v160
    %v1701 = vmul.f32 %v1699, %v161
    %v1702 = vadd.f32 %v1700, %v162
    %v1703 = vadd.f32 %v1701, %v163
    %v1705 = vrot.slane %v1593, 6
    %v1707 = vmul.f32 %v1702, %v1705
    %v1708 = vmul.f32 %v1702, %v1703
    %1710 = vrot.lane.b32.xlu0 %v1708, 64
    %v1711 = vpop.permute.xlu0 %1710
    %v1713 = vadd.f32 %v1707, %v1711
    %v1714 = vtanh.pop %v1713
    %v1715 = vmul.f32 %v1703, %v1714
    %1717 = vst.sshfl [vmem:[#allocation1] sm:$0xff pattern:$0x73625140] %v1715
    %s1718 = scalar_lea.vmem [#allocation1], 3
    %v1719 = vld [vmem:[%s1718] ss:$4 sm:$0xff]
    %1721 = vst.msk [vmem:[%s9 + $0x2] sm:$0x3] %vm1480, %v1719
    %1722 = vst.sshfl [vmem:[#allocation1] sm:$0xff pattern:$0x73625140] %v1715
    %s1723 = scalar_lea.vmem [#allocation1], 3
    %v1724 = vld [vmem:[%s1723] ss:$4 sm:$0xff]
    %1725 = vrot.lane.b32.xlu0 %v1724, 64
    %v1726 = vpop.permute.xlu0 %1725
    %1728 = vst.msk [vmem:[%s9 + $0x4] sm:$0x3] %vm358, %v1726
    %v1731 = vrot.slane %v1229, 6
    %v1732 = vrot.slane %v1252, 6
    %v1735 = vsel %vm154, %v1232, %v1731
    %v1736 = vsel %vm155, %v1255, %v1732
    %v1737 = vrot.slane %v1715, 6
    %1738 = vrot.lane.b32.xlu0 %v1737, 64
    %v1739 = vpop.permute.xlu0 %1738
    %v1740 = vsel %vm255, %v1739, 0
    %1742 = vmatpush.msra.mxu0 0.0
    %1743 = vmatpush.msra.mxu0 0.0
    %1744 = vmatpush.msra.mxu0 0.0
    %1745 = vmatpush.msra.mxu0 0.0
    %1746 = vmatpush.msra.mxu0 0.0
    %1747 = vmatpush.msra.mxu0 0.0
    %1748 = vmatpush.msra.mxu0 0.0
    %1749 = vmatpush.msra.mxu0 0.0
    %1750 = vmatpush.msra.mxu0 %v1195
    %1751 = vmatpush.msra.mxu0 %v1193
    %1752 = vmatpush.msra.mxu0 %v1191
    %1753 = vmatpush.msra.mxu0 %v1189
    %1754 = vmatpush.msra.mxu0 %v1187
    %1755 = vmatpush.msra.mxu0 %v1185
    %1756 = vmatpush.msra.mxu0 %v1183
    %1757 = vmatpush.msra.mxu0 %v1181
    %1758 = vmatmul.f32.gmra.mxu0 %v1740
    %v1759 = vpop.f32.mrf.mxu0
    %v1760 = vadd.f32 0.0, %v1759
    %1761 = vdwg.mxu0
    %1762 = vmatpush.msra.mxu0 0.0
    %1763 = vmatpush.msra.mxu0 0.0
    %1764 = vmatpush.msra.mxu0 0.0
    %1765 = vmatpush.msra.mxu0 0.0
    %1766 = vmatpush.msra.mxu0 0.0
    %1767 = vmatpush.msra.mxu0 0.0
    %1768 = vmatpush.msra.mxu0 0.0
    %1769 = vmatpush.msra.mxu0 0.0
    %1770 = vmatpush.msra.mxu0 %v1196
    %1771 = vmatpush.msra.mxu0 %v1194
    %1772 = vmatpush.msra.mxu0 %v1192
    %1773 = vmatpush.msra.mxu0 %v1190
    %1774 = vmatpush.msra.mxu0 %v1188
    %1775 = vmatpush.msra.mxu0 %v1186
    %1776 = vmatpush.msra.mxu0 %v1184
    %1777 = vmatpush.msra.mxu0 %v1182
    %1778 = vmatmul.f32.gmra.mxu0 %v1740
    %v1779 = vpop.f32.mrf.mxu0
    %v1780 = vadd.f32 0.0, %v1779
    %1781 = vdwg.mxu0
    %v1782 = vadd.f32 %v1735, %v1760
    %v1783 = vadd.f32 %v1736, %v1780
    %v1784 = vxor.u32 %v1782, 2147483648
    %v1785 = vxor.u32 %v1783, 2147483648
    %v1786 = vmul.f32 %v1784, 1.442695
    %v1787 = vpow.pop %v1786
    %v1788 = vmul.f32 %v1785, 1.442695
    %v1789 = vpow.pop %v1788
    %v1790 = vadd.f32 %v1787, 1.0
    %v1791 = vadd.f32 %v1789, 1.0
    %v1792 = vrcp.pop %v1790
    %v1793 = vmul.f32 %v1790, %v1792
    %v1794 = vsub.f32 1.0, %v1793
    %v1795 = vmul.f32 %v1792, %v1794
    %v1796 = vadd.f32 %v1792, %v1795
    %vm1797 = vweird.f32 %v1790
    %vm1798 = vweird.f32 %v1792
    %vm1799 = vmor %vm1797, %vm1798
    %v1800 = vsel %vm1799, %v1792, %v1796
    %v1801 = vand.u32 2147483647, %v1790
    %vm1802 = vcmp.eq.f32.partialorder %v1801, 8.507059e+37
    %v1803 = vand.u32 %v1790, 2147483648
    %v1804 = vor.u32 1.1754944e-38, %v1803
    %v1805 = vsel %vm1802, %v1804, %v1800
    %v1806 = vmul.f32 1.0, %v1805
    %v1807 = vrcp.pop %v1791
    %v1808 = vmul.f32 %v1791, %v1807
    %v1809 = vsub.f32 1.0, %v1808
    %v1810 = vmul.f32 %v1807, %v1809
    %v1811 = vadd.f32 %v1807, %v1810
    %vm1812 = vweird.f32 %v1791
    %vm1813 = vweird.f32 %v1807
    %vm1814 = vmor %vm1812, %vm1813
    %v1815 = vsel %vm1814, %v1807, %v1811
    %v1816 = vand.u32 2147483647, %v1791
    %vm1817 = vcmp.eq.f32.partialorder %v1816, 8.507059e+37
    %v1818 = vand.u32 %v1791, 2147483648
    %v1819 = vor.u32 1.1754944e-38, %v1818
    %v1820 = vsel %vm1817, %v1819, %v1815
    %v1821 = vmul.f32 1.0, %v1820
    %v1822 = vmul.f32 %v1806, %v160
    %v1823 = vmul.f32 %v1821, %v161
    %v1824 = vadd.f32 %v1822, %v162
    %v1825 = vadd.f32 %v1823, %v163
    %v1827 = vrot.slane %v1713, 6
    %v1829 = vmul.f32 %v1824, %v1827
    %v1830 = vmul.f32 %v1824, %v1825
    %1832 = vrot.lane.b32.xlu0 %v1830, 64
    %v1833 = vpop.permute.xlu0 %1832
    %v1835 = vadd.f32 %v1829, %v1833
    %v1836 = vtanh.pop %v1835
    %v1837 = vmul.f32 %v1825, %v1836
    %1839 = vrot.lane.b32.xlu0 %v1837, 64
    %v1840 = vpop.permute.xlu0 %1839
    %1842 = vst.msk [vmem:[%s9 + $0x4] sm:$0x3] %vm356, %v1840
    %1843 = vst.msk [vmem:[%s9 + $0x2] sm:$0x3] %vm1363, %v1837
    %v1844 = vrot.slane %v1229, 2
    %v1845 = vrot.slane %v1252, 2
    %v1848 = vsel %vm154, %v1232, %v1844
    %v1849 = vsel %vm155, %v1255, %v1845
    %v1850 = vsel %vm255, %v1840, 0
    %1852 = vmatpush.msra.mxu0 0.0
    %1853 = vmatpush.msra.mxu0 0.0
    %1854 = vmatpush.msra.mxu0 0.0
    %1855 = vmatpush.msra.mxu0 0.0
    %1856 = vmatpush.msra.mxu0 0.0
    %1857 = vmatpush.msra.mxu0 0.0
    %1858 = vmatpush.msra.mxu0 0.0
    %1859 = vmatpush.msra.mxu0 0.0
    %1860 = vmatpush.msra.mxu0 %v1195
    %1861 = vmatpush.msra.mxu0 %v1193
    %1862 = vmatpush.msra.mxu0 %v1191
    %1863 = vmatpush.msra.mxu0 %v1189
    %1864 = vmatpush.msra.mxu0 %v1187
    %1865 = vmatpush.msra.mxu0 %v1185
    %1866 = vmatpush.msra.mxu0 %v1183
    %1867 = vmatpush.msra.mxu0 %v1181
    %1868 = vmatmul.f32.gmra.mxu0 %v1850
    %v1869 = vpop.f32.mrf.mxu0
    %v1870 = vadd.f32 0.0, %v1869
    %1871 = vdwg.mxu0
    %1872 = vmatpush.msra.mxu0 0.0
    %1873 = vmatpush.msra.mxu0 0.0
    %1874 = vmatpush.msra.mxu0 0.0
    %1875 = vmatpush.msra.mxu0 0.0
    %1876 = vmatpush.msra.mxu0 0.0
    %1877 = vmatpush.msra.mxu0 0.0
    %1878 = vmatpush.msra.mxu0 0.0
    %1879 = vmatpush.msra.mxu0 0.0
    %1880 = vmatpush.msra.mxu0 %v1196
    %1881 = vmatpush.msra.mxu0 %v1194
    %1882 = vmatpush.msra.mxu0 %v1192
    %1883 = vmatpush.msra.mxu0 %v1190
    %1884 = vmatpush.msra.mxu0 %v1188
    %1885 = vmatpush.msra.mxu0 %v1186
    %1886 = vmatpush.msra.mxu0 %v1184
    %1887 = vmatpush.msra.mxu0 %v1182
    %1888 = vmatmul.f32.gmra.mxu0 %v1850
    %v1889 = vpop.f32.mrf.mxu0
    %v1890 = vadd.f32 0.0, %v1889
    %1891 = vdwg.mxu0
    %v1894 = vrot.slane %v1870, 6
    %v1895 = vrot.slane %v1890, 6
    %v1898 = vadd.f32 %v1848, %v1894
    %v1899 = vadd.f32 %v1849, %v1895
    %v1900 = vxor.u32 %v1898, 2147483648
    %v1901 = vxor.u32 %v1899, 2147483648
    %v1902 = vmul.f32 %v1900, 1.442695
    %v1903 = vpow.pop %v1902
    %v1904 = vmul.f32 %v1901, 1.442695
    %v1905 = vpow.pop %v1904
    %v1906 = vadd.f32 %v1903, 1.0
    %v1907 = vadd.f32 %v1905, 1.0
    %v1908 = vrcp.pop %v1906
    %v1909 = vmul.f32 %v1906, %v1908
    %v1910 = vsub.f32 1.0, %v1909
    %v1911 = vmul.f32 %v1908, %v1910
    %v1912 = vadd.f32 %v1908, %v1911
    %vm1913 = vweird.f32 %v1906
    %vm1914 = vweird.f32 %v1908
    %vm1915 = vmor %vm1913, %vm1914
    %v1916 = vsel %vm1915, %v1908, %v1912
    %v1917 = vand.u32 2147483647, %v1906
    %vm1918 = vcmp.eq.f32.partialorder %v1917, 8.507059e+37
    %v1919 = vand.u32 %v1906, 2147483648
    %v1920 = vor.u32 1.1754944e-38, %v1919
    %v1921 = vsel %vm1918, %v1920, %v1916
    %v1922 = vmul.f32 1.0, %v1921
    %v1923 = vrcp.pop %v1907
    %v1924 = vmul.f32 %v1907, %v1923
    %v1925 = vsub.f32 1.0, %v1924
    %v1926 = vmul.f32 %v1923, %v1925
    %v1927 = vadd.f32 %v1923, %v1926
    %vm1928 = vweird.f32 %v1907
    %vm1929 = vweird.f32 %v1923
    %vm1930 = vmor %vm1928, %vm1929
    %v1931 = vsel %vm1930, %v1923, %v1927
    %v1932 = vand.u32 2147483647, %v1907
    %vm1933 = vcmp.eq.f32.partialorder %v1932, 8.507059e+37
    %v1934 = vand.u32 %v1907, 2147483648
    %v1935 = vor.u32 1.1754944e-38, %v1934
    %v1936 = vsel %vm1933, %v1935, %v1931
    %v1937 = vmul.f32 1.0, %v1936
    %v1938 = vmul.f32 %v1922, %v160
    %v1939 = vmul.f32 %v1937, %v161
    %v1940 = vadd.f32 %v1938, %v162
    %v1941 = vadd.f32 %v1939, %v163
    %v1943 = vrot.slane %v1835, 6
    %v1945 = vmul.f32 %v1940, %v1943
    %v1946 = vmul.f32 %v1940, %v1941
    %1948 = vrot.lane.b32.xlu0 %v1946, 64
    %v1949 = vpop.permute.xlu0 %1948
    %v1951 = vadd.f32 %v1945, %v1949
    %v1952 = vtanh.pop %v1951
    %v1953 = vmul.f32 %v1941, %v1952
    %1955 = vst.sshfl [vmem:[#allocation1] sm:$0xff pattern:$0x73625140] %v1953
    %s1956 = scalar_lea.vmem [#allocation1], 1
    %v1957 = vld [vmem:[%s1956] ss:$4 sm:$0xff]
    %1959 = vst.msk [vmem:[%s9 + $0x4] sm:$0x3] %vm1480, %v1957
    %1960 = vst.sshfl [vmem:[#allocation1] sm:$0xff pattern:$0x73625140] %v1953
    %s1961 = scalar_lea.vmem [#allocation1], 1
    %v1962 = vld [vmem:[%s1961] ss:$4 sm:$0xff]
    %1963 = vrot.lane.b32.xlu0 %v1962, 64
    %v1964 = vpop.permute.xlu0 %1963
    %1966 = vst.msk [vmem:[%s9 + $0x2] sm:$0x3] %vm358, %v1964
    %v1967 = vrot.slane %v1953, 2
    %1968 = vrot.lane.b32.xlu0 %v1967, 64
    %v1969 = vpop.permute.xlu0 %1968
    %v1970 = vsel %vm255, %v1969, 0
    %1972 = vmatpush.msra.mxu0 0.0
    %1973 = vmatpush.msra.mxu0 0.0
    %1974 = vmatpush.msra.mxu0 0.0
    %1975 = vmatpush.msra.mxu0 0.0
    %1976 = vmatpush.msra.mxu0 0.0
    %1977 = vmatpush.msra.mxu0 0.0
    %1978 = vmatpush.msra.mxu0 0.0
    %1979 = vmatpush.msra.mxu0 0.0
    %1980 = vmatpush.msra.mxu0 %v1195
    %1981 = vmatpush.msra.mxu0 %v1193
    %1982 = vmatpush.msra.mxu0 %v1191
    %1983 = vmatpush.msra.mxu0 %v1189
    %1984 = vmatpush.msra.mxu0 %v1187
    %1985 = vmatpush.msra.mxu0 %v1185
    %1986 = vmatpush.msra.mxu0 %v1183
    %1987 = vmatpush.msra.mxu0 %v1181
    %1988 = vmatmul.f32.gmra.mxu0 %v1970
    %v1989 = vpop.f32.mrf.mxu0
    %v1990 = vadd.f32 0.0, %v1989
    %1991 = vdwg.mxu0
    %1992 = vmatpush.msra.mxu0 0.0
    %1993 = vmatpush.msra.mxu0 0.0
    %1994 = vmatpush.msra.mxu0 0.0
    %1995 = vmatpush.msra.mxu0 0.0
    %1996 = vmatpush.msra.mxu0 0.0
    %1997 = vmatpush.msra.mxu0 0.0
    %1998 = vmatpush.msra.mxu0 0.0
    %1999 = vmatpush.msra.mxu0 0.0
    %2000 = vmatpush.msra.mxu0 %v1196
    %2001 = vmatpush.msra.mxu0 %v1194
    %2002 = vmatpush.msra.mxu0 %v1192
    %2003 = vmatpush.msra.mxu0 %v1190
    %2004 = vmatpush.msra.mxu0 %v1188
    %2005 = vmatpush.msra.mxu0 %v1186
    %2006 = vmatpush.msra.mxu0 %v1184
    %2007 = vmatpush.msra.mxu0 %v1182
    %2008 = vmatmul.f32.gmra.mxu0 %v1970
    %v2009 = vpop.f32.mrf.mxu0
    %v2010 = vadd.f32 0.0, %v2009
    %2011 = vdwg.mxu0
    %v2014 = vrot.slane %v1990, 4
    %v2015 = vrot.slane %v2010, 4
    %v2018 = vadd.f32 %v1735, %v2014
    %v2019 = vadd.f32 %v1736, %v2015
    %v2020 = vxor.u32 %v2018, 2147483648
    %v2021 = vxor.u32 %v2019, 2147483648
    %v2022 = vmul.f32 %v2020, 1.442695
    %v2023 = vpow.pop %v2022
    %v2024 = vmul.f32 %v2021, 1.442695
    %v2025 = vpow.pop %v2024
    %v2026 = vadd.f32 %v2023, 1.0
    %v2027 = vadd.f32 %v2025, 1.0
    %v2028 = vrcp.pop %v2026
    %v2029 = vmul.f32 %v2026, %v2028
    %v2030 = vsub.f32 1.0, %v2029
    %v2031 = vmul.f32 %v2028, %v2030
    %v2032 = vadd.f32 %v2028, %v2031
    %vm2033 = vweird.f32 %v2026
    %vm2034 = vweird.f32 %v2028
    %vm2035 = vmor %vm2033, %vm2034
    %v2036 = vsel %vm2035, %v2028, %v2032
    %v2037 = vand.u32 2147483647, %v2026
    %vm2038 = vcmp.eq.f32.partialorder %v2037, 8.507059e+37
    %v2039 = vand.u32 %v2026, 2147483648
    %v2040 = vor.u32 1.1754944e-38, %v2039
    %v2041 = vsel %vm2038, %v2040, %v2036
    %v2042 = vmul.f32 1.0, %v2041
    %v2043 = vrcp.pop %v2027
    %v2044 = vmul.f32 %v2027, %v2043
    %v2045 = vsub.f32 1.0, %v2044
    %v2046 = vmul.f32 %v2043, %v2045
    %v2047 = vadd.f32 %v2043, %v2046
    %vm2048 = vweird.f32 %v2027
    %vm2049 = vweird.f32 %v2043
    %vm2050 = vmor %vm2048, %vm2049
    %v2051 = vsel %vm2050, %v2043, %v2047
    %v2052 = vand.u32 2147483647, %v2027
    %vm2053 = vcmp.eq.f32.partialorder %v2052, 8.507059e+37
    %v2054 = vand.u32 %v2027, 2147483648
    %v2055 = vor.u32 1.1754944e-38, %v2054
    %v2056 = vsel %vm2053, %v2055, %v2051
    %v2057 = vmul.f32 1.0, %v2056
    %v2058 = vmul.f32 %v2042, %v160
    %v2059 = vmul.f32 %v2057, %v161
    %v2060 = vadd.f32 %v2058, %v162
    %v2061 = vadd.f32 %v2059, %v163
    %v2063 = vrot.slane %v1951, 6
    %v2065 = vmul.f32 %v2060, %v2063
    %v2066 = vmul.f32 %v2060, %v2061
    %2068 = vrot.lane.b32.xlu0 %v2066, 64
    %v2069 = vpop.permute.xlu0 %2068
    %v2071 = vadd.f32 %v2065, %v2069
    %v2072 = vtanh.pop %v2071
    %v2073 = vmul.f32 %v2061, %v2072
    %2075 = vst.sshfl [vmem:[#allocation1] sm:$0xff pattern:$0x73625140] %v2073
    %s2076 = scalar_lea.vmem [#allocation1], 2
    %v2077 = vld [vmem:[%s2076] ss:$4 sm:$0xff]
    %2078 = vrot.lane.b32.xlu0 %v2077, 64
    %v2079 = vpop.permute.xlu0 %2078
    %2081 = vst.msk [vmem:[%s9 + $0x6] sm:$0x3] %vm356, %v2079
    %2082 = vst.sshfl [vmem:[#allocation1] sm:$0xff pattern:$0x73625140] %v2073
    %s2083 = scalar_lea.vmem [#allocation1], 2
    %v2084 = vld [vmem:[%s2083] ss:$4 sm:$0xff]
    %2086 = vst.msk [vmem:[%s9] sm:$0x3] %vm1363, %v2084
    %v2087 = vrot.slane %v2073, 4
    %2088 = vrot.lane.b32.xlu0 %v2087, 64
    %v2089 = vpop.permute.xlu0 %2088
    %v2090 = vsel %vm255, %v2089, 0
    %2092 = vmatpush.msra.mxu0 0.0
    %2093 = vmatpush.msra.mxu0 0.0
    %2094 = vmatpush.msra.mxu0 0.0
    %2095 = vmatpush.msra.mxu0 0.0
    %2096 = vmatpush.msra.mxu0 0.0
    %2097 = vmatpush.msra.mxu0 0.0
    %2098 = vmatpush.msra.mxu0 0.0
    %2099 = vmatpush.msra.mxu0 0.0
    %2100 = vmatpush.msra.mxu0 %v1195
    %2101 = vmatpush.msra.mxu0 %v1193
    %2102 = vmatpush.msra.mxu0 %v1191
    %2103 = vmatpush.msra.mxu0 %v1189
    %2104 = vmatpush.msra.mxu0 %v1187
    %2105 = vmatpush.msra.mxu0 %v1185
    %2106 = vmatpush.msra.mxu0 %v1183
    %2107 = vmatpush.msra.mxu0 %v1181
    %2108 = vmatmul.f32.gmra.mxu0 %v2090
    %v2109 = vpop.f32.mrf.mxu0
    %v2110 = vadd.f32 0.0, %v2109
    %2111 = vdwg.mxu0
    %2112 = vmatpush.msra.mxu0 0.0
    %2113 = vmatpush.msra.mxu0 0.0
    %2114 = vmatpush.msra.mxu0 0.0
    %2115 = vmatpush.msra.mxu0 0.0
    %2116 = vmatpush.msra.mxu0 0.0
    %2117 = vmatpush.msra.mxu0 0.0
    %2118 = vmatpush.msra.mxu0 0.0
    %2119 = vmatpush.msra.mxu0 0.0
    %2120 = vmatpush.msra.mxu0 %v1196
    %2121 = vmatpush.msra.mxu0 %v1194
    %2122 = vmatpush.msra.mxu0 %v1192
    %2123 = vmatpush.msra.mxu0 %v1190
    %2124 = vmatpush.msra.mxu0 %v1188
    %2125 = vmatpush.msra.mxu0 %v1186
    %2126 = vmatpush.msra.mxu0 %v1184
    %2127 = vmatpush.msra.mxu0 %v1182
    %2128 = vmatmul.f32.gmra.mxu0 %v2090
    %v2129 = vpop.f32.mrf.mxu0
    %v2130 = vadd.f32 0.0, %v2129
    %2131 = vdwg.mxu0
    %v2134 = vrot.slane %v2110, 2
    %v2135 = vrot.slane %v2130, 2
    %v2138 = vadd.f32 %v1848, %v2134
    %v2139 = vadd.f32 %v1849, %v2135
    %v2140 = vxor.u32 %v2138, 2147483648
    %v2141 = vxor.u32 %v2139, 2147483648
    %v2142 = vmul.f32 %v2140, 1.442695
    %v2143 = vpow.pop %v2142
    %v2144 = vmul.f32 %v2141, 1.442695
    %v2145 = vpow.pop %v2144
    %v2146 = vadd.f32 %v2143, 1.0
    %v2147 = vadd.f32 %v2145, 1.0
    %v2148 = vrcp.pop %v2146
    %v2149 = vmul.f32 %v2146, %v2148
    %v2150 = vsub.f32 1.0, %v2149
    %v2151 = vmul.f32 %v2148, %v2150
    %v2152 = vadd.f32 %v2148, %v2151
    %vm2153 = vweird.f32 %v2146
    %vm2154 = vweird.f32 %v2148
    %vm2155 = vmor %vm2153, %vm2154
    %v2156 = vsel %vm2155, %v2148, %v2152
    %v2157 = vand.u32 2147483647, %v2146
    %vm2158 = vcmp.eq.f32.partialorder %v2157, 8.507059e+37
    %v2159 = vand.u32 %v2146, 2147483648
    %v2160 = vor.u32 1.1754944e-38, %v2159
    %v2161 = vsel %vm2158, %v2160, %v2156
    %v2162 = vmul.f32 1.0, %v2161
    %v2163 = vrcp.pop %v2147
    %v2164 = vmul.f32 %v2147, %v2163
    %v2165 = vsub.f32 1.0, %v2164
    %v2166 = vmul.f32 %v2163, %v2165
    %v2167 = vadd.f32 %v2163, %v2166
    %vm2168 = vweird.f32 %v2147
    %vm2169 = vweird.f32 %v2163
    %vm2170 = vmor %vm2168, %vm2169
    %v2171 = vsel %vm2170, %v2163, %v2167
    %v2172 = vand.u32 2147483647, %v2147
    %vm2173 = vcmp.eq.f32.partialorder %v2172, 8.507059e+37
    %v2174 = vand.u32 %v2147, 2147483648
    %v2175 = vor.u32 1.1754944e-38, %v2174
    %v2176 = vsel %vm2173, %v2175, %v2171
    %v2177 = vmul.f32 1.0, %v2176
    %v2178 = vmul.f32 %v2162, %v160
    %v2179 = vmul.f32 %v2177, %v161
    %v2180 = vadd.f32 %v2178, %v162
    %v2181 = vadd.f32 %v2179, %v163
    %v2183 = vrot.slane %v2071, 6
    %v2185 = vmul.f32 %v2180, %v2183
    %v2186 = vmul.f32 %v2180, %v2181
    %2188 = vrot.lane.b32.xlu0 %v2186, 64
    %v2189 = vpop.permute.xlu0 %2188
    %v2191 = vadd.f32 %v2185, %v2189
    %v2192 = vtanh.pop %v2191
    %v2193 = vmul.f32 %v2181, %v2192
    %2195 = vst.sshfl [vmem:[#allocation1] sm:$0xff pattern:$0x73625140] %v2193
    %s2196 = scalar_lea.vmem [#allocation1], 3
    %v2197 = vld [vmem:[%s2196] ss:$4 sm:$0xff]
    %2199 = vst.msk [vmem:[%s9 + $0x6] sm:$0x3] %vm1480, %v2197
    %2200 = vst.sshfl [vmem:[#allocation1] sm:$0xff pattern:$0x73625140] %v2193
    %s2201 = scalar_lea.vmem [#allocation1], 3
    %v2202 = vld [vmem:[%s2201] ss:$4 sm:$0xff]
    %2203 = vrot.lane.b32.xlu0 %v2202, 64
    %v2204 = vpop.permute.xlu0 %2203
    %2206 = vst.msk [vmem:[%s9] sm:$0x3] %vm358, %v2204
    // Predicated region
    $region50: #{seq2seqvec_cnnrnn_forward.1} parent=1 // pred_check
      _
    $region51: #{seq2seqvec_cnnrnn_forward.1} parent=1 // pred_check_branch
      %2208 = sbr.rel (0) target = $region53
    $region52: #{seq2seqvec_cnnrnn_forward.1} parent=1 // pred_region
      _
    $region53: #{seq2seqvec_cnnrnn_forward.1} parent=1 // pred_fallthru
      _
    // Predicated region
    $region54: #{seq2seqvec_cnnrnn_forward.1} parent=1 // pred_check
      _
    $region55: #{seq2seqvec_cnnrnn_forward.1} parent=1 // pred_check_branch
      %2210 = sbr.rel (0) target = $region57
    $region56: #{seq2seqvec_cnnrnn_forward.1} parent=1 // pred_region
      _
    $region57: #{seq2seqvec_cnnrnn_forward.1} parent=1 // pred_fallthru
      _
    %2211 = vsyncpa [#allocation4], 1
    %2212 = vsyncpa [#allocation6], 1

</llo_original>
